<compile_context>
chip_gen: v7x
topology: tpu7x:2x2x1
jax: 0.10.0
libtpu: 0.0.40
codegen_flags: <defaults>
</compile_context>

<pallas_src>
import functools

import jax
import jax.numpy as jnp
from jax.experimental import pallas as pl
from jax.experimental.pallas import tpu as pltpu

_BN_EPS = 1e-5
# Conservative scoped-VMEM budget: fits v7x (64 MiB physical / 32 MiB default
# scoped) as well as v5e/v6e. Per-step working set here is far below this.
_VMEM_LIMIT_BYTES = 32 * 1024 * 1024
_M_TILE = 512  # MXU-N tile: multiple of 256 (v6e 2x256x256) and of 128 lanes.


def _round_up(a, b):
    return (a + b - 1) // b * b


def _apply_act(y, act):
    if act == "leaky_relu":
        return jnp.where(y >= 0.0, y, 0.2 * y)
    if act == "sigmoid":
        return 1.0 / (1.0 + jnp.exp(-y))
    return y


# --------------------------------------------------------------------------
# Pallas kernels
# --------------------------------------------------------------------------
def _conv_act_kernel(w_ref, p_ref, o_ref, *, act):
    # w_ref: (OC_pad, K_pad) bf16, resident across the M grid.
    # p_ref: (K_pad, TM)     bf16, one M tile of the im2col matrix.
    # o_ref: (OC_pad, TM)    lane-dense output tile.
    y = jnp.dot(w_ref[...], p_ref[...], preferred_element_type=jnp.float32)
    o_ref[...] = _apply_act(y, act).astype(o_ref.dtype)


def _conv_stats_kernel(w_ref, p_ref, y_ref, stats_ref):
    # Matmul + per-tile partial BatchNorm statistics (sum, sum of squares),
    # so BN does not force the whole (OC, M) output to be VMEM-resident.
    y = jnp.dot(w_ref[...], p_ref[...], preferred_element_type=jnp.float32)
    y_ref[...] = y
    s = jnp.sum(y, axis=1, keepdims=True)        # (OC_pad, 1)
    ss = jnp.sum(y * y, axis=1, keepdims=True)   # (OC_pad, 1)
    lane = jax.lax.broadcasted_iota(jnp.int32, (s.shape[0], 2), 1)
    stats_ref[...] = jnp.where(lane == 0, s, ss)[None]   # (1, OC_pad, 2)


def _bn_act_kernel(y_ref, scale_ref, shift_ref, o_ref):
    # Training-mode BatchNorm at init (gamma=1, beta=0) folded into a single
    # per-channel affine, then LeakyReLU(0.2). All math in f32.
    y = y_ref[...] * scale_ref[...] + shift_ref[...]
    o_ref[...] = jnp.where(y >= 0.0, y, 0.2 * y).astype(o_ref.dtype)


# --------------------------------------------------------------------------
# JAX glue
# --------------------------------------------------------------------------
def _im2col_cfirst(x_cf, k, stride, pad):
    # x_cf: (C, N, H, W) -> patchesT: (C*k*k, N*OH*OW).
    # Row order (C, KH, KW) matches the PyTorch (OC, C, KH, KW) weight flatten;
    # column order (N, OH, OW) so (OC, M) reshapes straight to (OC, N, OH, OW).
    C, N, H, W = x_cf.shape
    if pad > 0:
        x_cf = jnp.pad(x_cf, ((0, 0), (0, 0), (pad, pad), (pad, pad)))
    Hp, Wp = H + 2 * pad, W + 2 * pad
    OH = (Hp - k) // stride + 1
    OW = (Wp - k) // stride + 1
    cols = []
    for i in range(k):          # KH (outer) ...
        for j in range(k):      # ... KW (inner)
            cols.append(
                x_cf[:, :, i:i + stride * (OH - 1) + 1:stride,
                           j:j + stride * (OW - 1) + 1:stride])
    p = jnp.stack(cols, axis=1)                 # (C, k*k, N, OH, OW)
    return p.reshape(C * k * k, N * OH * OW), OH, OW


def conv_bn_act(x_cf, w, stride, pad, use_bn, act, out_dtype):
    # x_cf: (C, N, H, W), w: (OC, C, KH, KW) -> (OC, N, OH, OW) in out_dtype.
    C, N, H, W = x_cf.shape
    OC, _, KH, KW = w.shape

    patches_t, OH, OW = _im2col_cfirst(x_cf, KH, stride, pad)
    K, M = patches_t.shape

    # Pad to TPU-friendly shapes: sublanes (OC, K) to multiples of 8/16,
    # lanes (M) to a multiple of the M tile (itself a multiple of 128).
    oc_pad = _round_up(OC, 8)
    k_pad = _round_up(K, 16)
    tm = _M_TILE if M >= _M_TILE else _round_up(M, 128)
    m_pad = _round_up(M, tm)
    n_tiles = m_pad // tm

    p = jnp.pad(patches_t.astype(jnp.bfloat16),
                ((0, k_pad - K), (0, m_pad - M)))
    w_mat = jnp.pad(w.reshape(OC, K).astype(jnp.bfloat16),
                    ((0, oc_pad - OC), (0, k_pad - K)))

    grid = (n_tiles,)
    w_spec = pl.BlockSpec((oc_pad, k_pad), lambda i: (0, 0))   # resident weight
    p_spec = pl.BlockSpec((k_pad, tm), lambda i: (0, i))
    y_spec = pl.BlockSpec((oc_pad, tm), lambda i: (0, i))
    cparams = pltpu.CompilerParams(
        dimension_semantics=("parallel",),
        vmem_limit_bytes=_VMEM_LIMIT_BYTES,
    )
    mm_cost = pl.CostEstimate(
        flops=2 * oc_pad * k_pad * m_pad,
        transcendentals=(oc_pad * m_pad) if act == "sigmoid" else 0,
        bytes_accessed=2 * k_pad * m_pad + 2 * oc_pad * k_pad
        + 4 * oc_pad * m_pad,
    )

    if not use_bn:
        y = pl.pallas_call(
            functools.partial(_conv_act_kernel, act=act),
            out_shape=jax.ShapeDtypeStruct((oc_pad, m_pad), out_dtype),
            grid=grid,
            in_specs=[w_spec, p_spec],
            out_specs=y_spec,
            compiler_params=cparams,
            cost_estimate=mm_cost,
        )(w_mat, p)
    else:
        y, stats = pl.pallas_call(
            _conv_stats_kernel,
            out_shape=(
                jax.ShapeDtypeStruct((oc_pad, m_pad), jnp.float32),
                jax.ShapeDtypeStruct((n_tiles, oc_pad, 2), jnp.float32),
            ),
            grid=grid,
            in_specs=[w_spec, p_spec],
            out_specs=(
                pl.BlockSpec((oc_pad, tm), lambda i: (0, i)),
                pl.BlockSpec((1, oc_pad, 2), lambda i: (i, 0, 0)),
            ),
            compiler_params=cparams,
            cost_estimate=mm_cost,
        )(w_mat, p)

        # Finalize batch statistics (tiny reduction over tiles) in plain JAX.
        tot = jnp.sum(stats, axis=0)                 # (OC_pad, 2)
        mean = tot[:, 0:1] / M                       # (OC_pad, 1)
        var = tot[:, 1:2] / M - mean * mean          # biased variance
        scale = jax.lax.rsqrt(var + _BN_EPS)         # gamma = 1
        shift = -mean * scale                        # beta  = 0

        y = pl.pallas_call(
            _bn_act_kernel,
            out_shape=jax.ShapeDtypeStruct((oc_pad, m_pad), out_dtype),
            grid=grid,
            in_specs=[
                pl.BlockSpec((oc_pad, tm), lambda i: (0, i)),
                pl.BlockSpec((oc_pad, 1), lambda i: (0, 0)),
                pl.BlockSpec((oc_pad, 1), lambda i: (0, 0)),
            ],
            out_specs=pl.BlockSpec((oc_pad, tm), lambda i: (0, i)),
            compiler_params=cparams,
            cost_estimate=pl.CostEstimate(
                flops=3 * oc_pad * m_pad,
                transcendentals=0,
                bytes_accessed=8 * oc_pad * m_pad,
            ),
        )(y, scale, shift)

    y = y[:OC, :M]
    return y.reshape(OC, N, OH, OW)


def make_discriminator_params(key, feature_depth, channels=3):
    fd = feature_depth
    layer_dims = [
        (fd, channels),
        (fd * 2, fd),
        (fd * 4, fd * 2),
        (fd * 8, fd * 4),
        (fd * 16, fd * 8),
        (1, fd * 16),
    ]
    params = []
    for oc, ic in layer_dims:
        key, sub = jax.random.split(key)
        # DCGAN-style N(0, 0.02) init, bias=False.
        params.append(0.02 * jax.random.normal(sub, (oc, ic, 4, 4), jnp.float32))
    return params


def discriminator_forward(params, x):
    # (stride, pad, use_bn, activation) per layer, mirroring nn.Sequential.
    cfgs = [
        (2, 1, False, "leaky_relu"),
        (2, 1, True,  "leaky_relu"),
        (2, 1, True,  "leaky_relu"),
        (2, 1, True,  "leaky_relu"),
        (2, 1, True,  "leaky_relu"),
        (1, 0, False, "sigmoid"),
    ]
    # Channel-first layout across layers; convert only at the model boundary.
    h = jnp.transpose(x, (1, 0, 2, 3))          # (C, N, H, W)
    n_layers = len(cfgs)
    for li, (w, (stride, pad, use_bn, act)) in enumerate(zip(params, cfgs)):
        out_dtype = jnp.float32 if li == n_layers - 1 else jnp.bfloat16
        h = conv_bn_act(h, w, stride, pad, use_bn, act, out_dtype)
    return jnp.transpose(h, (1, 0, 2, 3))       # (N, 1, 1, 1)


if __name__ == "__main__":
    key = jax.random.PRNGKey(0)
    kx, kp = jax.random.split(key)

    feature_depth = 4
    channels = 3
    # Spatial 128 is the smallest size for which the final 4x4 / stride-1 /
    # pad-0 conv produces a 1x1 map (DCGAN-128 discriminator geometry).
    x = jax.random.normal(kx, (2, channels, 128, 128), dtype=jnp.float32)
    params = make_discriminator_params(kp, feature_depth, channels)

    fwd = jax.jit(discriminator_forward)
    out = jax.block_until_ready(fwd(params, x))

    assert out.shape == (2, 1, 1, 1), out.shape
    assert bool(jnp.all(jnp.isfinite(out)))
    assert bool(jnp.all((out >= 0.0) & (out <= 1.0)))  # sigmoid range
    print("KERNEL_OK")
</pallas_src>

<mosaic_0001>
module attributes {stable_mosaic.version = 11 : i64} {
  func.func @_conv_act_kernel(%arg0: i32, %arg1: memref<8x48xbf16, #tpu.memory_space<vmem>>, %arg2: memref<48x512xbf16, #tpu.memory_space<vmem>>, %arg3: memref<8x512xbf16, #tpu.memory_space<vmem>>) attributes {dimension_semantics = [#tpu.dimension_semantics<parallel>], iteration_bounds = array<i64: 16>, scalar_prefetch = 0 : i64, scratch_operands = 0 : i64, tpu.core_type = #tpu.core_type<tc>, window_params = [{pipeline_mode = #tpu.pipeline_mode<synchronous>, transform_indices = @transform_0, window_bounds = array<i64: 8, 48>}, {transform_indices = @transform_1, window_bounds = array<i64: 48, 512>}, {transform_indices = @transform_2, window_bounds = array<i64: 8, 512>}]} {
    %c0 = arith.constant 0 : index
    %c0_0 = arith.constant 0 : index
    %0 = vector.load %arg1[%c0, %c0_0] : memref<8x48xbf16, #tpu.memory_space<vmem>>, vector<8x48xbf16>
    %c0_1 = arith.constant 0 : index
    %c0_2 = arith.constant 0 : index
    %1 = vector.load %arg2[%c0_1, %c0_2] : memref<48x512xbf16, #tpu.memory_space<vmem>>, vector<48x512xbf16>
    %cst = arith.constant dense<0.000000e+00> : vector<8x512xf32>
    %2 = tpu.matmul %0, %1, %cst {dimension_numbers = #tpu.dot_dimension_numbers<[1], [0], [0], [1], [0, 0, 1, 1], [], []>} : vector<8x48xbf16>, vector<48x512xbf16>, vector<8x512xf32> -> vector<8x512xf32>
    %cst_3 = arith.constant 0.000000e+00 : f32
    %3 = vector.broadcast %cst_3 : f32 to vector<8x512xf32>
    %4 = arith.cmpf oge, %2, %3 : vector<8x512xf32>
    %cst_4 = arith.constant 2.000000e-01 : f32
    %5 = vector.broadcast %cst_4 : f32 to vector<8x512xf32>
    %6 = arith.mulf %5, %2 : vector<8x512xf32>
    %7 = arith.select %4, %2, %6 : vector<8x512xi1>, vector<8x512xf32>
    %8 = arith.truncf %7 : vector<8x512xf32> to vector<8x512xbf16>
    %c0_5 = arith.constant 0 : index
    %c0_6 = arith.constant 0 : index
    %9 = vector.load %arg3[%c0_5, %c0_6] : memref<8x512xbf16, #tpu.memory_space<vmem>>, vector<8x512xbf16>
    tpu.vector_store %arg3[%c0_5, %c0_6], %8 {strides = array<i32>} : memref<8x512xbf16, #tpu.memory_space<vmem>>, vector<8x512xbf16>,
    return
  }
  func.func @transform_0(%arg0: i32) -> (i32, i32) {
    %c0_i32 = arith.constant 0 : i32
    %c0_i32_0 = arith.constant 0 : i32
    %c0_i32_1 = arith.constant 0 : i32
    return %c0_i32, %c0_i32_0 : i32, i32
  }
  func.func @transform_1(%arg0: i32) -> (i32, i32) {
    %c0_i32 = arith.constant 0 : i32
    %c0_i32_0 = arith.constant 0 : i32
    return %c0_i32, %arg0 : i32, i32
  }
  func.func @transform_2(%arg0: i32) -> (i32, i32) {
    %c0_i32 = arith.constant 0 : i32
    %c0_i32_0 = arith.constant 0 : i32
    return %c0_i32, %arg0 : i32, i32
  }
}

module attributes {stable_mosaic.version = 11 : i64} {
  func.func @_conv_stats_kernel(%arg0: i32, %arg1: memref<8x64xbf16, #tpu.memory_space<vmem>>, %arg2: memref<64x512xbf16, #tpu.memory_space<vmem>>, %arg3: memref<8x512xf32, #tpu.memory_space<vmem>>, %arg4: memref<1x8x2xf32, #tpu.memory_space<vmem>>) attributes {dimension_semantics = [#tpu.dimension_semantics<parallel>], iteration_bounds = array<i64: 4>, scalar_prefetch = 0 : i64, scratch_operands = 0 : i64, tpu.core_type = #tpu.core_type<tc>, window_params = [{pipeline_mode = #tpu.pipeline_mode<synchronous>, transform_indices = @transform_0, window_bounds = array<i64: 8, 64>}, {transform_indices = @transform_1, window_bounds = array<i64: 64, 512>}, {transform_indices = @transform_2, window_bounds = array<i64: 8, 512>}, {transform_indices = @transform_3, window_bounds = array<i64: 1, 8, 2>}]} {
    %c0 = arith.constant 0 : index
    %c0_0 = arith.constant 0 : index
    %0 = vector.load %arg1[%c0, %c0_0] : memref<8x64xbf16, #tpu.memory_space<vmem>>, vector<8x64xbf16>
    %c0_1 = arith.constant 0 : index
    %c0_2 = arith.constant 0 : index
    %1 = vector.load %arg2[%c0_1, %c0_2] : memref<64x512xbf16, #tpu.memory_space<vmem>>, vector<64x512xbf16>
    %cst = arith.constant dense<0.000000e+00> : vector<8x512xf32>
    %2 = tpu.matmul %0, %1, %cst {dimension_numbers = #tpu.dot_dimension_numbers<[1], [0], [0], [1], [0, 0, 1, 1], [], []>} : vector<8x64xbf16>, vector<64x512xbf16>, vector<8x512xf32> -> vector<8x512xf32>
    %c0_3 = arith.constant 0 : index
    %c0_4 = arith.constant 0 : index
    %3 = vector.load %arg3[%c0_3, %c0_4] : memref<8x512xf32, #tpu.memory_space<vmem>>, vector<8x512xf32>
    tpu.vector_store %arg3[%c0_3, %c0_4], %2 {strides = array<i32>} : memref<8x512xf32, #tpu.memory_space<vmem>>, vector<8x512xf32>,
    %cst_5 = arith.constant dense<0.000000e+00> : vector<8xf32>
    %4 = vector.multi_reduction <add>, %2, %cst_5 [1] : vector<8x512xf32> to vector<8xf32>
    %5 = vector.shape_cast %4 : vector<8xf32> to vector<8x1xf32>
    %6 = arith.mulf %2, %2 : vector<8x512xf32>
    %cst_6 = arith.constant dense<0.000000e+00> : vector<8xf32>
    %7 = vector.multi_reduction <add>, %6, %cst_6 [1] : vector<8x512xf32> to vector<8xf32>
    %8 = vector.shape_cast %7 : vector<8xf32> to vector<8x1xf32>
    %9 = tpu.iota {dimensions = array<i32: 1>} : vector<8x2xi32>
    %c0_i32 = arith.constant 0 : i32
    %10 = vector.broadcast %c0_i32 : i32 to vector<8x2xi32>
    %11 = arith.cmpi eq, %9, %10 : vector<8x2xi32>
    %12 = vector.shape_cast %5 : vector<8x1xf32> to vector<8x1xf32>
    %13 = vector.broadcast %12 : vector<8x1xf32> to vector<8x2xf32>
    %14 = vector.shape_cast %8 : vector<8x1xf32> to vector<8x1xf32>
    %15 = vector.broadcast %14 : vector<8x1xf32> to vector<8x2xf32>
    %16 = arith.select %11, %13, %15 : vector<8x2xi1>, vector<8x2xf32>
    %17 = vector.shape_cast %16 : vector<8x2xf32> to vector<1x8x2xf32>
    %c0_7 = arith.constant 0 : index
    %c0_8 = arith.constant 0 : index
    %c0_9 = arith.constant 0 : index
    %18 = vector.load %arg4[%c0_7, %c0_8, %c0_9] : memref<1x8x2xf32, #tpu.memory_space<vmem>>, vector<1x8x2xf32>
    tpu.vector_store %arg4[%c0_7, %c0_8, %c0_9], %17 {strides = array<i32>} : memref<1x8x2xf32, #tpu.memory_space<vmem>>, vector<1x8x2xf32>,
    return
  }
  func.func @transform_0(%arg0: i32) -> (i32, i32) {
    %c0_i32 = arith.constant 0 : i32
    %c0_i32_0 = arith.constant 0 : i32
    %c0_i32_1 = arith.constant 0 : i32
    return %c0_i32, %c0_i32_0 : i32, i32
  }
  func.func @transform_1(%arg0: i32) -> (i32, i32) {
    %c0_i32 = arith.constant 0 : i32
    %c0_i32_0 = arith.constant 0 : i32
    return %c0_i32, %arg0 : i32, i32
  }
  func.func @transform_2(%arg0: i32) -> (i32, i32) {
    %c0_i32 = arith.constant 0 : i32
    %c0_i32_0 = arith.constant 0 : i32
    return %c0_i32, %arg0 : i32, i32
  }
  func.func @transform_3(%arg0: i32) -> (i32, i32, i32) {
    %c0_i32 = arith.constant 0 : i32
    %c0_i32_0 = arith.constant 0 : i32
    %c0_i32_1 = arith.constant 0 : i32
    return %arg0, %c0_i32, %c0_i32_0 : i32, i32, i32
  }
}

module attributes {stable_mosaic.version = 11 : i64} {
  func.func @_bn_act_kernel(%arg0: i32, %arg1: memref<8x512xf32, #tpu.memory_space<vmem>>, %arg2: memref<8x1xf32, #tpu.memory_space<vmem>>, %arg3: memref<8x1xf32, #tpu.memory_space<vmem>>, %arg4: memref<8x512xbf16, #tpu.memory_space<vmem>>) attributes {dimension_semantics = [#tpu.dimension_semantics<parallel>], iteration_bounds = array<i64: 4>, scalar_prefetch = 0 : i64, scratch_operands = 0 : i64, tpu.core_type = #tpu.core_type<tc>, window_params = [{transform_indices = @transform_0, window_bounds = array<i64: 8, 512>}, {pipeline_mode = #tpu.pipeline_mode<synchronous>, transform_indices = @transform_1, window_bounds = array<i64: 8, 1>}, {pipeline_mode = #tpu.pipeline_mode<synchronous>, transform_indices = @transform_2, window_bounds = array<i64: 8, 1>}, {transform_indices = @transform_3, window_bounds = array<i64: 8, 512>}]} {
    %c0 = arith.constant 0 : index
    %c0_0 = arith.constant 0 : index
    %0 = vector.load %arg1[%c0, %c0_0] : memref<8x512xf32, #tpu.memory_space<vmem>>, vector<8x512xf32>
    %c0_1 = arith.constant 0 : index
    %c0_2 = arith.constant 0 : index
    %1 = vector.load %arg2[%c0_1, %c0_2] : memref<8x1xf32, #tpu.memory_space<vmem>>, vector<8x1xf32>
    %2 = vector.broadcast %1 : vector<8x1xf32> to vector<8x512xf32>
    %3 = arith.mulf %0, %2 : vector<8x512xf32>
    %c0_3 = arith.constant 0 : index
    %c0_4 = arith.constant 0 : index
    %4 = vector.load %arg3[%c0_3, %c0_4] : memref<8x1xf32, #tpu.memory_space<vmem>>, vector<8x1xf32>
    %5 = vector.broadcast %4 : vector<8x1xf32> to vector<8x512xf32>
    %6 = arith.addf %3, %5 : vector<8x512xf32>
    %cst = arith.constant 0.000000e+00 : f32
    %7 = vector.broadcast %cst : f32 to vector<8x512xf32>
    %8 = arith.cmpf oge, %6, %7 : vector<8x512xf32>
    %cst_5 = arith.constant 2.000000e-01 : f32
    %9 = vector.broadcast %cst_5 : f32 to vector<8x512xf32>
    %10 = arith.mulf %9, %6 : vector<8x512xf32>
    %11 = arith.select %8, %6, %10 : vector<8x512xi1>, vector<8x512xf32>
    %12 = arith.truncf %11 : vector<8x512xf32> to vector<8x512xbf16>
    %c0_6 = arith.constant 0 : index
    %c0_7 = arith.constant 0 : index
    %13 = vector.load %arg4[%c0_6, %c0_7] : memref<8x512xbf16, #tpu.memory_space<vmem>>, vector<8x512xbf16>
    tpu.vector_store %arg4[%c0_6, %c0_7], %12 {strides = array<i32>} : memref<8x512xbf16, #tpu.memory_space<vmem>>, vector<8x512xbf16>,
    return
  }
  func.func @transform_0(%arg0: i32) -> (i32, i32) {
    %c0_i32 = arith.constant 0 : i32
    %c0_i32_0 = arith.constant 0 : i32
    return %c0_i32, %arg0 : i32, i32
  }
  func.func @transform_1(%arg0: i32) -> (i32, i32) {
    %c0_i32 = arith.constant 0 : i32
    %c0_i32_0 = arith.constant 0 : i32
    %c0_i32_1 = arith.constant 0 : i32
    return %c0_i32, %c0_i32_0 : i32, i32
  }
  func.func @transform_2(%arg0: i32) -> (i32, i32) {
    %c0_i32 = arith.constant 0 : i32
    %c0_i32_0 = arith.constant 0 : i32
    %c0_i32_1 = arith.constant 0 : i32
    return %c0_i32, %c0_i32_0 : i32, i32
  }
  func.func @transform_3(%arg0: i32) -> (i32, i32) {
    %c0_i32 = arith.constant 0 : i32
    %c0_i32_0 = arith.constant 0 : i32
    return %c0_i32, %arg0 : i32, i32
  }
}

module attributes {stable_mosaic.version = 11 : i64} {
  func.func @_conv_stats_kernel(%arg0: i32, %arg1: memref<16x128xbf16, #tpu.memory_space<vmem>>, %arg2: memref<128x512xbf16, #tpu.memory_space<vmem>>, %arg3: memref<16x512xf32, #tpu.memory_space<vmem>>, %arg4: memref<1x16x2xf32, #tpu.memory_space<vmem>>) attributes {dimension_semantics = [#tpu.dimension_semantics<parallel>], iteration_bounds = array<i64: 1>, scalar_prefetch = 0 : i64, scratch_operands = 0 : i64, tpu.core_type = #tpu.core_type<tc>, window_params = [{pipeline_mode = #tpu.pipeline_mode<synchronous>, transform_indices = @transform_0, window_bounds = array<i64: 16, 128>}, {transform_indices = @transform_1, window_bounds = array<i64: 128, 512>}, {transform_indices = @transform_2, window_bounds = array<i64: 16, 512>}, {transform_indices = @transform_3, window_bounds = array<i64: 1, 16, 2>}]} {
    %c0 = arith.constant 0 : index
    %c0_0 = arith.constant 0 : index
    %0 = vector.load %arg1[%c0, %c0_0] : memref<16x128xbf16, #tpu.memory_space<vmem>>, vector<16x128xbf16>
    %c0_1 = arith.constant 0 : index
    %c0_2 = arith.constant 0 : index
    %1 = vector.load %arg2[%c0_1, %c0_2] : memref<128x512xbf16, #tpu.memory_space<vmem>>, vector<128x512xbf16>
    %cst = arith.constant dense<0.000000e+00> : vector<16x512xf32>
    %2 = tpu.matmul %0, %1, %cst {dimension_numbers = #tpu.dot_dimension_numbers<[1], [0], [0], [1], [0, 0, 1, 1], [], []>} : vector<16x128xbf16>, vector<128x512xbf16>, vector<16x512xf32> -> vector<16x512xf32>
    %c0_3 = arith.constant 0 : index
    %c0_4 = arith.constant 0 : index
    %3 = vector.load %arg3[%c0_3, %c0_4] : memref<16x512xf32, #tpu.memory_space<vmem>>, vector<16x512xf32>
    tpu.vector_store %arg3[%c0_3, %c0_4], %2 {strides = array<i32>} : memref<16x512xf32, #tpu.memory_space<vmem>>, vector<16x512xf32>,
    %cst_5 = arith.constant dense<0.000000e+00> : vector<16xf32>
    %4 = vector.multi_reduction <add>, %2, %cst_5 [1] : vector<16x512xf32> to vector<16xf32>
    %5 = vector.shape_cast %4 : vector<16xf32> to vector<16x1xf32>
    %6 = arith.mulf %2, %2 : vector<16x512xf32>
    %cst_6 = arith.constant dense<0.000000e+00> : vector<16xf32>
    %7 = vector.multi_reduction <add>, %6, %cst_6 [1] : vector<16x512xf32> to vector<16xf32>
    %8 = vector.shape_cast %7 : vector<16xf32> to vector<16x1xf32>
    %9 = tpu.iota {dimensions = array<i32: 1>} : vector<16x2xi32>
    %c0_i32 = arith.constant 0 : i32
    %10 = vector.broadcast %c0_i32 : i32 to vector<16x2xi32>
    %11 = arith.cmpi eq, %9, %10 : vector<16x2xi32>
    %12 = vector.shape_cast %5 : vector<16x1xf32> to vector<16x1xf32>
    %13 = vector.broadcast %12 : vector<16x1xf32> to vector<16x2xf32>
    %14 = vector.shape_cast %8 : vector<16x1xf32> to vector<16x1xf32>
    %15 = vector.broadcast %14 : vector<16x1xf32> to vector<16x2xf32>
    %16 = arith.select %11, %13, %15 : vector<16x2xi1>, vector<16x2xf32>
    %17 = vector.shape_cast %16 : vector<16x2xf32> to vector<1x16x2xf32>
    %c0_7 = arith.constant 0 : index
    %c0_8 = arith.constant 0 : index
    %c0_9 = arith.constant 0 : index
    %18 = vector.load %arg4[%c0_7, %c0_8, %c0_9] : memref<1x16x2xf32, #tpu.memory_space<vmem>>, vector<1x16x2xf32>
    tpu.vector_store %arg4[%c0_7, %c0_8, %c0_9], %17 {strides = array<i32>} : memref<1x16x2xf32, #tpu.memory_space<vmem>>, vector<1x16x2xf32>,
    return
  }
  func.func @transform_0(%arg0: i32) -> (i32, i32) {
    %c0_i32 = arith.constant 0 : i32
    %c0_i32_0 = arith.constant 0 : i32
    %c0_i32_1 = arith.constant 0 : i32
    return %c0_i32, %c0_i32_0 : i32, i32
  }
  func.func @transform_1(%arg0: i32) -> (i32, i32) {
    %c0_i32 = arith.constant 0 : i32
    %c0_i32_0 = arith.constant 0 : i32
    return %c0_i32, %arg0 : i32, i32
  }
  func.func @transform_2(%arg0: i32) -> (i32, i32) {
    %c0_i32 = arith.constant 0 : i32
    %c0_i32_0 = arith.constant 0 : i32
    return %c0_i32, %arg0 : i32, i32
  }
  func.func @transform_3(%arg0: i32) -> (i32, i32, i32) {
    %c0_i32 = arith.constant 0 : i32
    %c0_i32_0 = arith.constant 0 : i32
    %c0_i32_1 = arith.constant 0 : i32
    return %arg0, %c0_i32, %c0_i32_0 : i32, i32, i32
  }
}

module attributes {stable_mosaic.version = 11 : i64} {
  func.func @_bn_act_kernel(%arg0: i32, %arg1: memref<16x512xf32, #tpu.memory_space<vmem>>, %arg2: memref<16x1xf32, #tpu.memory_space<vmem>>, %arg3: memref<16x1xf32, #tpu.memory_space<vmem>>, %arg4: memref<16x512xbf16, #tpu.memory_space<vmem>>) attributes {dimension_semantics = [#tpu.dimension_semantics<parallel>], iteration_bounds = array<i64: 1>, scalar_prefetch = 0 : i64, scratch_operands = 0 : i64, tpu.core_type = #tpu.core_type<tc>, window_params = [{transform_indices = @transform_0, window_bounds = array<i64: 16, 512>}, {pipeline_mode = #tpu.pipeline_mode<synchronous>, transform_indices = @transform_1, window_bounds = array<i64: 16, 1>}, {pipeline_mode = #tpu.pipeline_mode<synchronous>, transform_indices = @transform_2, window_bounds = array<i64: 16, 1>}, {transform_indices = @transform_3, window_bounds = array<i64: 16, 512>}]} {
    %c0 = arith.constant 0 : index
    %c0_0 = arith.constant 0 : index
    %0 = vector.load %arg1[%c0, %c0_0] : memref<16x512xf32, #tpu.memory_space<vmem>>, vector<16x512xf32>
    %c0_1 = arith.constant 0 : index
    %c0_2 = arith.constant 0 : index
    %1 = vector.load %arg2[%c0_1, %c0_2] : memref<16x1xf32, #tpu.memory_space<vmem>>, vector<16x1xf32>
    %2 = vector.broadcast %1 : vector<16x1xf32> to vector<16x512xf32>
    %3 = arith.mulf %0, %2 : vector<16x512xf32>
    %c0_3 = arith.constant 0 : index
    %c0_4 = arith.constant 0 : index
    %4 = vector.load %arg3[%c0_3, %c0_4] : memref<16x1xf32, #tpu.memory_space<vmem>>, vector<16x1xf32>
    %5 = vector.broadcast %4 : vector<16x1xf32> to vector<16x512xf32>
    %6 = arith.addf %3, %5 : vector<16x512xf32>
    %cst = arith.constant 0.000000e+00 : f32
    %7 = vector.broadcast %cst : f32 to vector<16x512xf32>
    %8 = arith.cmpf oge, %6, %7 : vector<16x512xf32>
    %cst_5 = arith.constant 2.000000e-01 : f32
    %9 = vector.broadcast %cst_5 : f32 to vector<16x512xf32>
    %10 = arith.mulf %9, %6 : vector<16x512xf32>
    %11 = arith.select %8, %6, %10 : vector<16x512xi1>, vector<16x512xf32>
    %12 = arith.truncf %11 : vector<16x512xf32> to vector<16x512xbf16>
    %c0_6 = arith.constant 0 : index
    %c0_7 = arith.constant 0 : index
    %13 = vector.load %arg4[%c0_6, %c0_7] : memref<16x512xbf16, #tpu.memory_space<vmem>>, vector<16x512xbf16>
    tpu.vector_store %arg4[%c0_6, %c0_7], %12 {strides = array<i32>} : memref<16x512xbf16, #tpu.memory_space<vmem>>, vector<16x512xbf16>,
    return
  }
  func.func @transform_0(%arg0: i32) -> (i32, i32) {
    %c0_i32 = arith.constant 0 : i32
    %c0_i32_0 = arith.constant 0 : i32
    return %c0_i32, %arg0 : i32, i32
  }
  func.func @transform_1(%arg0: i32) -> (i32, i32) {
    %c0_i32 = arith.constant 0 : i32
    %c0_i32_0 = arith.constant 0 : i32
    %c0_i32_1 = arith.constant 0 : i32
    return %c0_i32, %c0_i32_0 : i32, i32
  }
  func.func @transform_2(%arg0: i32) -> (i32, i32) {
    %c0_i32 = arith.constant 0 : i32
    %c0_i32_0 = arith.constant 0 : i32
    %c0_i32_1 = arith.constant 0 : i32
    return %c0_i32, %c0_i32_0 : i32, i32
  }
  func.func @transform_3(%arg0: i32) -> (i32, i32) {
    %c0_i32 = arith.constant 0 : i32
    %c0_i32_0 = arith.constant 0 : i32
    return %c0_i32, %arg0 : i32, i32
  }
}

module attributes {stable_mosaic.version = 11 : i64} {
  func.func @_conv_stats_kernel(%arg0: i32, %arg1: memref<32x256xbf16, #tpu.memory_space<vmem>>, %arg2: memref<256x128xbf16, #tpu.memory_space<vmem>>, %arg3: memref<32x128xf32, #tpu.memory_space<vmem>>, %arg4: memref<1x32x2xf32, #tpu.memory_space<vmem>>) attributes {dimension_semantics = [#tpu.dimension_semantics<parallel>], iteration_bounds = array<i64: 1>, scalar_prefetch = 0 : i64, scratch_operands = 0 : i64, tpu.core_type = #tpu.core_type<tc>, window_params = [{pipeline_mode = #tpu.pipeline_mode<synchronous>, transform_indices = @transform_0, window_bounds = array<i64: 32, 256>}, {transform_indices = @transform_1, window_bounds = array<i64: 256, 128>}, {transform_indices = @transform_2, window_bounds = array<i64: 32, 128>}, {transform_indices = @transform_3, window_bounds = array<i64: 1, 32, 2>}]} {
    %c0 = arith.constant 0 : index
    %c0_0 = arith.constant 0 : index
    %0 = vector.load %arg1[%c0, %c0_0] : memref<32x256xbf16, #tpu.memory_space<vmem>>, vector<32x256xbf16>
    %c0_1 = arith.constant 0 : index
    %c0_2 = arith.constant 0 : index
    %1 = vector.load %arg2[%c0_1, %c0_2] : memref<256x128xbf16, #tpu.memory_space<vmem>>, vector<256x128xbf16>
    %cst = arith.constant dense<0.000000e+00> : vector<32x128xf32>
    %2 = tpu.matmul %0, %1, %cst {dimension_numbers = #tpu.dot_dimension_numbers<[1], [0], [0], [1], [0, 0, 1, 1], [], []>} : vector<32x256xbf16>, vector<256x128xbf16>, vector<32x128xf32> -> vector<32x128xf32>
    %c0_3 = arith.constant 0 : index
    %c0_4 = arith.constant 0 : index
    %3 = vector.load %arg3[%c0_3, %c0_4] : memref<32x128xf32, #tpu.memory_space<vmem>>, vector<32x128xf32>
    tpu.vector_store %arg3[%c0_3, %c0_4], %2 {strides = array<i32>} : memref<32x128xf32, #tpu.memory_space<vmem>>, vector<32x128xf32>,
    %cst_5 = arith.constant dense<0.000000e+00> : vector<32xf32>
    %4 = vector.multi_reduction <add>, %2, %cst_5 [1] : vector<32x128xf32> to vector<32xf32>
    %5 = vector.shape_cast %4 : vector<32xf32> to vector<32x1xf32>
    %6 = arith.mulf %2, %2 : vector<32x128xf32>
    %cst_6 = arith.constant dense<0.000000e+00> : vector<32xf32>
    %7 = vector.multi_reduction <add>, %6, %cst_6 [1] : vector<32x128xf32> to vector<32xf32>
    %8 = vector.shape_cast %7 : vector<32xf32> to vector<32x1xf32>
    %9 = tpu.iota {dimensions = array<i32: 1>} : vector<32x2xi32>
    %c0_i32 = arith.constant 0 : i32
    %10 = vector.broadcast %c0_i32 : i32 to vector<32x2xi32>
    %11 = arith.cmpi eq, %9, %10 : vector<32x2xi32>
    %12 = vector.shape_cast %5 : vector<32x1xf32> to vector<32x1xf32>
    %13 = vector.broadcast %12 : vector<32x1xf32> to vector<32x2xf32>
    %14 = vector.shape_cast %8 : vector<32x1xf32> to vector<32x1xf32>
    %15 = vector.broadcast %14 : vector<32x1xf32> to vector<32x2xf32>
    %16 = arith.select %11, %13, %15 : vector<32x2xi1>, vector<32x2xf32>
    %17 = vector.shape_cast %16 : vector<32x2xf32> to vector<1x32x2xf32>
    %c0_7 = arith.constant 0 : index
    %c0_8 = arith.constant 0 : index
    %c0_9 = arith.constant 0 : index
    %18 = vector.load %arg4[%c0_7, %c0_8, %c0_9] : memref<1x32x2xf32, #tpu.memory_space<vmem>>, vector<1x32x2xf32>
    tpu.vector_store %arg4[%c0_7, %c0_8, %c0_9], %17 {strides = array<i32>} : memref<1x32x2xf32, #tpu.memory_space<vmem>>, vector<1x32x2xf32>,
    return
  }
  func.func @transform_0(%arg0: i32) -> (i32, i32) {
    %c0_i32 = arith.constant 0 : i32
    %c0_i32_0 = arith.constant 0 : i32
    %c0_i32_1 = arith.constant 0 : i32
    return %c0_i32, %c0_i32_0 : i32, i32
  }
  func.func @transform_1(%arg0: i32) -> (i32, i32) {
    %c0_i32 = arith.constant 0 : i32
    %c0_i32_0 = arith.constant 0 : i32
    return %c0_i32, %arg0 : i32, i32
  }
  func.func @transform_2(%arg0: i32) -> (i32, i32) {
    %c0_i32 = arith.constant 0 : i32
    %c0_i32_0 = arith.constant 0 : i32
    return %c0_i32, %arg0 : i32, i32
  }
  func.func @transform_3(%arg0: i32) -> (i32, i32, i32) {
    %c0_i32 = arith.constant 0 : i32
    %c0_i32_0 = arith.constant 0 : i32
    %c0_i32_1 = arith.constant 0 : i32
    return %arg0, %c0_i32, %c0_i32_0 : i32, i32, i32
  }
}

module attributes {stable_mosaic.version = 11 : i64} {
  func.func @_bn_act_kernel(%arg0: i32, %arg1: memref<32x128xf32, #tpu.memory_space<vmem>>, %arg2: memref<32x1xf32, #tpu.memory_space<vmem>>, %arg3: memref<32x1xf32, #tpu.memory_space<vmem>>, %arg4: memref<32x128xbf16, #tpu.memory_space<vmem>>) attributes {dimension_semantics = [#tpu.dimension_semantics<parallel>], iteration_bounds = array<i64: 1>, scalar_prefetch = 0 : i64, scratch_operands = 0 : i64, tpu.core_type = #tpu.core_type<tc>, window_params = [{transform_indices = @transform_0, window_bounds = array<i64: 32, 128>}, {pipeline_mode = #tpu.pipeline_mode<synchronous>, transform_indices = @transform_1, window_bounds = array<i64: 32, 1>}, {pipeline_mode = #tpu.pipeline_mode<synchronous>, transform_indices = @transform_2, window_bounds = array<i64: 32, 1>}, {transform_indices = @transform_3, window_bounds = array<i64: 32, 128>}]} {
    %c0 = arith.constant 0 : index
    %c0_0 = arith.constant 0 : index
    %0 = vector.load %arg1[%c0, %c0_0] : memref<32x128xf32, #tpu.memory_space<vmem>>, vector<32x128xf32>
    %c0_1 = arith.constant 0 : index
    %c0_2 = arith.constant 0 : index
    %1 = vector.load %arg2[%c0_1, %c0_2] : memref<32x1xf32, #tpu.memory_space<vmem>>, vector<32x1xf32>
    %2 = vector.broadcast %1 : vector<32x1xf32> to vector<32x128xf32>
    %3 = arith.mulf %0, %2 : vector<32x128xf32>
    %c0_3 = arith.constant 0 : index
    %c0_4 = arith.constant 0 : index
    %4 = vector.load %arg3[%c0_3, %c0_4] : memref<32x1xf32, #tpu.memory_space<vmem>>, vector<32x1xf32>
    %5 = vector.broadcast %4 : vector<32x1xf32> to vector<32x128xf32>
    %6 = arith.addf %3, %5 : vector<32x128xf32>
    %cst = arith.constant 0.000000e+00 : f32
    %7 = vector.broadcast %cst : f32 to vector<32x128xf32>
    %8 = arith.cmpf oge, %6, %7 : vector<32x128xf32>
    %cst_5 = arith.constant 2.000000e-01 : f32
    %9 = vector.broadcast %cst_5 : f32 to vector<32x128xf32>
    %10 = arith.mulf %9, %6 : vector<32x128xf32>
    %11 = arith.select %8, %6, %10 : vector<32x128xi1>, vector<32x128xf32>
    %12 = arith.truncf %11 : vector<32x128xf32> to vector<32x128xbf16>
    %c0_6 = arith.constant 0 : index
    %c0_7 = arith.constant 0 : index
    %13 = vector.load %arg4[%c0_6, %c0_7] : memref<32x128xbf16, #tpu.memory_space<vmem>>, vector<32x128xbf16>
    tpu.vector_store %arg4[%c0_6, %c0_7], %12 {strides = array<i32>} : memref<32x128xbf16, #tpu.memory_space<vmem>>, vector<32x128xbf16>,
    return
  }
  func.func @transform_0(%arg0: i32) -> (i32, i32) {
    %c0_i32 = arith.constant 0 : i32
    %c0_i32_0 = arith.constant 0 : i32
    return %c0_i32, %arg0 : i32, i32
  }
  func.func @transform_1(%arg0: i32) -> (i32, i32) {
    %c0_i32 = arith.constant 0 : i32
    %c0_i32_0 = arith.constant 0 : i32
    %c0_i32_1 = arith.constant 0 : i32
    return %c0_i32, %c0_i32_0 : i32, i32
  }
  func.func @transform_2(%arg0: i32) -> (i32, i32) {
    %c0_i32 = arith.constant 0 : i32
    %c0_i32_0 = arith.constant 0 : i32
    %c0_i32_1 = arith.constant 0 : i32
    return %c0_i32, %c0_i32_0 : i32, i32
  }
  func.func @transform_3(%arg0: i32) -> (i32, i32) {
    %c0_i32 = arith.constant 0 : i32
    %c0_i32_0 = arith.constant 0 : i32
    return %c0_i32, %arg0 : i32, i32
  }
}

module attributes {stable_mosaic.version = 11 : i64} {
  func.func @_conv_stats_kernel(%arg0: i32, %arg1: memref<64x512xbf16, #tpu.memory_space<vmem>>, %arg2: memref<512x128xbf16, #tpu.memory_space<vmem>>, %arg3: memref<64x128xf32, #tpu.memory_space<vmem>>, %arg4: memref<1x64x2xf32, #tpu.memory_space<vmem>>) attributes {dimension_semantics = [#tpu.dimension_semantics<parallel>], iteration_bounds = array<i64: 1>, scalar_prefetch = 0 : i64, scratch_operands = 0 : i64, tpu.core_type = #tpu.core_type<tc>, window_params = [{pipeline_mode = #tpu.pipeline_mode<synchronous>, transform_indices = @transform_0, window_bounds = array<i64: 64, 512>}, {transform_indices = @transform_1, window_bounds = array<i64: 512, 128>}, {transform_indices = @transform_2, window_bounds = array<i64: 64, 128>}, {transform_indices = @transform_3, window_bounds = array<i64: 1, 64, 2>}]} {
    %c0 = arith.constant 0 : index
    %c0_0 = arith.constant 0 : index
    %0 = vector.load %arg1[%c0, %c0_0] : memref<64x512xbf16, #tpu.memory_space<vmem>>, vector<64x512xbf16>
    %c0_1 = arith.constant 0 : index
    %c0_2 = arith.constant 0 : index
    %1 = vector.load %arg2[%c0_1, %c0_2] : memref<512x128xbf16, #tpu.memory_space<vmem>>, vector<512x128xbf16>
    %cst = arith.constant dense<0.000000e+00> : vector<64x128xf32>
    %2 = tpu.matmul %0, %1, %cst {dimension_numbers = #tpu.dot_dimension_numbers<[1], [0], [0], [1], [0, 0, 1, 1], [], []>} : vector<64x512xbf16>, vector<512x128xbf16>, vector<64x128xf32> -> vector<64x128xf32>
    %c0_3 = arith.constant 0 : index
    %c0_4 = arith.constant 0 : index
    %3 = vector.load %arg3[%c0_3, %c0_4] : memref<64x128xf32, #tpu.memory_space<vmem>>, vector<64x128xf32>
    tpu.vector_store %arg3[%c0_3, %c0_4], %2 {strides = array<i32>} : memref<64x128xf32, #tpu.memory_space<vmem>>, vector<64x128xf32>,
    %cst_5 = arith.constant dense<0.000000e+00> : vector<64xf32>
    %4 = vector.multi_reduction <add>, %2, %cst_5 [1] : vector<64x128xf32> to vector<64xf32>
    %5 = vector.shape_cast %4 : vector<64xf32> to vector<64x1xf32>
    %6 = arith.mulf %2, %2 : vector<64x128xf32>
    %cst_6 = arith.constant dense<0.000000e+00> : vector<64xf32>
    %7 = vector.multi_reduction <add>, %6, %cst_6 [1] : vector<64x128xf32> to vector<64xf32>
    %8 = vector.shape_cast %7 : vector<64xf32> to vector<64x1xf32>
    %9 = tpu.iota {dimensions = array<i32: 1>} : vector<64x2xi32>
    %c0_i32 = arith.constant 0 : i32
    %10 = vector.broadcast %c0_i32 : i32 to vector<64x2xi32>
    %11 = arith.cmpi eq, %9, %10 : vector<64x2xi32>
    %12 = vector.shape_cast %5 : vector<64x1xf32> to vector<64x1xf32>
    %13 = vector.broadcast %12 : vector<64x1xf32> to vector<64x2xf32>
    %14 = vector.shape_cast %8 : vector<64x1xf32> to vector<64x1xf32>
    %15 = vector.broadcast %14 : vector<64x1xf32> to vector<64x2xf32>
    %16 = arith.select %11, %13, %15 : vector<64x2xi1>, vector<64x2xf32>
    %17 = vector.shape_cast %16 : vector<64x2xf32> to vector<1x64x2xf32>
    %c0_7 = arith.constant 0 : index
    %c0_8 = arith.constant 0 : index
    %c0_9 = arith.constant 0 : index
    %18 = vector.load %arg4[%c0_7, %c0_8, %c0_9] : memref<1x64x2xf32, #tpu.memory_space<vmem>>, vector<1x64x2xf32>
    tpu.vector_store %arg4[%c0_7, %c0_8, %c0_9], %17 {strides = array<i32>} : memref<1x64x2xf32, #tpu.memory_space<vmem>>, vector<1x64x2xf32>,
    return
  }
  func.func @transform_0(%arg0: i32) -> (i32, i32) {
    %c0_i32 = arith.constant 0 : i32
    %c0_i32_0 = arith.constant 0 : i32
    %c0_i32_1 = arith.constant 0 : i32
    return %c0_i32, %c0_i32_0 : i32, i32
  }
  func.func @transform_1(%arg0: i32) -> (i32, i32) {
    %c0_i32 = arith.constant 0 : i32
    %c0_i32_0 = arith.constant 0 : i32
    return %c0_i32, %arg0 : i32, i32
  }
  func.func @transform_2(%arg0: i32) -> (i32, i32) {
    %c0_i32 = arith.constant 0 : i32
    %c0_i32_0 = arith.constant 0 : i32
    return %c0_i32, %arg0 : i32, i32
  }
  func.func @transform_3(%arg0: i32) -> (i32, i32, i32) {
    %c0_i32 = arith.constant 0 : i32
    %c0_i32_0 = arith.constant 0 : i32
    %c0_i32_1 = arith.constant 0 : i32
    return %arg0, %c0_i32, %c0_i32_0 : i32, i32, i32
  }
}

module attributes {stable_mosaic.version = 11 : i64} {
  func.func @_bn_act_kernel(%arg0: i32, %arg1: memref<64x128xf32, #tpu.memory_space<vmem>>, %arg2: memref<64x1xf32, #tpu.memory_space<vmem>>, %arg3: memref<64x1xf32, #tpu.memory_space<vmem>>, %arg4: memref<64x128xbf16, #tpu.memory_space<vmem>>) attributes {dimension_semantics = [#tpu.dimension_semantics<parallel>], iteration_bounds = array<i64: 1>, scalar_prefetch = 0 : i64, scratch_operands = 0 : i64, tpu.core_type = #tpu.core_type<tc>, window_params = [{transform_indices = @transform_0, window_bounds = array<i64: 64, 128>}, {pipeline_mode = #tpu.pipeline_mode<synchronous>, transform_indices = @transform_1, window_bounds = array<i64: 64, 1>}, {pipeline_mode = #tpu.pipeline_mode<synchronous>, transform_indices = @transform_2, window_bounds = array<i64: 64, 1>}, {transform_indices = @transform_3, window_bounds = array<i64: 64, 128>}]} {
    %c0 = arith.constant 0 : index
    %c0_0 = arith.constant 0 : index
    %0 = vector.load %arg1[%c0, %c0_0] : memref<64x128xf32, #tpu.memory_space<vmem>>, vector<64x128xf32>
    %c0_1 = arith.constant 0 : index
    %c0_2 = arith.constant 0 : index
    %1 = vector.load %arg2[%c0_1, %c0_2] : memref<64x1xf32, #tpu.memory_space<vmem>>, vector<64x1xf32>
    %2 = vector.broadcast %1 : vector<64x1xf32> to vector<64x128xf32>
    %3 = arith.mulf %0, %2 : vector<64x128xf32>
    %c0_3 = arith.constant 0 : index
    %c0_4 = arith.constant 0 : index
    %4 = vector.load %arg3[%c0_3, %c0_4] : memref<64x1xf32, #tpu.memory_space<vmem>>, vector<64x1xf32>
    %5 = vector.broadcast %4 : vector<64x1xf32> to vector<64x128xf32>
    %6 = arith.addf %3, %5 : vector<64x128xf32>
    %cst = arith.constant 0.000000e+00 : f32
    %7 = vector.broadcast %cst : f32 to vector<64x128xf32>
    %8 = arith.cmpf oge, %6, %7 : vector<64x128xf32>
    %cst_5 = arith.constant 2.000000e-01 : f32
    %9 = vector.broadcast %cst_5 : f32 to vector<64x128xf32>
    %10 = arith.mulf %9, %6 : vector<64x128xf32>
    %11 = arith.select %8, %6, %10 : vector<64x128xi1>, vector<64x128xf32>
    %12 = arith.truncf %11 : vector<64x128xf32> to vector<64x128xbf16>
    %c0_6 = arith.constant 0 : index
    %c0_7 = arith.constant 0 : index
    %13 = vector.load %arg4[%c0_6, %c0_7] : memref<64x128xbf16, #tpu.memory_space<vmem>>, vector<64x128xbf16>
    tpu.vector_store %arg4[%c0_6, %c0_7], %12 {strides = array<i32>} : memref<64x128xbf16, #tpu.memory_space<vmem>>, vector<64x128xbf16>,
    return
  }
  func.func @transform_0(%arg0: i32) -> (i32, i32) {
    %c0_i32 = arith.constant 0 : i32
    %c0_i32_0 = arith.constant 0 : i32
    return %c0_i32, %arg0 : i32, i32
  }
  func.func @transform_1(%arg0: i32) -> (i32, i32) {
    %c0_i32 = arith.constant 0 : i32
    %c0_i32_0 = arith.constant 0 : i32
    %c0_i32_1 = arith.constant 0 : i32
    return %c0_i32, %c0_i32_0 : i32, i32
  }
  func.func @transform_2(%arg0: i32) -> (i32, i32) {
    %c0_i32 = arith.constant 0 : i32
    %c0_i32_0 = arith.constant 0 : i32
    %c0_i32_1 = arith.constant 0 : i32
    return %c0_i32, %c0_i32_0 : i32, i32
  }
  func.func @transform_3(%arg0: i32) -> (i32, i32) {
    %c0_i32 = arith.constant 0 : i32
    %c0_i32_0 = arith.constant 0 : i32
    return %c0_i32, %arg0 : i32, i32
  }
}

module attributes {stable_mosaic.version = 11 : i64} {
  func.func @_conv_act_kernel(%arg0: i32, %arg1: memref<8x1024xbf16, #tpu.memory_space<vmem>>, %arg2: memref<1024x128xbf16, #tpu.memory_space<vmem>>, %arg3: memref<8x128xf32, #tpu.memory_space<vmem>>) attributes {dimension_semantics = [#tpu.dimension_semantics<parallel>], iteration_bounds = array<i64: 1>, scalar_prefetch = 0 : i64, scratch_operands = 0 : i64, tpu.core_type = #tpu.core_type<tc>, window_params = [{pipeline_mode = #tpu.pipeline_mode<synchronous>, transform_indices = @transform_0, window_bounds = array<i64: 8, 1024>}, {transform_indices = @transform_1, window_bounds = array<i64: 1024, 128>}, {transform_indices = @transform_2, window_bounds = array<i64: 8, 128>}]} {
    %c0 = arith.constant 0 : index
    %c0_0 = arith.constant 0 : index
    %0 = vector.load %arg1[%c0, %c0_0] : memref<8x1024xbf16, #tpu.memory_space<vmem>>, vector<8x1024xbf16>
    %c0_1 = arith.constant 0 : index
    %c0_2 = arith.constant 0 : index
    %1 = vector.load %arg2[%c0_1, %c0_2] : memref<1024x128xbf16, #tpu.memory_space<vmem>>, vector<1024x128xbf16>
    %cst = arith.constant dense<0.000000e+00> : vector<8x128xf32>
    %2 = tpu.matmul %0, %1, %cst {dimension_numbers = #tpu.dot_dimension_numbers<[1], [0], [0], [1], [0, 0, 1, 1], [], []>} : vector<8x1024xbf16>, vector<1024x128xbf16>, vector<8x128xf32> -> vector<8x128xf32>
    %cst_3 = arith.constant 0.000000e+00 : f32
    %3 = vector.broadcast %cst_3 : f32 to vector<8x128xf32>
    %4 = arith.subf %3, %2 : vector<8x128xf32>
    %5 = math.exp %4 : vector<8x128xf32>
    %cst_4 = arith.constant 1.000000e+00 : f32
    %6 = vector.broadcast %cst_4 : f32 to vector<8x128xf32>
    %7 = arith.addf %6, %5 : vector<8x128xf32>
    %cst_5 = arith.constant 1.000000e+00 : f32
    %8 = vector.broadcast %cst_5 : f32 to vector<8x128xf32>
    %9 = arith.divf %8, %7 : vector<8x128xf32>
    %c0_6 = arith.constant 0 : index
    %c0_7 = arith.constant 0 : index
    %10 = vector.load %arg3[%c0_6, %c0_7] : memref<8x128xf32, #tpu.memory_space<vmem>>, vector<8x128xf32>
    tpu.vector_store %arg3[%c0_6, %c0_7], %9 {strides = array<i32>} : memref<8x128xf32, #tpu.memory_space<vmem>>, vector<8x128xf32>,
    return
  }
  func.func @transform_0(%arg0: i32) -> (i32, i32) {
    %c0_i32 = arith.constant 0 : i32
    %c0_i32_0 = arith.constant 0 : i32
    %c0_i32_1 = arith.constant 0 : i32
    return %c0_i32, %c0_i32_0 : i32, i32
  }
  func.func @transform_1(%arg0: i32) -> (i32, i32) {
    %c0_i32 = arith.constant 0 : i32
    %c0_i32_0 = arith.constant 0 : i32
    return %c0_i32, %arg0 : i32, i32
  }
  func.func @transform_2(%arg0: i32) -> (i32, i32) {
    %c0_i32 = arith.constant 0 : i32
    %c0_i32_0 = arith.constant 0 : i32
    return %c0_i32, %arg0 : i32, i32
  }
}

</mosaic_0001>

<llo_original>
// kernel: discriminator_forward.10
$region0: #{discriminator_forward.10}
  #allocation0 [shape = 'u32[]', space=smem, size = 0x4, offset = 0x4, fixed_abs, tag = 'smem constant byte address 0x4 - core index']
  #allocation1 [shape = 'u32[144,128]{1,0:T(1,128)}', space=vmem, size = 0x12000, scoped, tag = 'internal scratch']
  %s0 = inlined_call_operand.vmem [shape: bf16[8,48], index: 0, kind: input, shape index: {}]
  %s1 = inlined_call_operand.vmem [shape: bf16[48,8192], index: 1, kind: input, shape index: {}]
  %s2 = inlined_call_operand.vmem [shape: bf16[8,8192], index: 2, kind: output, shape index: {}]
  %s3 = sld [smem:[#allocation0]]
  $region64: #{discriminator_forward.10} parent=0
    _
  %s5 = ssub.s32 1, %s3
  %s6 = scalar_select 0, %s5, %s3
  $region1: #{discriminator_forward.10} parent=0
    #allocation2 [shape = 'u8[98304]{0}', space=vmem, size = 0x18000, scoped, tag = 'input window, operand 1']
    loop: start=0, step=1, limit=18
    $region2: #{discriminator_forward.10} parent=1 // loop_pre_header
      _
    $region3: #{discriminator_forward.10} parent=1 // loop_header
      %s8 = sphi 0, %s12
      %p9 = scmp.ge.s32.totalorder %s8, 18
      %s16 = sphi 0, %s16
      %s18 = sphi 0, %s16
      %s19 = sphi 0, %s18
      %s33 = sphi 0, %s19
      %s39 = sphi 0, %s41
      %s42 = sphi 0, %s39
      %s43 = sphi 0, %s42
      %s59 = sphi 0, %s43
      %s65 = sphi 0, %s67
      %s68 = sphi 0, %s65
      %s69 = sphi 0, %s68
      %s85 = sphi 0, %s69
    $region4: #{discriminator_forward.10} parent=1 // loop_header_branch
      %11 = sbr.rel (%p9) target = $region8
    $region5: #{discriminator_forward.10} parent=1 // loop_body
      %s13 = ssub.s32 %s8, 1
      %s14 = ssub.s32 %s8, 2
      %s15 = sadd.s32 %s8, 1
      %s17 = sadd.s32 %s16, 1
      %p20 = scmp.eq.s32.totalorder %s8, 15
      %p21 = scmp.ne.s32.totalorder %s16, %s18
      %p22 = scmp.eq.s32.totalorder %s8, 0
      %p23 = por %p21, %p22
      %p24 = scmp.ne.s32.totalorder %s16, %s18
      %p25 = scmp.eq.s32.totalorder %s13, 15
      %p26 = por %p24, %p25
      %p27 = scmp.ne.s32.totalorder %s18, %s19
      %p28 = scmp.eq.s32.totalorder %s13, 0
      %p29 = por %p27, %p28
      %p30 = scmp.ne.s32.totalorder %s18, %s19
      %p31 = scmp.eq.s32.totalorder %s14, 15
      %p32 = por %p30, %p31
      %p34 = scmp.ne.s32.totalorder %s19, %s33
      %p35 = scmp.eq.s32.totalorder %s14, 0
      %p36 = por %p34, %p35
      %s37 = ssub.s32 %s8, %s15
      %p38 = scmp.eq.s32.totalorder %s37, 0
      %s40 = sadd.s32 %s39, 1
      %s41 = scalar_select %p38, %s39, %s40
      %p44 = pneg %p38
      %p45 = scmp.eq.s32.totalorder %s8, 15
      %p46 = por %p44, %p45
      %p47 = scmp.ne.s32.totalorder %s39, %s42
      %p48 = scmp.eq.s32.totalorder %s8, 0
      %p49 = por %p47, %p48
      %p50 = scmp.ne.s32.totalorder %s39, %s42
      %p51 = scmp.eq.s32.totalorder %s13, 15
      %p52 = por %p50, %p51
      %p53 = scmp.ne.s32.totalorder %s42, %s43
      %p54 = scmp.eq.s32.totalorder %s13, 0
      %p55 = por %p53, %p54
      %p56 = scmp.ne.s32.totalorder %s42, %s43
      %p57 = scmp.eq.s32.totalorder %s14, 15
      %p58 = por %p56, %p57
      %p60 = scmp.ne.s32.totalorder %s43, %s59
      %p61 = scmp.eq.s32.totalorder %s14, 0
      %p62 = por %p60, %p61
      %s63 = ssub.s32 %s8, %s15
      %p64 = scmp.eq.s32.totalorder %s63, 0
      %s66 = sadd.s32 %s65, 1
      %s67 = scalar_select %p64, %s65, %s66
      %p70 = pneg %p64
      %p71 = scmp.eq.s32.totalorder %s8, 15
      %p72 = por %p70, %p71
      %p73 = scmp.ne.s32.totalorder %s65, %s68
      %p74 = scmp.eq.s32.totalorder %s8, 0
      %p75 = por %p73, %p74
      %p76 = scmp.ne.s32.totalorder %s65, %s68
      %p77 = scmp.eq.s32.totalorder %s13, 15
      %p78 = por %p76, %p77
      %p79 = scmp.ne.s32.totalorder %s68, %s69
      %p80 = scmp.eq.s32.totalorder %s13, 0
      %p81 = por %p79, %p80
      %p82 = scmp.ne.s32.totalorder %s68, %s69
      %p83 = scmp.eq.s32.totalorder %s14, 15
      %p84 = por %p82, %p83
      %p86 = scmp.ne.s32.totalorder %s69, %s85
      %p87 = scmp.eq.s32.totalorder %s14, 0
      %p88 = por %p86, %p87
      %p89 = scmp.le.s32.totalorder 1, %s8
      %p90 = scmp.lt.s32.totalorder %s8, 17
      %p91 = pnand %p89, %p90
      %p92 = pneg %p91
      // Predicated region
      $region9: #{discriminator_forward.10} parent=5 // pred_check
        _
      $region10: #{discriminator_forward.10} parent=5 // pred_check_branch
        %94 = sbr.rel (%p91) target = $region12
      $region11: #{discriminator_forward.10} parent=5 // pred_region
        %s95 = ssub.s32 %s8, 1
        // Predicated region
        $region13: #{discriminator_forward.10} parent=11 // pred_check
          %p96 = pneg %p29
        $region14: #{discriminator_forward.10} parent=11 // pred_check_branch
          %98 = sbr.rel (%p96) target = $region16
        $region15: #{discriminator_forward.10} parent=11 // pred_region
          _
        $region16: #{discriminator_forward.10} parent=11 // pred_fallthru
          _
      $region12: #{discriminator_forward.10} parent=5 // pred_fallthru
        _
      %p99 = scmp.lt.s32.totalorder %s8, 16
      // Predicated region
      $region17: #{discriminator_forward.10} parent=5 // pred_check
        %p100 = pneg %p99
      $region18: #{discriminator_forward.10} parent=5 // pred_check_branch
        %102 = sbr.rel (%p100) target = $region20
      $region19: #{discriminator_forward.10} parent=5 // pred_region
        // Predicated region
        $region21: #{discriminator_forward.10} parent=19 // pred_check
          %p103 = pneg %p49
        $region22: #{discriminator_forward.10} parent=19 // pred_check_branch
          %105 = sbr.rel (%p103) target = $region24
        $region23: #{discriminator_forward.10} parent=19 // pred_region
          %s106 = sand.u32 %s39, 1
          %s107 = sand.u32 %s39, 1
          %s108 = smul.addr %s107, 96
          %s109 = scalar_lea.vmem [#allocation2], %s108
          %s110 = smul.u32 4, %s8
          %s111 = smul.addr %s110, 4
          %s112 = scalar_lea.vmem %s1, %s111
          // Predicated region
          $region25: #{discriminator_forward.10} parent=23 // pred_check
            _
          $region26: #{discriminator_forward.10} parent=23 // pred_check_branch
            %114 = sbr.rel (0) target = $region28
          $region27: #{discriminator_forward.10} parent=23 // pred_region
            // Predicated region
            $region29: #{discriminator_forward.10} parent=27 // pred_check
              _
            $region30: #{discriminator_forward.10} parent=27 // pred_check_branch
              %116 = sbr.rel (0) target = $region32
            $region31: #{discriminator_forward.10} parent=27 // pred_region
              loop: start=0, step=1, limit=1
              $region33: #{discriminator_forward.10} parent=31 // loop_pre_header
                _
              $region34: #{discriminator_forward.10} parent=31 // loop_header
                %s118 = sphi 0, %s122
                %p119 = scmp.ge.s32.totalorder %s118, 1
                %s123 = sphi %s112, %s112
                %s124 = sphi %s109, %s109
              $region35: #{discriminator_forward.10} parent=31 // loop_header_branch
                %121 = sbr.rel (%p119) target = $region39
              $region36: #{discriminator_forward.10} parent=31 // loop_body
                %v125 = vld [vmem:[%s123] sm:$0xff]
                %126 = vst [vmem:[%s124] sm:$0xff] %v125
                %v127 = vld [vmem:[%s123 + $0x8] sm:$0xff]
                %128 = vst [vmem:[%s124 + $0x8] sm:$0xff] %v127
                %v129 = vld [vmem:[%s123 + $0x100] sm:$0xff]
                %130 = vst [vmem:[%s124 + $0x10] sm:$0xff] %v129
                %v131 = vld [vmem:[%s123 + $0x108] sm:$0xff]
                %132 = vst [vmem:[%s124 + $0x18] sm:$0xff] %v131
                %v133 = vld [vmem:[%s123 + $0x200] sm:$0xff]
                %134 = vst [vmem:[%s124 + $0x20] sm:$0xff] %v133
                %v135 = vld [vmem:[%s123 + $0x208] sm:$0xff]
                %136 = vst [vmem:[%s124 + $0x28] sm:$0xff] %v135
                %v137 = vld [vmem:[%s123 + $0x300] sm:$0xff]
                %138 = vst [vmem:[%s124 + $0x30] sm:$0xff] %v137
                %v139 = vld [vmem:[%s123 + $0x308] sm:$0xff]
                %140 = vst [vmem:[%s124 + $0x38] sm:$0xff] %v139
                %v141 = vld [vmem:[%s123 + $0x400] sm:$0xff]
                %142 = vst [vmem:[%s124 + $0x40] sm:$0xff] %v141
                %v143 = vld [vmem:[%s123 + $0x408] sm:$0xff]
                %144 = vst [vmem:[%s124 + $0x48] sm:$0xff] %v143
                %v145 = vld [vmem:[%s123 + $0x500] sm:$0xff]
                %146 = vst [vmem:[%s124 + $0x50] sm:$0xff] %v145
                %v147 = vld [vmem:[%s123 + $0x508] sm:$0xff]
                %148 = vst [vmem:[%s124 + $0x58] sm:$0xff] %v147
              $region37: #{discriminator_forward.10} parent=31 // loop_footer
                %s122 = sadd.s32 1, %s118
              $region38: #{discriminator_forward.10} parent=31 // loop_footer_branch
                %117 = sbr.rel target = $region34
              $region39: #{discriminator_forward.10} parent=31 // loop_exit
                _
            $region32: #{discriminator_forward.10} parent=27 // pred_fallthru
              _
            // Predicated region
            $region40: #{discriminator_forward.10} parent=27 // pred_check
              _
            $region41: #{discriminator_forward.10} parent=27 // pred_check_branch
              %150 = sbr.rel target = $region43
            $region42: #{discriminator_forward.10} parent=27 // pred_region
              _
            $region43: #{discriminator_forward.10} parent=27 // pred_fallthru
              _
          $region28: #{discriminator_forward.10} parent=23 // pred_fallthru
            _
          %151 = vnop
        $region24: #{discriminator_forward.10} parent=19 // pred_fallthru
          _
      $region20: #{discriminator_forward.10} parent=5 // pred_fallthru
        _
      %p152 = scmp.le.s32.totalorder 1, %s8
      %p153 = scmp.lt.s32.totalorder %s8, 17
      %p154 = pnand %p152, %p153
      %p155 = pneg %p154
      // Predicated region
      $region44: #{discriminator_forward.10} parent=5 // pred_check
        _
      $region45: #{discriminator_forward.10} parent=5 // pred_check_branch
        %157 = sbr.rel (%p154) target = $region47
      $region46: #{discriminator_forward.10} parent=5 // pred_region
        %s158 = ssub.s32 %s8, 1
        %s159 = sand.u32 %s42, 1
        %s160 = sand.u32 %s42, 1
        %s161 = smul.addr %s160, 96
        %s162 = scalar_lea.vmem [#allocation2], %s161
        // Predicated region
        $region48: #{discriminator_forward.10} parent=46 // pred_check
          %p163 = pneg %p55
        $region49: #{discriminator_forward.10} parent=46 // pred_check_branch
          %165 = sbr.rel (%p163) target = $region51
        $region50: #{discriminator_forward.10} parent=46 // pred_region
          _
        $region51: #{discriminator_forward.10} parent=46 // pred_fallthru
          _
        %p166 = pneg %p29
        %p167 = pneg %p26
        %s168 = sand.u32 %s42, 1
        %s169 = sand.u32 %s42, 1
        %s170 = smul.addr %s169, 96
        %s171 = scalar_lea.vmem [#allocation2], %s170
        %p172 = pneg %p55
        %p173 = pneg %p52
        %p174 = pneg %p81
        %p175 = pneg %p78
        %s176 = smul.u32 4, %s13
        %p177 = scmp.lt.s32.totalorder %s176, 63
        %s178 = scalar_select %p177, %s176, 63
        %s179 = smul.addr %s178, 4
        %s180 = scalar_lea.vmem %s2, %s179
        %s181 = smul.u32 4, %s13
        %s182 = smul.u32 4, %s13
        %p183 = scmp.lt.s32.totalorder %s182, 63
        %s184 = scalar_select %p183, %s182, 63
        %s185 = smul.addr %s184, 4
        %s186 = scalar_lea.vmem %s2, %s185
        %s187 = smul.u32 4, %s13
        %v189 = vld [vmem:[%s0] sm:$0xf]
        %v190 = vld [vmem:[%s162] sm:$0xff]
        %v191 = vld [vmem:[%s162 + $0x8] sm:$0xff]
        %v192 = vld [vmem:[%s162 + $0x10] sm:$0xff]
        %v193 = vld [vmem:[%s162 + $0x18] sm:$0xff]
        %v194 = vld [vmem:[%s162 + $0x20] sm:$0xff]
        %v195 = vld [vmem:[%s162 + $0x28] sm:$0xff]
        %v196 = vld [vmem:[%s162 + $0x30] sm:$0xff]
        %v197 = vld [vmem:[%s162 + $0x38] sm:$0xff]
        %v198 = vld [vmem:[%s162 + $0x40] sm:$0xff]
        %v199 = vld [vmem:[%s162 + $0x48] sm:$0xff]
        %v200 = vld [vmem:[%s162 + $0x50] sm:$0xff]
        %v201 = vld [vmem:[%s162 + $0x58] sm:$0xff]
        %v214 = vunpack.c.l.b16 %v190
        %v215 = vunpack.c.h.b16 %v190
        %v216 = vunpack.c.l.b16 %v191
        %v217 = vunpack.c.h.b16 %v191
        %v218 = vunpack.c.l.b16 %v192
        %v219 = vunpack.c.h.b16 %v192
        %v220 = vunpack.c.l.b16 %v193
        %v221 = vunpack.c.h.b16 %v193
        %v222 = vunpack.c.l.b16 %v194
        %v223 = vunpack.c.h.b16 %v194
        %v224 = vunpack.c.l.b16 %v195
        %v225 = vunpack.c.h.b16 %v195
        %v226 = vunpack.c.l.b16 %v196
        %v227 = vunpack.c.h.b16 %v196
        %v228 = vunpack.c.l.b16 %v197
        %v229 = vunpack.c.h.b16 %v197
        %v230 = vunpack.c.l.b16 %v198
        %v231 = vunpack.c.h.b16 %v198
        %v232 = vunpack.c.l.b16 %v199
        %v233 = vunpack.c.h.b16 %v199
        %v234 = vunpack.c.l.b16 %v200
        %v235 = vunpack.c.h.b16 %v200
        %v236 = vunpack.c.l.b16 %v201
        %v237 = vunpack.c.h.b16 %v201
        %v238 = vpack.c.b16 %v218, %v214
        %v239 = vpack.c.b16 %v219, %v215
        %v240 = vpack.c.b16 %v220, %v216
        %v241 = vpack.c.b16 %v221, %v217
        %v242 = vpack.c.b16 %v226, %v222
        %v243 = vpack.c.b16 %v227, %v223
        %v244 = vpack.c.b16 %v228, %v224
        %v245 = vpack.c.b16 %v229, %v225
        %v246 = vpack.c.b16 %v234, %v230
        %v247 = vpack.c.b16 %v235, %v231
        %v248 = vpack.c.b16 %v236, %v232
        %v249 = vpack.c.b16 %v237, %v233
        %vm262 = vcmask 392192
        %v264 = vsel %vm262, %v189, 0
        %266 = vmatprep.subr.bf16.mxu0 %v239
        %267 = vmatpush1.bf16.msra.mxu0 %v238
        %268 = vmatprep.subr.bf16.mxu0 %v243
        %269 = vmatpush1.bf16.msra.mxu0 %v242
        %270 = vmatprep.subr.bf16.mxu0 %v247
        %271 = vmatpush1.bf16.msra.mxu0 %v246
        %272 = vmatprep.subr.bf16.mxu0 0
        %273 = vmatpush1.bf16.msra.mxu0 0
        %274 = vmatprep.subr.bf16.mxu0 0
        %275 = vmatpush1.bf16.msra.mxu0 0
        %276 = vmatprep.subr.bf16.mxu0 0
        %277 = vmatpush1.bf16.msra.mxu0 0
        %278 = vmatprep.subr.bf16.mxu0 0
        %279 = vmatpush1.bf16.msra.mxu0 0
        %280 = vmatprep.subr.bf16.mxu0 0
        %281 = vmatpush1.bf16.msra.mxu0 0
        %282 = vmatprep.subr.bf16.mxu0 0
        %283 = vmatpush1.bf16.msra.mxu0 0
        %284 = vmatprep.subr.bf16.mxu0 0
        %285 = vmatpush1.bf16.msra.mxu0 0
        %286 = vmatprep.subr.bf16.mxu0 0
        %287 = vmatpush1.bf16.msra.mxu0 0
        %288 = vmatprep.subr.bf16.mxu0 0
        %289 = vmatpush1.bf16.msra.mxu0 0
        %290 = vmatprep.subr.bf16.mxu0 0
        %291 = vmatpush1.bf16.msra.mxu0 0
        %292 = vmatprep.subr.bf16.mxu0 0
        %293 = vmatpush1.bf16.msra.mxu0 0
        %294 = vmatprep.subr.bf16.mxu0 0
        %295 = vmatpush1.bf16.msra.mxu0 0
        %296 = vmatprep.subr.bf16.mxu0 0
        %297 = vmatpush1.bf16.msra.mxu0 0
        %298 = vmatprep.mubr.bf16.mxu0 0
        %299 = vmatmul.mubr.bf16.gmra.mrb[0].mxu0 %v264
        %v300 = vpop.f32.mrb[0].mxu0
        %v301 = vadd.f32 0.0, %v300
        %v302 = vpop.f32.mrb[0].mxu0
        %v303 = vadd.f32 0.0, %v302
        %v304 = vpop.f32.mrb[0].mxu0
        %v305 = vpop.f32.mrb[0].mxu0
        %306 = vdwg.mxu0
        %307 = vmatprep.subr.bf16.mxu0 %v241
        %308 = vmatpush1.bf16.msra.mxu0 %v240
        %309 = vmatprep.subr.bf16.mxu0 %v245
        %310 = vmatpush1.bf16.msra.mxu0 %v244
        %311 = vmatprep.subr.bf16.mxu0 %v249
        %312 = vmatpush1.bf16.msra.mxu0 %v248
        %313 = vmatprep.subr.bf16.mxu0 0
        %314 = vmatpush1.bf16.msra.mxu0 0
        %315 = vmatprep.subr.bf16.mxu0 0
        %316 = vmatpush1.bf16.msra.mxu0 0
        %317 = vmatprep.subr.bf16.mxu0 0
        %318 = vmatpush1.bf16.msra.mxu0 0
        %319 = vmatprep.subr.bf16.mxu0 0
        %320 = vmatpush1.bf16.msra.mxu0 0
        %321 = vmatprep.subr.bf16.mxu0 0
        %322 = vmatpush1.bf16.msra.mxu0 0
        %323 = vmatprep.subr.bf16.mxu0 0
        %324 = vmatpush1.bf16.msra.mxu0 0
        %325 = vmatprep.subr.bf16.mxu0 0
        %326 = vmatpush1.bf16.msra.mxu0 0
        %327 = vmatprep.subr.bf16.mxu0 0
        %328 = vmatpush1.bf16.msra.mxu0 0
        %329 = vmatprep.subr.bf16.mxu0 0
        %330 = vmatpush1.bf16.msra.mxu0 0
        %331 = vmatprep.subr.bf16.mxu0 0
        %332 = vmatpush1.bf16.msra.mxu0 0
        %333 = vmatprep.subr.bf16.mxu0 0
        %334 = vmatpush1.bf16.msra.mxu0 0
        %335 = vmatprep.subr.bf16.mxu0 0
        %336 = vmatpush1.bf16.msra.mxu0 0
        %337 = vmatprep.subr.bf16.mxu0 0
        %338 = vmatpush1.bf16.msra.mxu0 0
        %339 = vmatprep.mubr.bf16.mxu0 0
        %340 = vmatmul.mubr.bf16.gmra.mrb[0].mxu0 %v264
        %v341 = vpop.f32.mrb[0].mxu0
        %v342 = vadd.f32 0.0, %v341
        %v343 = vpop.f32.mrb[0].mxu0
        %v344 = vadd.f32 0.0, %v343
        %v345 = vpop.f32.mrb[0].mxu0
        %v346 = vpop.f32.mrb[0].mxu0
        %347 = vdwg.mxu0
        %vm348 = vcmp.ge.f32.partialorder %v301, 0.0
        %vm349 = vcmp.ge.f32.partialorder %v303, 0.0
        %vm350 = vcmp.ge.f32.partialorder %v342, 0.0
        %vm351 = vcmp.ge.f32.partialorder %v344, 0.0
        %v352 = vmul.f32 %v301, 0.2
        %v353 = vmul.f32 %v303, 0.2
        %v354 = vmul.f32 %v342, 0.2
        %v355 = vmul.f32 %v344, 0.2
        %v356 = vsel %vm348, %v301, %v352
        %v357 = vsel %vm349, %v303, %v353
        %v358 = vsel %vm350, %v342, %v354
        %v359 = vsel %vm351, %v344, %v355
        %v360 = vpack.c.bf16 %v356, %v356
        %v361 = vpack.c.bf16 %v357, %v357
        %v362 = vpack.c.bf16 %v358, %v358
        %v363 = vpack.c.bf16 %v359, %v359
        %v368 = vunpack.c.l.b16 %v360
        %v369 = vunpack.c.l.b16 %v361
        %v370 = vunpack.c.l.b16 %v362
        %v371 = vunpack.c.l.b16 %v363
        %v372 = vpack.c.b16 %v369, %v368
        %v373 = vpack.c.b16 %v371, %v370
        %376 = vst [vmem:[%s186] sm:$0xff] %v372
        %377 = vst [vmem:[%s186 + $0x8] sm:$0xff] %v373
        %s378 = smul.u32 4, %s13
        %p379 = scmp.lt.s32.totalorder %s378, 63
        %s380 = scalar_select %p379, %s378, 63
        %s381 = smul.addr %s380, 4
        %s382 = scalar_lea.vmem %s2, %s381
        // Predicated region
        $region52: #{discriminator_forward.10} parent=46 // pred_check
          %p383 = pneg %p78
        $region53: #{discriminator_forward.10} parent=46 // pred_check_branch
          %385 = sbr.rel (%p383) target = $region55
        $region54: #{discriminator_forward.10} parent=46 // pred_region
          %s386 = smul.u32 4, %s13
        $region55: #{discriminator_forward.10} parent=46 // pred_fallthru
          _
      $region47: #{discriminator_forward.10} parent=5 // pred_fallthru
        _
      %p387 = scmp.le.s32.totalorder 2, %s8
      // Predicated region
      $region56: #{discriminator_forward.10} parent=5 // pred_check
        %p388 = pneg %p387
      $region57: #{discriminator_forward.10} parent=5 // pred_check_branch
        %390 = sbr.rel (%p388) target = $region59
      $region58: #{discriminator_forward.10} parent=5 // pred_region
        %s391 = ssub.s32 %s8, 2
        // Predicated region
        $region60: #{discriminator_forward.10} parent=58 // pred_check
          %p392 = pneg %p84
        $region61: #{discriminator_forward.10} parent=58 // pred_check_branch
          %394 = sbr.rel (%p392) target = $region63
        $region62: #{discriminator_forward.10} parent=58 // pred_region
          %s395 = smul.u32 4, %s14
          %p396 = scmp.lt.s32.totalorder %s395, 63
          %s397 = scalar_select %p396, %s395, 63
          %s398 = smul.addr %s397, 4
          %s399 = scalar_lea.vmem %s2, %s398
        $region63: #{discriminator_forward.10} parent=58 // pred_fallthru
          _
      $region59: #{discriminator_forward.10} parent=5 // pred_fallthru
        _
    $region6: #{discriminator_forward.10} parent=1 // loop_footer
      %s12 = sadd.s32 1, %s8
    $region7: #{discriminator_forward.10} parent=1 // loop_footer_branch
      %7 = sbr.rel target = $region3
    $region8: #{discriminator_forward.10} parent=1 // loop_exit
      _

// kernel: discriminator_forward.11
$region0: #{discriminator_forward.11}
  #allocation0 [shape = 'u32[]', space=smem, size = 0x4, offset = 0x4, fixed_abs, tag = 'smem constant byte address 0x4 - core index']
  #allocation1 [shape = 'u32[144,128]{1,0:T(1,128)}', space=vmem, size = 0x12000, scoped, tag = 'internal scratch']
  %s0 = inlined_call_operand.vmem [shape: bf16[8,64], index: 0, kind: input, shape index: {}]
  %s1 = inlined_call_operand.vmem [shape: bf16[64,2048], index: 1, kind: input, shape index: {}]
  %s2 = inlined_call_operand.vmem [shape: f32[8,2048], index: 2, kind: output, shape index: {0}]
  %s3 = inlined_call_operand.vmem [shape: f32[4,8,2], index: 3, kind: output, shape index: {1}]
  %4 = xla_tuple %s2, %s3
  %s5 = sld [smem:[#allocation0]]
  $region72: #{discriminator_forward.11} parent=0
    _
  %s7 = ssub.s32 1, %s5
  %s8 = scalar_select 0, %s7, %s5
  $region1: #{discriminator_forward.11} parent=0
    #allocation2 [shape = 'u8[131072]{0}', space=vmem, size = 0x20000, scoped, tag = 'input window, operand 1']
    loop: start=0, step=1, limit=6
    $region2: #{discriminator_forward.11} parent=1 // loop_pre_header
      _
    $region3: #{discriminator_forward.11} parent=1 // loop_header
      %s10 = sphi 0, %s14
      %p11 = scmp.ge.s32.totalorder %s10, 6
      %s18 = sphi 0, %s18
      %s20 = sphi 0, %s18
      %s21 = sphi 0, %s20
      %s35 = sphi 0, %s21
      %s41 = sphi 0, %s43
      %s44 = sphi 0, %s41
      %s45 = sphi 0, %s44
      %s61 = sphi 0, %s45
      %s67 = sphi 0, %s69
      %s70 = sphi 0, %s67
      %s71 = sphi 0, %s70
      %s87 = sphi 0, %s71
      %s93 = sphi 0, %s95
      %s96 = sphi 0, %s93
      %s97 = sphi 0, %s96
      %s113 = sphi 0, %s97
    $region4: #{discriminator_forward.11} parent=1 // loop_header_branch
      %13 = sbr.rel (%p11) target = $region8
    $region5: #{discriminator_forward.11} parent=1 // loop_body
      %s15 = ssub.s32 %s10, 1
      %s16 = ssub.s32 %s10, 2
      %s17 = sadd.s32 %s10, 1
      %s19 = sadd.s32 %s18, 1
      %p22 = scmp.eq.s32.totalorder %s10, 3
      %p23 = scmp.ne.s32.totalorder %s18, %s20
      %p24 = scmp.eq.s32.totalorder %s10, 0
      %p25 = por %p23, %p24
      %p26 = scmp.ne.s32.totalorder %s18, %s20
      %p27 = scmp.eq.s32.totalorder %s15, 3
      %p28 = por %p26, %p27
      %p29 = scmp.ne.s32.totalorder %s20, %s21
      %p30 = scmp.eq.s32.totalorder %s15, 0
      %p31 = por %p29, %p30
      %p32 = scmp.ne.s32.totalorder %s20, %s21
      %p33 = scmp.eq.s32.totalorder %s16, 3
      %p34 = por %p32, %p33
      %p36 = scmp.ne.s32.totalorder %s21, %s35
      %p37 = scmp.eq.s32.totalorder %s16, 0
      %p38 = por %p36, %p37
      %s39 = ssub.s32 %s10, %s17
      %p40 = scmp.eq.s32.totalorder %s39, 0
      %s42 = sadd.s32 %s41, 1
      %s43 = scalar_select %p40, %s41, %s42
      %p46 = pneg %p40
      %p47 = scmp.eq.s32.totalorder %s10, 3
      %p48 = por %p46, %p47
      %p49 = scmp.ne.s32.totalorder %s41, %s44
      %p50 = scmp.eq.s32.totalorder %s10, 0
      %p51 = por %p49, %p50
      %p52 = scmp.ne.s32.totalorder %s41, %s44
      %p53 = scmp.eq.s32.totalorder %s15, 3
      %p54 = por %p52, %p53
      %p55 = scmp.ne.s32.totalorder %s44, %s45
      %p56 = scmp.eq.s32.totalorder %s15, 0
      %p57 = por %p55, %p56
      %p58 = scmp.ne.s32.totalorder %s44, %s45
      %p59 = scmp.eq.s32.totalorder %s16, 3
      %p60 = por %p58, %p59
      %p62 = scmp.ne.s32.totalorder %s45, %s61
      %p63 = scmp.eq.s32.totalorder %s16, 0
      %p64 = por %p62, %p63
      %s65 = ssub.s32 %s10, %s17
      %p66 = scmp.eq.s32.totalorder %s65, 0
      %s68 = sadd.s32 %s67, 1
      %s69 = scalar_select %p66, %s67, %s68
      %p72 = pneg %p66
      %p73 = scmp.eq.s32.totalorder %s10, 3
      %p74 = por %p72, %p73
      %p75 = scmp.ne.s32.totalorder %s67, %s70
      %p76 = scmp.eq.s32.totalorder %s10, 0
      %p77 = por %p75, %p76
      %p78 = scmp.ne.s32.totalorder %s67, %s70
      %p79 = scmp.eq.s32.totalorder %s15, 3
      %p80 = por %p78, %p79
      %p81 = scmp.ne.s32.totalorder %s70, %s71
      %p82 = scmp.eq.s32.totalorder %s15, 0
      %p83 = por %p81, %p82
      %p84 = scmp.ne.s32.totalorder %s70, %s71
      %p85 = scmp.eq.s32.totalorder %s16, 3
      %p86 = por %p84, %p85
      %p88 = scmp.ne.s32.totalorder %s71, %s87
      %p89 = scmp.eq.s32.totalorder %s16, 0
      %p90 = por %p88, %p89
      %s91 = ssub.s32 %s10, %s17
      %p92 = scmp.eq.s32.totalorder %s91, 0
      %s94 = sadd.s32 %s93, 1
      %s95 = scalar_select %p92, %s93, %s94
      %p98 = pneg %p92
      %p99 = scmp.eq.s32.totalorder %s10, 3
      %p100 = por %p98, %p99
      %p101 = scmp.ne.s32.totalorder %s93, %s96
      %p102 = scmp.eq.s32.totalorder %s10, 0
      %p103 = por %p101, %p102
      %p104 = scmp.ne.s32.totalorder %s93, %s96
      %p105 = scmp.eq.s32.totalorder %s15, 3
      %p106 = por %p104, %p105
      %p107 = scmp.ne.s32.totalorder %s96, %s97
      %p108 = scmp.eq.s32.totalorder %s15, 0
      %p109 = por %p107, %p108
      %p110 = scmp.ne.s32.totalorder %s96, %s97
      %p111 = scmp.eq.s32.totalorder %s16, 3
      %p112 = por %p110, %p111
      %p114 = scmp.ne.s32.totalorder %s97, %s113
      %p115 = scmp.eq.s32.totalorder %s16, 0
      %p116 = por %p114, %p115
      %p117 = scmp.le.s32.totalorder 1, %s10
      %p118 = scmp.lt.s32.totalorder %s10, 5
      %p119 = pnand %p117, %p118
      %p120 = pneg %p119
      // Predicated region
      $region9: #{discriminator_forward.11} parent=5 // pred_check
        _
      $region10: #{discriminator_forward.11} parent=5 // pred_check_branch
        %122 = sbr.rel (%p119) target = $region12
      $region11: #{discriminator_forward.11} parent=5 // pred_region
        %s123 = ssub.s32 %s10, 1
        // Predicated region
        $region13: #{discriminator_forward.11} parent=11 // pred_check
          %p124 = pneg %p31
        $region14: #{discriminator_forward.11} parent=11 // pred_check_branch
          %126 = sbr.rel (%p124) target = $region16
        $region15: #{discriminator_forward.11} parent=11 // pred_region
          _
        $region16: #{discriminator_forward.11} parent=11 // pred_fallthru
          _
      $region12: #{discriminator_forward.11} parent=5 // pred_fallthru
        _
      %p127 = scmp.lt.s32.totalorder %s10, 4
      // Predicated region
      $region17: #{discriminator_forward.11} parent=5 // pred_check
        %p128 = pneg %p127
      $region18: #{discriminator_forward.11} parent=5 // pred_check_branch
        %130 = sbr.rel (%p128) target = $region20
      $region19: #{discriminator_forward.11} parent=5 // pred_region
        // Predicated region
        $region21: #{discriminator_forward.11} parent=19 // pred_check
          %p131 = pneg %p51
        $region22: #{discriminator_forward.11} parent=19 // pred_check_branch
          %133 = sbr.rel (%p131) target = $region24
        $region23: #{discriminator_forward.11} parent=19 // pred_region
          %s134 = sand.u32 %s41, 1
          %s135 = sand.u32 %s41, 1
          %s136 = smul.addr %s135, 128
          %s137 = scalar_lea.vmem [#allocation2], %s136
          %s138 = smul.u32 4, %s10
          %s139 = smul.addr %s138, 4
          %s140 = scalar_lea.vmem %s1, %s139
          // Predicated region
          $region25: #{discriminator_forward.11} parent=23 // pred_check
            _
          $region26: #{discriminator_forward.11} parent=23 // pred_check_branch
            %142 = sbr.rel (0) target = $region28
          $region27: #{discriminator_forward.11} parent=23 // pred_region
            // Predicated region
            $region29: #{discriminator_forward.11} parent=27 // pred_check
              _
            $region30: #{discriminator_forward.11} parent=27 // pred_check_branch
              %144 = sbr.rel (0) target = $region32
            $region31: #{discriminator_forward.11} parent=27 // pred_region
              loop: start=0, step=1, limit=1
              $region33: #{discriminator_forward.11} parent=31 // loop_pre_header
                _
              $region34: #{discriminator_forward.11} parent=31 // loop_header
                %s146 = sphi 0, %s150
                %p147 = scmp.ge.s32.totalorder %s146, 1
                %s151 = sphi %s140, %s140
                %s152 = sphi %s137, %s137
              $region35: #{discriminator_forward.11} parent=31 // loop_header_branch
                %149 = sbr.rel (%p147) target = $region39
              $region36: #{discriminator_forward.11} parent=31 // loop_body
                %v153 = vld [vmem:[%s151] sm:$0xff]
                %154 = vst [vmem:[%s152] sm:$0xff] %v153
                %v155 = vld [vmem:[%s151 + $0x8] sm:$0xff]
                %156 = vst [vmem:[%s152 + $0x8] sm:$0xff] %v155
                %v157 = vld [vmem:[%s151 + $0x40] sm:$0xff]
                %158 = vst [vmem:[%s152 + $0x10] sm:$0xff] %v157
                %v159 = vld [vmem:[%s151 + $0x48] sm:$0xff]
                %160 = vst [vmem:[%s152 + $0x18] sm:$0xff] %v159
                %v161 = vld [vmem:[%s151 + $0x80] sm:$0xff]
                %162 = vst [vmem:[%s152 + $0x20] sm:$0xff] %v161
                %v163 = vld [vmem:[%s151 + $0x88] sm:$0xff]
                %164 = vst [vmem:[%s152 + $0x28] sm:$0xff] %v163
                %v165 = vld [vmem:[%s151 + $0xc0] sm:$0xff]
                %166 = vst [vmem:[%s152 + $0x30] sm:$0xff] %v165
                %v167 = vld [vmem:[%s151 + $0xc8] sm:$0xff]
                %168 = vst [vmem:[%s152 + $0x38] sm:$0xff] %v167
                %v169 = vld [vmem:[%s151 + $0x100] sm:$0xff]
                %170 = vst [vmem:[%s152 + $0x40] sm:$0xff] %v169
                %v171 = vld [vmem:[%s151 + $0x108] sm:$0xff]
                %172 = vst [vmem:[%s152 + $0x48] sm:$0xff] %v171
                %v173 = vld [vmem:[%s151 + $0x140] sm:$0xff]
                %174 = vst [vmem:[%s152 + $0x50] sm:$0xff] %v173
                %v175 = vld [vmem:[%s151 + $0x148] sm:$0xff]
                %176 = vst [vmem:[%s152 + $0x58] sm:$0xff] %v175
                %v177 = vld [vmem:[%s151 + $0x180] sm:$0xff]
                %178 = vst [vmem:[%s152 + $0x60] sm:$0xff] %v177
                %v179 = vld [vmem:[%s151 + $0x188] sm:$0xff]
                %180 = vst [vmem:[%s152 + $0x68] sm:$0xff] %v179
                %v181 = vld [vmem:[%s151 + $0x1c0] sm:$0xff]
                %182 = vst [vmem:[%s152 + $0x70] sm:$0xff] %v181
                %v183 = vld [vmem:[%s151 + $0x1c8] sm:$0xff]
                %184 = vst [vmem:[%s152 + $0x78] sm:$0xff] %v183
              $region37: #{discriminator_forward.11} parent=31 // loop_footer
                %s150 = sadd.s32 1, %s146
              $region38: #{discriminator_forward.11} parent=31 // loop_footer_branch
                %145 = sbr.rel target = $region34
              $region39: #{discriminator_forward.11} parent=31 // loop_exit
                _
            $region32: #{discriminator_forward.11} parent=27 // pred_fallthru
              _
            // Predicated region
            $region40: #{discriminator_forward.11} parent=27 // pred_check
              _
            $region41: #{discriminator_forward.11} parent=27 // pred_check_branch
              %186 = sbr.rel target = $region43
            $region42: #{discriminator_forward.11} parent=27 // pred_region
              _
            $region43: #{discriminator_forward.11} parent=27 // pred_fallthru
              _
          $region28: #{discriminator_forward.11} parent=23 // pred_fallthru
            _
          %187 = vnop
        $region24: #{discriminator_forward.11} parent=19 // pred_fallthru
          _
      $region20: #{discriminator_forward.11} parent=5 // pred_fallthru
        _
      %p188 = scmp.le.s32.totalorder 1, %s10
      %p189 = scmp.lt.s32.totalorder %s10, 5
      %p190 = pnand %p188, %p189
      %p191 = pneg %p190
      // Predicated region
      $region44: #{discriminator_forward.11} parent=5 // pred_check
        _
      $region45: #{discriminator_forward.11} parent=5 // pred_check_branch
        %193 = sbr.rel (%p190) target = $region47
      $region46: #{discriminator_forward.11} parent=5 // pred_region
        %s194 = ssub.s32 %s10, 1
        %s195 = sand.u32 %s44, 1
        %s196 = sand.u32 %s44, 1
        %s197 = smul.addr %s196, 128
        %s198 = scalar_lea.vmem [#allocation2], %s197
        // Predicated region
        $region48: #{discriminator_forward.11} parent=46 // pred_check
          %p199 = pneg %p57
        $region49: #{discriminator_forward.11} parent=46 // pred_check_branch
          %201 = sbr.rel (%p199) target = $region51
        $region50: #{discriminator_forward.11} parent=46 // pred_region
          _
        $region51: #{discriminator_forward.11} parent=46 // pred_fallthru
          _
        %p202 = pneg %p31
        %p203 = pneg %p28
        %s204 = sand.u32 %s44, 1
        %s205 = sand.u32 %s44, 1
        %s206 = smul.addr %s205, 128
        %s207 = scalar_lea.vmem [#allocation2], %s206
        %p208 = pneg %p57
        %p209 = pneg %p54
        %p210 = pneg %p83
        %p211 = pneg %p80
        %s212 = smul.u32 4, %s15
        %p213 = scmp.lt.s32.totalorder %s212, 15
        %s214 = scalar_select %p213, %s212, 15
        %s215 = smul.addr %s214, 8
        %s216 = scalar_lea.vmem %s2, %s215
        %p217 = pneg %p109
        %p218 = pneg %p106
        %p219 = scmp.lt.s32.totalorder %s15, 3
        %s220 = scalar_select %p219, %s15, 3
        %s221 = smul.addr %s220, 8
        %s222 = scalar_lea.vmem %s3, %s221
        %s223 = smul.u32 4, %s15
        %s224 = smul.u32 4, %s15
        %p225 = scmp.lt.s32.totalorder %s224, 15
        %s226 = scalar_select %p225, %s224, 15
        %s227 = smul.addr %s226, 8
        %s228 = scalar_lea.vmem %s2, %s227
        %s229 = smul.u32 4, %s15
        %p230 = scmp.lt.s32.totalorder %s15, 3
        %s231 = scalar_select %p230, %s15, 3
        %s232 = smul.addr %s231, 8
        %s233 = scalar_lea.vmem %s3, %s232
        %v235 = vld [vmem:[%s0] sm:$0xf]
        %v236 = vld [vmem:[%s198] sm:$0xff]
        %v237 = vld [vmem:[%s198 + $0x8] sm:$0xff]
        %v238 = vld [vmem:[%s198 + $0x10] sm:$0xff]
        %v239 = vld [vmem:[%s198 + $0x18] sm:$0xff]
        %v240 = vld [vmem:[%s198 + $0x20] sm:$0xff]
        %v241 = vld [vmem:[%s198 + $0x28] sm:$0xff]
        %v242 = vld [vmem:[%s198 + $0x30] sm:$0xff]
        %v243 = vld [vmem:[%s198 + $0x38] sm:$0xff]
        %v244 = vld [vmem:[%s198 + $0x40] sm:$0xff]
        %v245 = vld [vmem:[%s198 + $0x48] sm:$0xff]
        %v246 = vld [vmem:[%s198 + $0x50] sm:$0xff]
        %v247 = vld [vmem:[%s198 + $0x58] sm:$0xff]
        %v248 = vld [vmem:[%s198 + $0x60] sm:$0xff]
        %v249 = vld [vmem:[%s198 + $0x68] sm:$0xff]
        %v250 = vld [vmem:[%s198 + $0x70] sm:$0xff]
        %v251 = vld [vmem:[%s198 + $0x78] sm:$0xff]
        %v268 = vunpack.c.l.b16 %v236
        %v269 = vunpack.c.h.b16 %v236
        %v270 = vunpack.c.l.b16 %v237
        %v271 = vunpack.c.h.b16 %v237
        %v272 = vunpack.c.l.b16 %v238
        %v273 = vunpack.c.h.b16 %v238
        %v274 = vunpack.c.l.b16 %v239
        %v275 = vunpack.c.h.b16 %v239
        %v276 = vunpack.c.l.b16 %v240
        %v277 = vunpack.c.h.b16 %v240
        %v278 = vunpack.c.l.b16 %v241
        %v279 = vunpack.c.h.b16 %v241
        %v280 = vunpack.c.l.b16 %v242
        %v281 = vunpack.c.h.b16 %v242
        %v282 = vunpack.c.l.b16 %v243
        %v283 = vunpack.c.h.b16 %v243
        %v284 = vunpack.c.l.b16 %v244
        %v285 = vunpack.c.h.b16 %v244
        %v286 = vunpack.c.l.b16 %v245
        %v287 = vunpack.c.h.b16 %v245
        %v288 = vunpack.c.l.b16 %v246
        %v289 = vunpack.c.h.b16 %v246
        %v290 = vunpack.c.l.b16 %v247
        %v291 = vunpack.c.h.b16 %v247
        %v292 = vunpack.c.l.b16 %v248
        %v293 = vunpack.c.h.b16 %v248
        %v294 = vunpack.c.l.b16 %v249
        %v295 = vunpack.c.h.b16 %v249
        %v296 = vunpack.c.l.b16 %v250
        %v297 = vunpack.c.h.b16 %v250
        %v298 = vunpack.c.l.b16 %v251
        %v299 = vunpack.c.h.b16 %v251
        %v300 = vpack.c.b16 %v272, %v268
        %v301 = vpack.c.b16 %v273, %v269
        %v302 = vpack.c.b16 %v274, %v270
        %v303 = vpack.c.b16 %v275, %v271
        %v304 = vpack.c.b16 %v280, %v276
        %v305 = vpack.c.b16 %v281, %v277
        %v306 = vpack.c.b16 %v282, %v278
        %v307 = vpack.c.b16 %v283, %v279
        %v308 = vpack.c.b16 %v288, %v284
        %v309 = vpack.c.b16 %v289, %v285
        %v310 = vpack.c.b16 %v290, %v286
        %v311 = vpack.c.b16 %v291, %v287
        %v312 = vpack.c.b16 %v296, %v292
        %v313 = vpack.c.b16 %v297, %v293
        %v314 = vpack.c.b16 %v298, %v294
        %v315 = vpack.c.b16 %v299, %v295
        %vm332 = vcmask 523264
        %v334 = vsel %vm332, %v235, 0
        %336 = vmatprep.subr.bf16.mxu0 %v301
        %337 = vmatpush1.bf16.msra.mxu0 %v300
        %338 = vmatprep.subr.bf16.mxu0 %v305
        %339 = vmatpush1.bf16.msra.mxu0 %v304
        %340 = vmatprep.subr.bf16.mxu0 %v309
        %341 = vmatpush1.bf16.msra.mxu0 %v308
        %342 = vmatprep.subr.bf16.mxu0 %v313
        %343 = vmatpush1.bf16.msra.mxu0 %v312
        %344 = vmatprep.subr.bf16.mxu0 0
        %345 = vmatpush1.bf16.msra.mxu0 0
        %346 = vmatprep.subr.bf16.mxu0 0
        %347 = vmatpush1.bf16.msra.mxu0 0
        %348 = vmatprep.subr.bf16.mxu0 0
        %349 = vmatpush1.bf16.msra.mxu0 0
        %350 = vmatprep.subr.bf16.mxu0 0
        %351 = vmatpush1.bf16.msra.mxu0 0
        %352 = vmatprep.subr.bf16.mxu0 0
        %353 = vmatpush1.bf16.msra.mxu0 0
        %354 = vmatprep.subr.bf16.mxu0 0
        %355 = vmatpush1.bf16.msra.mxu0 0
        %356 = vmatprep.subr.bf16.mxu0 0
        %357 = vmatpush1.bf16.msra.mxu0 0
        %358 = vmatprep.subr.bf16.mxu0 0
        %359 = vmatpush1.bf16.msra.mxu0 0
        %360 = vmatprep.subr.bf16.mxu0 0
        %361 = vmatpush1.bf16.msra.mxu0 0
        %362 = vmatprep.subr.bf16.mxu0 0
        %363 = vmatpush1.bf16.msra.mxu0 0
        %364 = vmatprep.subr.bf16.mxu0 0
        %365 = vmatpush1.bf16.msra.mxu0 0
        %366 = vmatprep.subr.bf16.mxu0 0
        %367 = vmatpush1.bf16.msra.mxu0 0
        %368 = vmatprep.mubr.bf16.mxu0 0
        %369 = vmatmul.mubr.bf16.gmra.mrb[0].mxu0 %v334
        %v370 = vpop.f32.mrb[0].mxu0
        %v371 = vadd.f32 0.0, %v370
        %v372 = vpop.f32.mrb[0].mxu0
        %v373 = vadd.f32 0.0, %v372
        %v374 = vpop.f32.mrb[0].mxu0
        %v375 = vpop.f32.mrb[0].mxu0
        %376 = vdwg.mxu0
        %377 = vmatprep.subr.bf16.mxu0 %v303
        %378 = vmatpush1.bf16.msra.mxu0 %v302
        %379 = vmatprep.subr.bf16.mxu0 %v307
        %380 = vmatpush1.bf16.msra.mxu0 %v306
        %381 = vmatprep.subr.bf16.mxu0 %v311
        %382 = vmatpush1.bf16.msra.mxu0 %v310
        %383 = vmatprep.subr.bf16.mxu0 %v315
        %384 = vmatpush1.bf16.msra.mxu0 %v314
        %385 = vmatprep.subr.bf16.mxu0 0
        %386 = vmatpush1.bf16.msra.mxu0 0
        %387 = vmatprep.subr.bf16.mxu0 0
        %388 = vmatpush1.bf16.msra.mxu0 0
        %389 = vmatprep.subr.bf16.mxu0 0
        %390 = vmatpush1.bf16.msra.mxu0 0
        %391 = vmatprep.subr.bf16.mxu0 0
        %392 = vmatpush1.bf16.msra.mxu0 0
        %393 = vmatprep.subr.bf16.mxu0 0
        %394 = vmatpush1.bf16.msra.mxu0 0
        %395 = vmatprep.subr.bf16.mxu0 0
        %396 = vmatpush1.bf16.msra.mxu0 0
        %397 = vmatprep.subr.bf16.mxu0 0
        %398 = vmatpush1.bf16.msra.mxu0 0
        %399 = vmatprep.subr.bf16.mxu0 0
        %400 = vmatpush1.bf16.msra.mxu0 0
        %401 = vmatprep.subr.bf16.mxu0 0
        %402 = vmatpush1.bf16.msra.mxu0 0
        %403 = vmatprep.subr.bf16.mxu0 0
        %404 = vmatpush1.bf16.msra.mxu0 0
        %405 = vmatprep.subr.bf16.mxu0 0
        %406 = vmatpush1.bf16.msra.mxu0 0
        %407 = vmatprep.subr.bf16.mxu0 0
        %408 = vmatpush1.bf16.msra.mxu0 0
        %409 = vmatprep.mubr.bf16.mxu0 0
        %410 = vmatmul.mubr.bf16.gmra.mrb[0].mxu0 %v334
        %v411 = vpop.f32.mrb[0].mxu0
        %v412 = vadd.f32 0.0, %v411
        %v413 = vpop.f32.mrb[0].mxu0
        %v414 = vadd.f32 0.0, %v413
        %v415 = vpop.f32.mrb[0].mxu0
        %v416 = vpop.f32.mrb[0].mxu0
        %417 = vdwg.mxu0
        %418 = vst [vmem:[%s228] sm:$0xff] %v371
        %419 = vst [vmem:[%s228 + $0x8] sm:$0xff] %v373
        %420 = vst [vmem:[%s228 + $0x10] sm:$0xff] %v412
        %421 = vst [vmem:[%s228 + $0x18] sm:$0xff] %v414
        %v422 = vadd.f32 %v371, %v373
        %v423 = vadd.f32 %v422, %v412
        %v424 = vadd.f32 %v423, %v414
        %425 = vadd.xlane.f32.xlu0 %v424
        %v426 = vpop.xlane.xlu0 %425
        %v427 = vmul.f32 %v371, %v371
        %v428 = vmul.f32 %v373, %v373
        %v429 = vmul.f32 %v412, %v412
        %v430 = vmul.f32 %v414, %v414
        %v431 = vadd.f32 %v427, %v428
        %v432 = vadd.f32 %v431, %v429
        %v433 = vadd.f32 %v432, %v430
        %434 = vadd.xlane.f32.xlu0 %v433
        %v435 = vpop.xlane.xlu0 %434
        %v436 = vlaneseq
        %v437 = vand.u32 %v436, 127
        %vm438 = vcmp.eq.s32.totalorder %v437, 0
        %v439 = vsel %vm438, %v426, %v435
        %vm440 = vcmask 15360
        %441 = vst.msk [vmem:[%s233] sm:$0xff] %vm440, %v439
        %s442 = smul.u32 4, %s15
        %p443 = scmp.lt.s32.totalorder %s442, 15
        %s444 = scalar_select %p443, %s442, 15
        %s445 = smul.addr %s444, 8
        %s446 = scalar_lea.vmem %s2, %s445
        %p447 = scmp.lt.s32.totalorder %s15, 3
        %s448 = scalar_select %p447, %s15, 3
        %s449 = smul.addr %s448, 8
        %s450 = scalar_lea.vmem %s3, %s449
        // Predicated region
        $region52: #{discriminator_forward.11} parent=46 // pred_check
          %p451 = pneg %p80
        $region53: #{discriminator_forward.11} parent=46 // pred_check_branch
          %453 = sbr.rel (%p451) target = $region55
        $region54: #{discriminator_forward.11} parent=46 // pred_region
          %s454 = smul.u32 4, %s15
        $region55: #{discriminator_forward.11} parent=46 // pred_fallthru
          _
        // Predicated region
        $region56: #{discriminator_forward.11} parent=46 // pred_check
          %p455 = pneg %p106
        $region57: #{discriminator_forward.11} parent=46 // pred_check_branch
          %457 = sbr.rel (%p455) target = $region59
        $region58: #{discriminator_forward.11} parent=46 // pred_region
          _
        $region59: #{discriminator_forward.11} parent=46 // pred_fallthru
          _
      $region47: #{discriminator_forward.11} parent=5 // pred_fallthru
        _
      %p458 = scmp.le.s32.totalorder 2, %s10
      // Predicated region
      $region60: #{discriminator_forward.11} parent=5 // pred_check
        %p459 = pneg %p458
      $region61: #{discriminator_forward.11} parent=5 // pred_check_branch
        %461 = sbr.rel (%p459) target = $region63
      $region62: #{discriminator_forward.11} parent=5 // pred_region
        %s462 = ssub.s32 %s10, 2
        // Predicated region
        $region64: #{discriminator_forward.11} parent=62 // pred_check
          %p463 = pneg %p86
        $region65: #{discriminator_forward.11} parent=62 // pred_check_branch
          %465 = sbr.rel (%p463) target = $region67
        $region66: #{discriminator_forward.11} parent=62 // pred_region
          %s466 = smul.u32 4, %s16
          %p467 = scmp.lt.s32.totalorder %s466, 15
          %s468 = scalar_select %p467, %s466, 15
          %s469 = smul.addr %s468, 8
          %s470 = scalar_lea.vmem %s2, %s469
        $region67: #{discriminator_forward.11} parent=62 // pred_fallthru
          _
        // Predicated region
        $region68: #{discriminator_forward.11} parent=62 // pred_check
          %p471 = pneg %p112
        $region69: #{discriminator_forward.11} parent=62 // pred_check_branch
          %473 = sbr.rel (%p471) target = $region71
        $region70: #{discriminator_forward.11} parent=62 // pred_region
          %p474 = scmp.lt.s32.totalorder %s16, 3
          %s475 = scalar_select %p474, %s16, 3
          %s476 = smul.addr %s475, 8
          %s477 = scalar_lea.vmem %s3, %s476
        $region71: #{discriminator_forward.11} parent=62 // pred_fallthru
          _
      $region63: #{discriminator_forward.11} parent=5 // pred_fallthru
        _
    $region6: #{discriminator_forward.11} parent=1 // loop_footer
      %s14 = sadd.s32 1, %s10
    $region7: #{discriminator_forward.11} parent=1 // loop_footer_branch
      %9 = sbr.rel target = $region3
    $region8: #{discriminator_forward.11} parent=1 // loop_exit
      _

// kernel: discriminator_forward.12
$region0: #{discriminator_forward.12}
  #allocation0 [shape = 'u32[]', space=smem, size = 0x4, offset = 0x4, fixed_abs, tag = 'smem constant byte address 0x4 - core index']
  #allocation1 [shape = 'u32[144,128]{1,0:T(1,128)}', space=vmem, size = 0x12000, scoped, tag = 'internal scratch']
  %s0 = inlined_call_operand.vmem [shape: f32[8,2048], index: 0, kind: input, shape index: {}]
  %s1 = inlined_call_operand.vmem [shape: f32[8,1], index: 1, kind: input, shape index: {}]
  %s2 = inlined_call_operand.vmem [shape: f32[8,1], index: 2, kind: input, shape index: {}]
  %s3 = inlined_call_operand.vmem [shape: bf16[8,2048], index: 3, kind: output, shape index: {}]
  %s4 = sld [smem:[#allocation0]]
  $region45: #{discriminator_forward.12} parent=0
    _
  %s6 = ssub.s32 1, %s4
  %s7 = scalar_select 0, %s6, %s4
  loop: start=0, step=1, limit=6
  $region2: #{discriminator_forward.12} parent=0 // loop_pre_header
    _
  $region3: #{discriminator_forward.12} parent=0 // loop_header
    %s9 = sphi 0, %s13
    %p10 = scmp.ge.s32.totalorder %s9, 6
    %s19 = sphi 0, %s21
    %s22 = sphi 0, %s19
    %s23 = sphi 0, %s22
    %s39 = sphi 0, %s23
    %s43 = sphi 0, %s43
    %s45 = sphi 0, %s43
    %s46 = sphi 0, %s45
    %s60 = sphi 0, %s46
    %s64 = sphi 0, %s64
    %s66 = sphi 0, %s64
    %s67 = sphi 0, %s66
    %s81 = sphi 0, %s67
    %s87 = sphi 0, %s89
    %s90 = sphi 0, %s87
    %s91 = sphi 0, %s90
    %s107 = sphi 0, %s91
  $region4: #{discriminator_forward.12} parent=0 // loop_header_branch
    %12 = sbr.rel (%p10) target = $region8
  $region5: #{discriminator_forward.12} parent=0 // loop_body
    %s14 = ssub.s32 %s9, 1
    %s15 = ssub.s32 %s9, 2
    %s16 = sadd.s32 %s9, 1
    %s17 = ssub.s32 %s9, %s16
    %p18 = scmp.eq.s32.totalorder %s17, 0
    %s20 = sadd.s32 %s19, 1
    %s21 = scalar_select %p18, %s19, %s20
    %p24 = pneg %p18
    %p25 = scmp.eq.s32.totalorder %s9, 3
    %p26 = por %p24, %p25
    %p27 = scmp.ne.s32.totalorder %s19, %s22
    %p28 = scmp.eq.s32.totalorder %s9, 0
    %p29 = por %p27, %p28
    %p30 = scmp.ne.s32.totalorder %s19, %s22
    %p31 = scmp.eq.s32.totalorder %s14, 3
    %p32 = por %p30, %p31
    %p33 = scmp.ne.s32.totalorder %s22, %s23
    %p34 = scmp.eq.s32.totalorder %s14, 0
    %p35 = por %p33, %p34
    %p36 = scmp.ne.s32.totalorder %s22, %s23
    %p37 = scmp.eq.s32.totalorder %s15, 3
    %p38 = por %p36, %p37
    %p40 = scmp.ne.s32.totalorder %s23, %s39
    %p41 = scmp.eq.s32.totalorder %s15, 0
    %p42 = por %p40, %p41
    %s44 = sadd.s32 %s43, 1
    %p47 = scmp.eq.s32.totalorder %s9, 3
    %p48 = scmp.ne.s32.totalorder %s43, %s45
    %p49 = scmp.eq.s32.totalorder %s9, 0
    %p50 = por %p48, %p49
    %p51 = scmp.ne.s32.totalorder %s43, %s45
    %p52 = scmp.eq.s32.totalorder %s14, 3
    %p53 = por %p51, %p52
    %p54 = scmp.ne.s32.totalorder %s45, %s46
    %p55 = scmp.eq.s32.totalorder %s14, 0
    %p56 = por %p54, %p55
    %p57 = scmp.ne.s32.totalorder %s45, %s46
    %p58 = scmp.eq.s32.totalorder %s15, 3
    %p59 = por %p57, %p58
    %p61 = scmp.ne.s32.totalorder %s46, %s60
    %p62 = scmp.eq.s32.totalorder %s15, 0
    %p63 = por %p61, %p62
    %s65 = sadd.s32 %s64, 1
    %p68 = scmp.eq.s32.totalorder %s9, 3
    %p69 = scmp.ne.s32.totalorder %s64, %s66
    %p70 = scmp.eq.s32.totalorder %s9, 0
    %p71 = por %p69, %p70
    %p72 = scmp.ne.s32.totalorder %s64, %s66
    %p73 = scmp.eq.s32.totalorder %s14, 3
    %p74 = por %p72, %p73
    %p75 = scmp.ne.s32.totalorder %s66, %s67
    %p76 = scmp.eq.s32.totalorder %s14, 0
    %p77 = por %p75, %p76
    %p78 = scmp.ne.s32.totalorder %s66, %s67
    %p79 = scmp.eq.s32.totalorder %s15, 3
    %p80 = por %p78, %p79
    %p82 = scmp.ne.s32.totalorder %s67, %s81
    %p83 = scmp.eq.s32.totalorder %s15, 0
    %p84 = por %p82, %p83
    %s85 = ssub.s32 %s9, %s16
    %p86 = scmp.eq.s32.totalorder %s85, 0
    %s88 = sadd.s32 %s87, 1
    %s89 = scalar_select %p86, %s87, %s88
    %p92 = pneg %p86
    %p93 = scmp.eq.s32.totalorder %s9, 3
    %p94 = por %p92, %p93
    %p95 = scmp.ne.s32.totalorder %s87, %s90
    %p96 = scmp.eq.s32.totalorder %s9, 0
    %p97 = por %p95, %p96
    %p98 = scmp.ne.s32.totalorder %s87, %s90
    %p99 = scmp.eq.s32.totalorder %s14, 3
    %p100 = por %p98, %p99
    %p101 = scmp.ne.s32.totalorder %s90, %s91
    %p102 = scmp.eq.s32.totalorder %s14, 0
    %p103 = por %p101, %p102
    %p104 = scmp.ne.s32.totalorder %s90, %s91
    %p105 = scmp.eq.s32.totalorder %s15, 3
    %p106 = por %p104, %p105
    %p108 = scmp.ne.s32.totalorder %s91, %s107
    %p109 = scmp.eq.s32.totalorder %s15, 0
    %p110 = por %p108, %p109
    %p111 = scmp.le.s32.totalorder 1, %s9
    %p112 = scmp.lt.s32.totalorder %s9, 5
    %p113 = pnand %p111, %p112
    %p114 = pneg %p113
    // Predicated region
    $region9: #{discriminator_forward.12} parent=5 // pred_check
      _
    $region10: #{discriminator_forward.12} parent=5 // pred_check_branch
      %116 = sbr.rel (%p113) target = $region12
    $region11: #{discriminator_forward.12} parent=5 // pred_region
      %s117 = ssub.s32 %s9, 1
      // Predicated region
      $region13: #{discriminator_forward.12} parent=11 // pred_check
        %p118 = pneg %p56
      $region14: #{discriminator_forward.12} parent=11 // pred_check_branch
        %120 = sbr.rel (%p118) target = $region16
      $region15: #{discriminator_forward.12} parent=11 // pred_region
        _
      $region16: #{discriminator_forward.12} parent=11 // pred_fallthru
        _
      // Predicated region
      $region17: #{discriminator_forward.12} parent=11 // pred_check
        %p121 = pneg %p77
      $region18: #{discriminator_forward.12} parent=11 // pred_check_branch
        %123 = sbr.rel (%p121) target = $region20
      $region19: #{discriminator_forward.12} parent=11 // pred_region
        _
      $region20: #{discriminator_forward.12} parent=11 // pred_fallthru
        _
    $region12: #{discriminator_forward.12} parent=5 // pred_fallthru
      _
    %p124 = scmp.lt.s32.totalorder %s9, 4
    // Predicated region
    $region21: #{discriminator_forward.12} parent=5 // pred_check
      %p125 = pneg %p124
    $region22: #{discriminator_forward.12} parent=5 // pred_check_branch
      %127 = sbr.rel (%p125) target = $region24
    $region23: #{discriminator_forward.12} parent=5 // pred_region
      // Predicated region
      $region25: #{discriminator_forward.12} parent=23 // pred_check
        %p128 = pneg %p29
      $region26: #{discriminator_forward.12} parent=23 // pred_check_branch
        %130 = sbr.rel (%p128) target = $region28
      $region27: #{discriminator_forward.12} parent=23 // pred_region
        %s131 = smul.u32 4, %s9
        %p132 = scmp.lt.s32.totalorder %s131, 15
        %s133 = scalar_select %p132, %s131, 15
        %s134 = smul.addr %s133, 8
        %s135 = scalar_lea.vmem %s0, %s134
        %s136 = smul.u32 4, %s9
      $region28: #{discriminator_forward.12} parent=23 // pred_fallthru
        _
    $region24: #{discriminator_forward.12} parent=5 // pred_fallthru
      _
    %p137 = scmp.le.s32.totalorder 1, %s9
    %p138 = scmp.lt.s32.totalorder %s9, 5
    %p139 = pnand %p137, %p138
    %p140 = pneg %p139
    // Predicated region
    $region29: #{discriminator_forward.12} parent=5 // pred_check
      _
    $region30: #{discriminator_forward.12} parent=5 // pred_check_branch
      %142 = sbr.rel (%p139) target = $region32
    $region31: #{discriminator_forward.12} parent=5 // pred_region
      %s143 = ssub.s32 %s9, 1
      %s144 = smul.u32 4, %s14
      %p145 = scmp.lt.s32.totalorder %s144, 15
      %s146 = scalar_select %p145, %s144, 15
      %s147 = smul.addr %s146, 8
      %s148 = scalar_lea.vmem %s0, %s147
      %p149 = pneg %p35
      %p150 = pneg %p32
      %p151 = pneg %p56
      %p152 = pneg %p53
      %p153 = pneg %p77
      %p154 = pneg %p74
      %p155 = pneg %p103
      %p156 = pneg %p100
      %s157 = smul.u32 4, %s14
      %p158 = scmp.lt.s32.totalorder %s157, 15
      %s159 = scalar_select %p158, %s157, 15
      %s160 = smul.addr %s159, 4
      %s161 = scalar_lea.vmem %s3, %s160
      %s162 = smul.u32 4, %s14
      %p163 = scmp.lt.s32.totalorder %s162, 15
      %s164 = scalar_select %p163, %s162, 15
      %s165 = smul.addr %s164, 8
      %s166 = scalar_lea.vmem %s0, %s165
      %s167 = smul.u32 4, %s14
      %s168 = smul.u32 4, %s14
      %p169 = scmp.lt.s32.totalorder %s168, 15
      %s170 = scalar_select %p169, %s168, 15
      %s171 = smul.addr %s170, 4
      %s172 = scalar_lea.vmem %s3, %s171
      %s173 = smul.u32 4, %s14
      %v174 = vld [vmem:[%s166] sm:$0xff]
      %v175 = vld [vmem:[%s166 + $0x8] sm:$0xff]
      %v176 = vld [vmem:[%s166 + $0x10] sm:$0xff]
      %v177 = vld [vmem:[%s166 + $0x18] sm:$0xff]
      %v178 = vld [vmem:[%s1] sm:$0xff]
      %180 = vset.pattern.permute.xlu0 0
      %181 = vperm.xlu0 %180, %v178
      %v182 = vpop.permute.xlu0 %181
      %v184 = vmul.f32 %v174, %v182
      %v185 = vmul.f32 %v175, %v182
      %v186 = vmul.f32 %v176, %v182
      %v187 = vmul.f32 %v177, %v182
      %v188 = vld [vmem:[%s2] sm:$0xff]
      %190 = vset.pattern.permute.xlu0 0
      %191 = vperm.xlu0 %190, %v188
      %v192 = vpop.permute.xlu0 %191
      %v194 = vadd.f32 %v184, %v192
      %v195 = vadd.f32 %v185, %v192
      %v196 = vadd.f32 %v186, %v192
      %v197 = vadd.f32 %v187, %v192
      %vm198 = vcmp.ge.f32.partialorder %v194, 0.0
      %vm199 = vcmp.ge.f32.partialorder %v195, 0.0
      %vm200 = vcmp.ge.f32.partialorder %v196, 0.0
      %vm201 = vcmp.ge.f32.partialorder %v197, 0.0
      %v202 = vmul.f32 %v194, 0.2
      %v203 = vmul.f32 %v195, 0.2
      %v204 = vmul.f32 %v196, 0.2
      %v205 = vmul.f32 %v197, 0.2
      %v206 = vsel %vm198, %v194, %v202
      %v207 = vsel %vm199, %v195, %v203
      %v208 = vsel %vm200, %v196, %v204
      %v209 = vsel %vm201, %v197, %v205
      %v210 = vpack.c.bf16 %v206, %v206
      %v211 = vpack.c.bf16 %v207, %v207
      %v212 = vpack.c.bf16 %v208, %v208
      %v213 = vpack.c.bf16 %v209, %v209
      %v218 = vunpack.c.l.b16 %v210
      %v219 = vunpack.c.l.b16 %v211
      %v220 = vunpack.c.l.b16 %v212
      %v221 = vunpack.c.l.b16 %v213
      %v222 = vpack.c.b16 %v219, %v218
      %v223 = vpack.c.b16 %v221, %v220
      %226 = vst [vmem:[%s172] sm:$0xff] %v222
      %227 = vst [vmem:[%s172 + $0x8] sm:$0xff] %v223
      %s228 = smul.u32 4, %s14
      %p229 = scmp.lt.s32.totalorder %s228, 15
      %s230 = scalar_select %p229, %s228, 15
      %s231 = smul.addr %s230, 4
      %s232 = scalar_lea.vmem %s3, %s231
      // Predicated region
      $region33: #{discriminator_forward.12} parent=31 // pred_check
        %p233 = pneg %p100
      $region34: #{discriminator_forward.12} parent=31 // pred_check_branch
        %235 = sbr.rel (%p233) target = $region36
      $region35: #{discriminator_forward.12} parent=31 // pred_region
        %s236 = smul.u32 4, %s14
      $region36: #{discriminator_forward.12} parent=31 // pred_fallthru
        _
    $region32: #{discriminator_forward.12} parent=5 // pred_fallthru
      _
    %p237 = scmp.le.s32.totalorder 2, %s9
    // Predicated region
    $region37: #{discriminator_forward.12} parent=5 // pred_check
      %p238 = pneg %p237
    $region38: #{discriminator_forward.12} parent=5 // pred_check_branch
      %240 = sbr.rel (%p238) target = $region40
    $region39: #{discriminator_forward.12} parent=5 // pred_region
      %s241 = ssub.s32 %s9, 2
      // Predicated region
      $region41: #{discriminator_forward.12} parent=39 // pred_check
        %p242 = pneg %p106
      $region42: #{discriminator_forward.12} parent=39 // pred_check_branch
        %244 = sbr.rel (%p242) target = $region44
      $region43: #{discriminator_forward.12} parent=39 // pred_region
        %s245 = smul.u32 4, %s15
        %p246 = scmp.lt.s32.totalorder %s245, 15
        %s247 = scalar_select %p246, %s245, 15
        %s248 = smul.addr %s247, 4
        %s249 = scalar_lea.vmem %s3, %s248
      $region44: #{discriminator_forward.12} parent=39 // pred_fallthru
        _
    $region40: #{discriminator_forward.12} parent=5 // pred_fallthru
      _
  $region6: #{discriminator_forward.12} parent=0 // loop_footer
    %s13 = sadd.s32 1, %s9
  $region7: #{discriminator_forward.12} parent=0 // loop_footer_branch
    %8 = sbr.rel target = $region3
  $region8: #{discriminator_forward.12} parent=0 // loop_exit
    _

// kernel: discriminator_forward.13
$region0: #{discriminator_forward.13}
  #allocation0 [shape = 'u32[]', space=smem, size = 0x4, offset = 0x4, fixed_abs, tag = 'smem constant byte address 0x4 - core index']
  #allocation1 [shape = 'u32[144,128]{1,0:T(1,128)}', space=vmem, size = 0x12000, scoped, tag = 'internal scratch']
  %s0 = inlined_call_operand.vmem [shape: bf16[16,128], index: 0, kind: input, shape index: {}]
  %s1 = inlined_call_operand.vmem [shape: bf16[128,512], index: 1, kind: input, shape index: {}]
  %s2 = inlined_call_operand.vmem [shape: f32[16,512], index: 2, kind: output, shape index: {0}]
  %s3 = inlined_call_operand.vmem [shape: f32[1,16,2], index: 3, kind: output, shape index: {1}]
  %4 = xla_tuple %s2, %s3
  %s5 = sld [smem:[#allocation0]]
  $region26: #{discriminator_forward.13} parent=0
    _
  %s7 = ssub.s32 1, %s5
  %s8 = scalar_select 0, %s7, %s5
  // Predicated region
  $region2: #{discriminator_forward.13} parent=0 // pred_check
    _
  $region3: #{discriminator_forward.13} parent=0 // pred_check_branch
    %10 = sbr.rel (0) target = $region5
  $region4: #{discriminator_forward.13} parent=0 // pred_region
    _
  $region5: #{discriminator_forward.13} parent=0 // pred_fallthru
    _
  // Predicated region
  $region6: #{discriminator_forward.13} parent=0 // pred_check
    _
  $region7: #{discriminator_forward.13} parent=0 // pred_check_branch
    %12 = sbr.rel (0) target = $region9
  $region8: #{discriminator_forward.13} parent=0 // pred_region
    _
  $region9: #{discriminator_forward.13} parent=0 // pred_fallthru
    _
  %v14 = vld [vmem:[%s0] sm:$0xf]
  %v15 = vld [vmem:[%s0 + $0x4] sm:$0xf]
  %v16 = vld [vmem:[%s1] sm:$0xff]
  %v17 = vld [vmem:[%s1 + $0x8] sm:$0xff]
  %v18 = vld [vmem:[%s1 + $0x10] sm:$0xff]
  %v19 = vld [vmem:[%s1 + $0x18] sm:$0xff]
  %v20 = vld [vmem:[%s1 + $0x20] sm:$0xff]
  %v21 = vld [vmem:[%s1 + $0x28] sm:$0xff]
  %v22 = vld [vmem:[%s1 + $0x30] sm:$0xff]
  %v23 = vld [vmem:[%s1 + $0x38] sm:$0xff]
  %v24 = vld [vmem:[%s1 + $0x40] sm:$0xff]
  %v25 = vld [vmem:[%s1 + $0x48] sm:$0xff]
  %v26 = vld [vmem:[%s1 + $0x50] sm:$0xff]
  %v27 = vld [vmem:[%s1 + $0x58] sm:$0xff]
  %v28 = vld [vmem:[%s1 + $0x60] sm:$0xff]
  %v29 = vld [vmem:[%s1 + $0x68] sm:$0xff]
  %v30 = vld [vmem:[%s1 + $0x70] sm:$0xff]
  %v31 = vld [vmem:[%s1 + $0x78] sm:$0xff]
  %v32 = vld [vmem:[%s1 + $0x80] sm:$0xff]
  %v33 = vld [vmem:[%s1 + $0x88] sm:$0xff]
  %v34 = vld [vmem:[%s1 + $0x90] sm:$0xff]
  %v35 = vld [vmem:[%s1 + $0x98] sm:$0xff]
  %v36 = vld [vmem:[%s1 + $0xa0] sm:$0xff]
  %v37 = vld [vmem:[%s1 + $0xa8] sm:$0xff]
  %v38 = vld [vmem:[%s1 + $0xb0] sm:$0xff]
  %v39 = vld [vmem:[%s1 + $0xb8] sm:$0xff]
  %v40 = vld [vmem:[%s1 + $0xc0] sm:$0xff]
  %v41 = vld [vmem:[%s1 + $0xc8] sm:$0xff]
  %v42 = vld [vmem:[%s1 + $0xd0] sm:$0xff]
  %v43 = vld [vmem:[%s1 + $0xd8] sm:$0xff]
  %v44 = vld [vmem:[%s1 + $0xe0] sm:$0xff]
  %v45 = vld [vmem:[%s1 + $0xe8] sm:$0xff]
  %v46 = vld [vmem:[%s1 + $0xf0] sm:$0xff]
  %v47 = vld [vmem:[%s1 + $0xf8] sm:$0xff]
  %v50 = vunpack.c.l.b16 %v14
  %v51 = vunpack.c.l.b16 %v15
  %v52 = vpack.c.b16 %v51, %v50
  %v86 = vunpack.c.l.b16 %v16
  %v87 = vunpack.c.h.b16 %v16
  %v88 = vunpack.c.l.b16 %v17
  %v89 = vunpack.c.h.b16 %v17
  %v90 = vunpack.c.l.b16 %v18
  %v91 = vunpack.c.h.b16 %v18
  %v92 = vunpack.c.l.b16 %v19
  %v93 = vunpack.c.h.b16 %v19
  %v94 = vunpack.c.l.b16 %v20
  %v95 = vunpack.c.h.b16 %v20
  %v96 = vunpack.c.l.b16 %v21
  %v97 = vunpack.c.h.b16 %v21
  %v98 = vunpack.c.l.b16 %v22
  %v99 = vunpack.c.h.b16 %v22
  %v100 = vunpack.c.l.b16 %v23
  %v101 = vunpack.c.h.b16 %v23
  %v102 = vunpack.c.l.b16 %v24
  %v103 = vunpack.c.h.b16 %v24
  %v104 = vunpack.c.l.b16 %v25
  %v105 = vunpack.c.h.b16 %v25
  %v106 = vunpack.c.l.b16 %v26
  %v107 = vunpack.c.h.b16 %v26
  %v108 = vunpack.c.l.b16 %v27
  %v109 = vunpack.c.h.b16 %v27
  %v110 = vunpack.c.l.b16 %v28
  %v111 = vunpack.c.h.b16 %v28
  %v112 = vunpack.c.l.b16 %v29
  %v113 = vunpack.c.h.b16 %v29
  %v114 = vunpack.c.l.b16 %v30
  %v115 = vunpack.c.h.b16 %v30
  %v116 = vunpack.c.l.b16 %v31
  %v117 = vunpack.c.h.b16 %v31
  %v118 = vunpack.c.l.b16 %v32
  %v119 = vunpack.c.h.b16 %v32
  %v120 = vunpack.c.l.b16 %v33
  %v121 = vunpack.c.h.b16 %v33
  %v122 = vunpack.c.l.b16 %v34
  %v123 = vunpack.c.h.b16 %v34
  %v124 = vunpack.c.l.b16 %v35
  %v125 = vunpack.c.h.b16 %v35
  %v126 = vunpack.c.l.b16 %v36
  %v127 = vunpack.c.h.b16 %v36
  %v128 = vunpack.c.l.b16 %v37
  %v129 = vunpack.c.h.b16 %v37
  %v130 = vunpack.c.l.b16 %v38
  %v131 = vunpack.c.h.b16 %v38
  %v132 = vunpack.c.l.b16 %v39
  %v133 = vunpack.c.h.b16 %v39
  %v134 = vunpack.c.l.b16 %v40
  %v135 = vunpack.c.h.b16 %v40
  %v136 = vunpack.c.l.b16 %v41
  %v137 = vunpack.c.h.b16 %v41
  %v138 = vunpack.c.l.b16 %v42
  %v139 = vunpack.c.h.b16 %v42
  %v140 = vunpack.c.l.b16 %v43
  %v141 = vunpack.c.h.b16 %v43
  %v142 = vunpack.c.l.b16 %v44
  %v143 = vunpack.c.h.b16 %v44
  %v144 = vunpack.c.l.b16 %v45
  %v145 = vunpack.c.h.b16 %v45
  %v146 = vunpack.c.l.b16 %v46
  %v147 = vunpack.c.h.b16 %v46
  %v148 = vunpack.c.l.b16 %v47
  %v149 = vunpack.c.h.b16 %v47
  %v150 = vpack.c.b16 %v90, %v86
  %v151 = vpack.c.b16 %v91, %v87
  %v152 = vpack.c.b16 %v92, %v88
  %v153 = vpack.c.b16 %v93, %v89
  %v154 = vpack.c.b16 %v98, %v94
  %v155 = vpack.c.b16 %v99, %v95
  %v156 = vpack.c.b16 %v100, %v96
  %v157 = vpack.c.b16 %v101, %v97
  %v158 = vpack.c.b16 %v106, %v102
  %v159 = vpack.c.b16 %v107, %v103
  %v160 = vpack.c.b16 %v108, %v104
  %v161 = vpack.c.b16 %v109, %v105
  %v162 = vpack.c.b16 %v114, %v110
  %v163 = vpack.c.b16 %v115, %v111
  %v164 = vpack.c.b16 %v116, %v112
  %v165 = vpack.c.b16 %v117, %v113
  %v166 = vpack.c.b16 %v122, %v118
  %v167 = vpack.c.b16 %v123, %v119
  %v168 = vpack.c.b16 %v124, %v120
  %v169 = vpack.c.b16 %v125, %v121
  %v170 = vpack.c.b16 %v130, %v126
  %v171 = vpack.c.b16 %v131, %v127
  %v172 = vpack.c.b16 %v132, %v128
  %v173 = vpack.c.b16 %v133, %v129
  %v174 = vpack.c.b16 %v138, %v134
  %v175 = vpack.c.b16 %v139, %v135
  %v176 = vpack.c.b16 %v140, %v136
  %v177 = vpack.c.b16 %v141, %v137
  %v178 = vpack.c.b16 %v146, %v142
  %v179 = vpack.c.b16 %v147, %v143
  %v180 = vpack.c.b16 %v148, %v144
  %v181 = vpack.c.b16 %v149, %v145
  %214 = vmatprep.subr.bf16.mxu0 %v151
  %215 = vmatpush1.bf16.msra.mxu0 %v150
  %216 = vmatprep.subr.bf16.mxu0 %v155
  %217 = vmatpush1.bf16.msra.mxu0 %v154
  %218 = vmatprep.subr.bf16.mxu0 %v159
  %219 = vmatpush1.bf16.msra.mxu0 %v158
  %220 = vmatprep.subr.bf16.mxu0 %v163
  %221 = vmatpush1.bf16.msra.mxu0 %v162
  %222 = vmatprep.subr.bf16.mxu0 %v167
  %223 = vmatpush1.bf16.msra.mxu0 %v166
  %224 = vmatprep.subr.bf16.mxu0 %v171
  %225 = vmatpush1.bf16.msra.mxu0 %v170
  %226 = vmatprep.subr.bf16.mxu0 %v175
  %227 = vmatpush1.bf16.msra.mxu0 %v174
  %228 = vmatprep.subr.bf16.mxu0 %v179
  %229 = vmatpush1.bf16.msra.mxu0 %v178
  %230 = vmatprep.subr.bf16.mxu0 0
  %231 = vmatpush1.bf16.msra.mxu0 0
  %232 = vmatprep.subr.bf16.mxu0 0
  %233 = vmatpush1.bf16.msra.mxu0 0
  %234 = vmatprep.subr.bf16.mxu0 0
  %235 = vmatpush1.bf16.msra.mxu0 0
  %236 = vmatprep.subr.bf16.mxu0 0
  %237 = vmatpush1.bf16.msra.mxu0 0
  %238 = vmatprep.subr.bf16.mxu0 0
  %239 = vmatpush1.bf16.msra.mxu0 0
  %240 = vmatprep.subr.bf16.mxu0 0
  %241 = vmatpush1.bf16.msra.mxu0 0
  %242 = vmatprep.subr.bf16.mxu0 0
  %243 = vmatpush1.bf16.msra.mxu0 0
  %244 = vmatprep.subr.bf16.mxu0 0
  %245 = vmatpush1.bf16.msra.mxu0 0
  %246 = vmatprep.mubr.bf16.mxu0 0
  %247 = vmatmul.mubr.bf16.gmra.mrb[0].mxu0 %v52
  %v248 = vpop.f32.mrb[0].mxu0
  %v249 = vadd.f32 0.0, %v248
  %v250 = vpop.f32.mrb[0].mxu0
  %v251 = vadd.f32 0.0, %v250
  %v252 = vpop.f32.mrb[0].mxu0
  %v253 = vadd.f32 0.0, %v252
  %v254 = vpop.f32.mrb[0].mxu0
  %v255 = vadd.f32 0.0, %v254
  %256 = vdwg.mxu0
  %257 = vmatprep.subr.bf16.mxu0 %v153
  %258 = vmatpush1.bf16.msra.mxu0 %v152
  %259 = vmatprep.subr.bf16.mxu0 %v157
  %260 = vmatpush1.bf16.msra.mxu0 %v156
  %261 = vmatprep.subr.bf16.mxu0 %v161
  %262 = vmatpush1.bf16.msra.mxu0 %v160
  %263 = vmatprep.subr.bf16.mxu0 %v165
  %264 = vmatpush1.bf16.msra.mxu0 %v164
  %265 = vmatprep.subr.bf16.mxu0 %v169
  %266 = vmatpush1.bf16.msra.mxu0 %v168
  %267 = vmatprep.subr.bf16.mxu0 %v173
  %268 = vmatpush1.bf16.msra.mxu0 %v172
  %269 = vmatprep.subr.bf16.mxu0 %v177
  %270 = vmatpush1.bf16.msra.mxu0 %v176
  %271 = vmatprep.subr.bf16.mxu0 %v181
  %272 = vmatpush1.bf16.msra.mxu0 %v180
  %273 = vmatprep.subr.bf16.mxu0 0
  %274 = vmatpush1.bf16.msra.mxu0 0
  %275 = vmatprep.subr.bf16.mxu0 0
  %276 = vmatpush1.bf16.msra.mxu0 0
  %277 = vmatprep.subr.bf16.mxu0 0
  %278 = vmatpush1.bf16.msra.mxu0 0
  %279 = vmatprep.subr.bf16.mxu0 0
  %280 = vmatpush1.bf16.msra.mxu0 0
  %281 = vmatprep.subr.bf16.mxu0 0
  %282 = vmatpush1.bf16.msra.mxu0 0
  %283 = vmatprep.subr.bf16.mxu0 0
  %284 = vmatpush1.bf16.msra.mxu0 0
  %285 = vmatprep.subr.bf16.mxu0 0
  %286 = vmatpush1.bf16.msra.mxu0 0
  %287 = vmatprep.subr.bf16.mxu0 0
  %288 = vmatpush1.bf16.msra.mxu0 0
  %289 = vmatprep.mubr.bf16.mxu0 0
  %290 = vmatmul.mubr.bf16.gmra.mrb[0].mxu0 %v52
  %v291 = vpop.f32.mrb[0].mxu0
  %v292 = vadd.f32 0.0, %v291
  %v293 = vpop.f32.mrb[0].mxu0
  %v294 = vadd.f32 0.0, %v293
  %v295 = vpop.f32.mrb[0].mxu0
  %v296 = vadd.f32 0.0, %v295
  %v297 = vpop.f32.mrb[0].mxu0
  %v298 = vadd.f32 0.0, %v297
  %299 = vdwg.mxu0
  %300 = vst [vmem:[%s2] sm:$0xff] %v249
  %301 = vst [vmem:[%s2 + $0x8] sm:$0xff] %v251
  %302 = vst [vmem:[%s2 + $0x10] sm:$0xff] %v292
  %303 = vst [vmem:[%s2 + $0x18] sm:$0xff] %v294
  %304 = vst [vmem:[%s2 + $0x20] sm:$0xff] %v253
  %305 = vst [vmem:[%s2 + $0x28] sm:$0xff] %v255
  %306 = vst [vmem:[%s2 + $0x30] sm:$0xff] %v296
  %307 = vst [vmem:[%s2 + $0x38] sm:$0xff] %v298
  %v308 = vadd.f32 %v249, %v251
  %v309 = vadd.f32 %v308, %v292
  %v310 = vadd.f32 %v309, %v294
  %311 = vadd.xlane.f32.xlu0 %v310
  %v312 = vpop.xlane.xlu0 %311
  %v313 = vadd.f32 %v253, %v255
  %v314 = vadd.f32 %v313, %v296
  %v315 = vadd.f32 %v314, %v298
  %316 = vadd.xlane.f32.xlu0 %v315
  %v317 = vpop.xlane.xlu0 %316
  %v318 = vmul.f32 %v249, %v249
  %v319 = vmul.f32 %v251, %v251
  %v320 = vmul.f32 %v292, %v292
  %v321 = vmul.f32 %v294, %v294
  %v322 = vmul.f32 %v253, %v253
  %v323 = vmul.f32 %v255, %v255
  %v324 = vmul.f32 %v296, %v296
  %v325 = vmul.f32 %v298, %v298
  %v326 = vadd.f32 %v318, %v319
  %v327 = vadd.f32 %v326, %v320
  %v328 = vadd.f32 %v327, %v321
  %329 = vadd.xlane.f32.xlu0 %v328
  %v330 = vpop.xlane.xlu0 %329
  %v331 = vadd.f32 %v322, %v323
  %v332 = vadd.f32 %v331, %v324
  %v333 = vadd.f32 %v332, %v325
  %334 = vadd.xlane.f32.xlu0 %v333
  %v335 = vpop.xlane.xlu0 %334
  %v336 = vlaneseq
  %v337 = vand.u32 %v336, 127
  %vm338 = vcmp.eq.s32.totalorder %v337, 0
  %v339 = vsel %vm338, %v312, %v330
  %v340 = vsel %vm338, %v317, %v335
  %vm341 = vcmask 15360
  %342 = vst.msk [vmem:[%s3] sm:$0xff] %vm341, %v339
  %343 = vst.msk [vmem:[%s3 + $0x8] sm:$0xff] %vm341, %v340
  // Predicated region
  $region10: #{discriminator_forward.13} parent=0 // pred_check
    _
  $region11: #{discriminator_forward.13} parent=0 // pred_check_branch
    %345 = sbr.rel (0) target = $region13
  $region12: #{discriminator_forward.13} parent=0 // pred_region
    _
  $region13: #{discriminator_forward.13} parent=0 // pred_fallthru
    _
  // Predicated region
  $region14: #{discriminator_forward.13} parent=0 // pred_check
    _
  $region15: #{discriminator_forward.13} parent=0 // pred_check_branch
    %347 = sbr.rel (0) target = $region17
  $region16: #{discriminator_forward.13} parent=0 // pred_region
    _
  $region17: #{discriminator_forward.13} parent=0 // pred_fallthru
    _
  // Predicated region
  $region18: #{discriminator_forward.13} parent=0 // pred_check
    _
  $region19: #{discriminator_forward.13} parent=0 // pred_check_branch
    %349 = sbr.rel (0) target = $region21
  $region20: #{discriminator_forward.13} parent=0 // pred_region
    _
  $region21: #{discriminator_forward.13} parent=0 // pred_fallthru
    _
  // Predicated region
  $region22: #{discriminator_forward.13} parent=0 // pred_check
    _
  $region23: #{discriminator_forward.13} parent=0 // pred_check_branch
    %351 = sbr.rel (0) target = $region25
  $region24: #{discriminator_forward.13} parent=0 // pred_region
    _
  $region25: #{discriminator_forward.13} parent=0 // pred_fallthru
    _

// kernel: discriminator_forward.14
$region0: #{discriminator_forward.14}
  #allocation0 [shape = 'u32[]', space=smem, size = 0x4, offset = 0x4, fixed_abs, tag = 'smem constant byte address 0x4 - core index']
  #allocation1 [shape = 'u32[144,128]{1,0:T(1,128)}', space=vmem, size = 0x12000, scoped, tag = 'internal scratch']
  %s0 = inlined_call_operand.vmem [shape: f32[16,512], index: 0, kind: input, shape index: {}]
  %s1 = inlined_call_operand.vmem [shape: f32[16,1], index: 1, kind: input, shape index: {}]
  %s2 = inlined_call_operand.vmem [shape: f32[16,1], index: 2, kind: input, shape index: {}]
  %s3 = inlined_call_operand.vmem [shape: bf16[16,512], index: 3, kind: output, shape index: {}]
  %s4 = sld [smem:[#allocation0]]
  $region22: #{discriminator_forward.14} parent=0
    _
  %s6 = ssub.s32 1, %s4
  %s7 = scalar_select 0, %s6, %s4
  // Predicated region
  $region2: #{discriminator_forward.14} parent=0 // pred_check
    _
  $region3: #{discriminator_forward.14} parent=0 // pred_check_branch
    %9 = sbr.rel (0) target = $region5
  $region4: #{discriminator_forward.14} parent=0 // pred_region
    _
  $region5: #{discriminator_forward.14} parent=0 // pred_fallthru
    _
  // Predicated region
  $region6: #{discriminator_forward.14} parent=0 // pred_check
    _
  $region7: #{discriminator_forward.14} parent=0 // pred_check_branch
    %11 = sbr.rel (0) target = $region9
  $region8: #{discriminator_forward.14} parent=0 // pred_region
    _
  $region9: #{discriminator_forward.14} parent=0 // pred_fallthru
    _
  // Predicated region
  $region10: #{discriminator_forward.14} parent=0 // pred_check
    _
  $region11: #{discriminator_forward.14} parent=0 // pred_check_branch
    %13 = sbr.rel (0) target = $region13
  $region12: #{discriminator_forward.14} parent=0 // pred_region
    _
  $region13: #{discriminator_forward.14} parent=0 // pred_fallthru
    _
  %v14 = vld [vmem:[%s0] sm:$0xff]
  %v15 = vld [vmem:[%s0 + $0x8] sm:$0xff]
  %v16 = vld [vmem:[%s0 + $0x10] sm:$0xff]
  %v17 = vld [vmem:[%s0 + $0x18] sm:$0xff]
  %v18 = vld [vmem:[%s0 + $0x20] sm:$0xff]
  %v19 = vld [vmem:[%s0 + $0x28] sm:$0xff]
  %v20 = vld [vmem:[%s0 + $0x30] sm:$0xff]
  %v21 = vld [vmem:[%s0 + $0x38] sm:$0xff]
  %v22 = vld [vmem:[%s1] sm:$0xff]
  %v23 = vld [vmem:[%s1 + $0x8] sm:$0xff]
  %25 = vset.pattern.permute.xlu0 0
  %26 = vperm.xlu0 %25, %v22
  %v27 = vpop.permute.xlu0 %26
  %30 = vset.pattern.permute.xlu0 0
  %31 = vperm.xlu0 %30, %v23
  %v32 = vpop.permute.xlu0 %31
  %v34 = vmul.f32 %v14, %v27
  %v35 = vmul.f32 %v15, %v27
  %v36 = vmul.f32 %v16, %v27
  %v37 = vmul.f32 %v17, %v27
  %v38 = vmul.f32 %v18, %v32
  %v39 = vmul.f32 %v19, %v32
  %v40 = vmul.f32 %v20, %v32
  %v41 = vmul.f32 %v21, %v32
  %v42 = vld [vmem:[%s2] sm:$0xff]
  %v43 = vld [vmem:[%s2 + $0x8] sm:$0xff]
  %45 = vset.pattern.permute.xlu0 0
  %46 = vperm.xlu0 %45, %v42
  %v47 = vpop.permute.xlu0 %46
  %50 = vset.pattern.permute.xlu0 0
  %51 = vperm.xlu0 %50, %v43
  %v52 = vpop.permute.xlu0 %51
  %v54 = vadd.f32 %v34, %v47
  %v55 = vadd.f32 %v35, %v47
  %v56 = vadd.f32 %v36, %v47
  %v57 = vadd.f32 %v37, %v47
  %v58 = vadd.f32 %v38, %v52
  %v59 = vadd.f32 %v39, %v52
  %v60 = vadd.f32 %v40, %v52
  %v61 = vadd.f32 %v41, %v52
  %vm62 = vcmp.ge.f32.partialorder %v54, 0.0
  %vm63 = vcmp.ge.f32.partialorder %v55, 0.0
  %vm64 = vcmp.ge.f32.partialorder %v56, 0.0
  %vm65 = vcmp.ge.f32.partialorder %v57, 0.0
  %vm66 = vcmp.ge.f32.partialorder %v58, 0.0
  %vm67 = vcmp.ge.f32.partialorder %v59, 0.0
  %vm68 = vcmp.ge.f32.partialorder %v60, 0.0
  %vm69 = vcmp.ge.f32.partialorder %v61, 0.0
  %v70 = vmul.f32 %v54, 0.2
  %v71 = vmul.f32 %v55, 0.2
  %v72 = vmul.f32 %v56, 0.2
  %v73 = vmul.f32 %v57, 0.2
  %v74 = vmul.f32 %v58, 0.2
  %v75 = vmul.f32 %v59, 0.2
  %v76 = vmul.f32 %v60, 0.2
  %v77 = vmul.f32 %v61, 0.2
  %v78 = vsel %vm62, %v54, %v70
  %v79 = vsel %vm63, %v55, %v71
  %v80 = vsel %vm64, %v56, %v72
  %v81 = vsel %vm65, %v57, %v73
  %v82 = vsel %vm66, %v58, %v74
  %v83 = vsel %vm67, %v59, %v75
  %v84 = vsel %vm68, %v60, %v76
  %v85 = vsel %vm69, %v61, %v77
  %v86 = vpack.c.bf16 %v82, %v78
  %v87 = vpack.c.bf16 %v83, %v79
  %v88 = vpack.c.bf16 %v84, %v80
  %v89 = vpack.c.bf16 %v85, %v81
  %v94 = vunpack.c.l.b16 %v86
  %v95 = vunpack.c.l.b16 %v87
  %v96 = vunpack.c.l.b16 %v88
  %v97 = vunpack.c.l.b16 %v89
  %v98 = vunpack.c.h.b16 %v86
  %v99 = vunpack.c.h.b16 %v87
  %v100 = vunpack.c.h.b16 %v88
  %v101 = vunpack.c.h.b16 %v89
  %v102 = vpack.c.b16 %v95, %v94
  %v103 = vpack.c.b16 %v97, %v96
  %v104 = vpack.c.b16 %v99, %v98
  %v105 = vpack.c.b16 %v101, %v100
  %110 = vst [vmem:[%s3] sm:$0xff] %v102
  %111 = vst [vmem:[%s3 + $0x8] sm:$0xff] %v103
  %112 = vst [vmem:[%s3 + $0x10] sm:$0xff] %v104
  %113 = vst [vmem:[%s3 + $0x18] sm:$0xff] %v105
  // Predicated region
  $region14: #{discriminator_forward.14} parent=0 // pred_check
    _
  $region15: #{discriminator_forward.14} parent=0 // pred_check_branch
    %115 = sbr.rel (0) target = $region17
  $region16: #{discriminator_forward.14} parent=0 // pred_region
    _
  $region17: #{discriminator_forward.14} parent=0 // pred_fallthru
    _
  // Predicated region
  $region18: #{discriminator_forward.14} parent=0 // pred_check
    _
  $region19: #{discriminator_forward.14} parent=0 // pred_check_branch
    %117 = sbr.rel (0) target = $region21
  $region20: #{discriminator_forward.14} parent=0 // pred_region
    _
  $region21: #{discriminator_forward.14} parent=0 // pred_fallthru
    _

// kernel: discriminator_forward.15
$region0: #{discriminator_forward.15}
  #allocation0 [shape = 'u32[]', space=smem, size = 0x4, offset = 0x4, fixed_abs, tag = 'smem constant byte address 0x4 - core index']
  #allocation1 [shape = 'u32[144,128]{1,0:T(1,128)}', space=vmem, size = 0x12000, scoped, tag = 'internal scratch']
  %s0 = inlined_call_operand.vmem [shape: bf16[32,256], index: 0, kind: input, shape index: {}]
  %s1 = inlined_call_operand.vmem [shape: bf16[256,128], index: 1, kind: input, shape index: {}]
  %s2 = inlined_call_operand.vmem [shape: f32[32,128], index: 2, kind: output, shape index: {0}]
  %s3 = inlined_call_operand.vmem [shape: f32[1,32,2], index: 3, kind: output, shape index: {1}]
  %4 = xla_tuple %s2, %s3
  %s5 = sld [smem:[#allocation0]]
  $region26: #{discriminator_forward.15} parent=0
    _
  %s7 = ssub.s32 1, %s5
  %s8 = scalar_select 0, %s7, %s5
  // Predicated region
  $region2: #{discriminator_forward.15} parent=0 // pred_check
    _
  $region3: #{discriminator_forward.15} parent=0 // pred_check_branch
    %10 = sbr.rel (0) target = $region5
  $region4: #{discriminator_forward.15} parent=0 // pred_region
    _
  $region5: #{discriminator_forward.15} parent=0 // pred_fallthru
    _
  // Predicated region
  $region6: #{discriminator_forward.15} parent=0 // pred_check
    _
  $region7: #{discriminator_forward.15} parent=0 // pred_check_branch
    %12 = sbr.rel (0) target = $region9
  $region8: #{discriminator_forward.15} parent=0 // pred_region
    _
  $region9: #{discriminator_forward.15} parent=0 // pred_fallthru
    _
  %v14 = vld [vmem:[%s0] sm:$0xff]
  %v15 = vld [vmem:[%s0 + $0x8] sm:$0xff]
  %v16 = vld [vmem:[%s0 + $0x10] sm:$0xff]
  %v17 = vld [vmem:[%s0 + $0x18] sm:$0xff]
  %v18 = vld [vmem:[%s1] sm:$0xf]
  %v19 = vld [vmem:[%s1 + $0x4] sm:$0xf]
  %v20 = vld [vmem:[%s1 + $0x8] sm:$0xf]
  %v21 = vld [vmem:[%s1 + $0xc] sm:$0xf]
  %v22 = vld [vmem:[%s1 + $0x10] sm:$0xf]
  %v23 = vld [vmem:[%s1 + $0x14] sm:$0xf]
  %v24 = vld [vmem:[%s1 + $0x18] sm:$0xf]
  %v25 = vld [vmem:[%s1 + $0x1c] sm:$0xf]
  %v26 = vld [vmem:[%s1 + $0x20] sm:$0xf]
  %v27 = vld [vmem:[%s1 + $0x24] sm:$0xf]
  %v28 = vld [vmem:[%s1 + $0x28] sm:$0xf]
  %v29 = vld [vmem:[%s1 + $0x2c] sm:$0xf]
  %v30 = vld [vmem:[%s1 + $0x30] sm:$0xf]
  %v31 = vld [vmem:[%s1 + $0x34] sm:$0xf]
  %v32 = vld [vmem:[%s1 + $0x38] sm:$0xf]
  %v33 = vld [vmem:[%s1 + $0x3c] sm:$0xf]
  %v34 = vld [vmem:[%s1 + $0x40] sm:$0xf]
  %v35 = vld [vmem:[%s1 + $0x44] sm:$0xf]
  %v36 = vld [vmem:[%s1 + $0x48] sm:$0xf]
  %v37 = vld [vmem:[%s1 + $0x4c] sm:$0xf]
  %v38 = vld [vmem:[%s1 + $0x50] sm:$0xf]
  %v39 = vld [vmem:[%s1 + $0x54] sm:$0xf]
  %v40 = vld [vmem:[%s1 + $0x58] sm:$0xf]
  %v41 = vld [vmem:[%s1 + $0x5c] sm:$0xf]
  %v42 = vld [vmem:[%s1 + $0x60] sm:$0xf]
  %v43 = vld [vmem:[%s1 + $0x64] sm:$0xf]
  %v44 = vld [vmem:[%s1 + $0x68] sm:$0xf]
  %v45 = vld [vmem:[%s1 + $0x6c] sm:$0xf]
  %v46 = vld [vmem:[%s1 + $0x70] sm:$0xf]
  %v47 = vld [vmem:[%s1 + $0x74] sm:$0xf]
  %v48 = vld [vmem:[%s1 + $0x78] sm:$0xf]
  %v49 = vld [vmem:[%s1 + $0x7c] sm:$0xf]
  %v54 = vunpack.c.l.b16 %v14
  %v55 = vunpack.c.h.b16 %v14
  %v56 = vunpack.c.l.b16 %v15
  %v57 = vunpack.c.h.b16 %v15
  %v58 = vunpack.c.l.b16 %v16
  %v59 = vunpack.c.h.b16 %v16
  %v60 = vunpack.c.l.b16 %v17
  %v61 = vunpack.c.h.b16 %v17
  %v62 = vpack.c.b16 %v56, %v54
  %v63 = vpack.c.b16 %v57, %v55
  %v64 = vpack.c.b16 %v60, %v58
  %v65 = vpack.c.b16 %v61, %v59
  %v102 = vunpack.c.l.b16 %v18
  %v103 = vunpack.c.l.b16 %v19
  %v104 = vunpack.c.l.b16 %v20
  %v105 = vunpack.c.l.b16 %v21
  %v106 = vunpack.c.l.b16 %v22
  %v107 = vunpack.c.l.b16 %v23
  %v108 = vunpack.c.l.b16 %v24
  %v109 = vunpack.c.l.b16 %v25
  %v110 = vunpack.c.l.b16 %v26
  %v111 = vunpack.c.l.b16 %v27
  %v112 = vunpack.c.l.b16 %v28
  %v113 = vunpack.c.l.b16 %v29
  %v114 = vunpack.c.l.b16 %v30
  %v115 = vunpack.c.l.b16 %v31
  %v116 = vunpack.c.l.b16 %v32
  %v117 = vunpack.c.l.b16 %v33
  %v118 = vunpack.c.l.b16 %v34
  %v119 = vunpack.c.l.b16 %v35
  %v120 = vunpack.c.l.b16 %v36
  %v121 = vunpack.c.l.b16 %v37
  %v122 = vunpack.c.l.b16 %v38
  %v123 = vunpack.c.l.b16 %v39
  %v124 = vunpack.c.l.b16 %v40
  %v125 = vunpack.c.l.b16 %v41
  %v126 = vunpack.c.l.b16 %v42
  %v127 = vunpack.c.l.b16 %v43
  %v128 = vunpack.c.l.b16 %v44
  %v129 = vunpack.c.l.b16 %v45
  %v130 = vunpack.c.l.b16 %v46
  %v131 = vunpack.c.l.b16 %v47
  %v132 = vunpack.c.l.b16 %v48
  %v133 = vunpack.c.l.b16 %v49
  %v134 = vpack.c.b16 %v103, %v102
  %v135 = vpack.c.b16 %v105, %v104
  %v136 = vpack.c.b16 %v107, %v106
  %v137 = vpack.c.b16 %v109, %v108
  %v138 = vpack.c.b16 %v111, %v110
  %v139 = vpack.c.b16 %v113, %v112
  %v140 = vpack.c.b16 %v115, %v114
  %v141 = vpack.c.b16 %v117, %v116
  %v142 = vpack.c.b16 %v119, %v118
  %v143 = vpack.c.b16 %v121, %v120
  %v144 = vpack.c.b16 %v123, %v122
  %v145 = vpack.c.b16 %v125, %v124
  %v146 = vpack.c.b16 %v127, %v126
  %v147 = vpack.c.b16 %v129, %v128
  %v148 = vpack.c.b16 %v131, %v130
  %v149 = vpack.c.b16 %v133, %v132
  %166 = vmatprep.subr.bf16.mxu0 0
  %167 = vmatpush1.bf16.msra.mxu0 %v134
  %168 = vmatprep.subr.bf16.mxu0 0
  %169 = vmatpush1.bf16.msra.mxu0 %v135
  %170 = vmatprep.subr.bf16.mxu0 0
  %171 = vmatpush1.bf16.msra.mxu0 %v136
  %172 = vmatprep.subr.bf16.mxu0 0
  %173 = vmatpush1.bf16.msra.mxu0 %v137
  %174 = vmatprep.subr.bf16.mxu0 0
  %175 = vmatpush1.bf16.msra.mxu0 %v138
  %176 = vmatprep.subr.bf16.mxu0 0
  %177 = vmatpush1.bf16.msra.mxu0 %v139
  %178 = vmatprep.subr.bf16.mxu0 0
  %179 = vmatpush1.bf16.msra.mxu0 %v140
  %180 = vmatprep.subr.bf16.mxu0 0
  %181 = vmatpush1.bf16.msra.mxu0 %v141
  %182 = vmatprep.subr.bf16.mxu0 0
  %183 = vmatpush1.bf16.msra.mxu0 %v142
  %184 = vmatprep.subr.bf16.mxu0 0
  %185 = vmatpush1.bf16.msra.mxu0 %v143
  %186 = vmatprep.subr.bf16.mxu0 0
  %187 = vmatpush1.bf16.msra.mxu0 %v144
  %188 = vmatprep.subr.bf16.mxu0 0
  %189 = vmatpush1.bf16.msra.mxu0 %v145
  %190 = vmatprep.subr.bf16.mxu0 0
  %191 = vmatpush1.bf16.msra.mxu0 %v146
  %192 = vmatprep.subr.bf16.mxu0 0
  %193 = vmatpush1.bf16.msra.mxu0 %v147
  %194 = vmatprep.subr.bf16.mxu0 0
  %195 = vmatpush1.bf16.msra.mxu0 %v148
  %196 = vmatprep.subr.bf16.mxu0 0
  %197 = vmatpush1.bf16.msra.mxu0 %v149
  %198 = vmatprep.mubr.bf16.mxu0 %v63
  %199 = vmatmul.mubr.bf16.gmra.mrb[0].mxu0 %v62
  %v200 = vpop.f32.mrb[0].mxu0
  %v201 = vadd.f32 0.0, %v200
  %v202 = vpop.f32.mrb[0].mxu0
  %v203 = vpop.f32.mrb[0].mxu0
  %v204 = vadd.f32 0.0, %v203
  %v205 = vpop.f32.mrb[0].mxu0
  %206 = vmatprep.mubr.bf16.mxu0 %v65
  %207 = vmatmul.mubr.bf16.gmra.mrb[0].mxu0 %v64
  %v208 = vpop.f32.mrb[0].mxu0
  %v209 = vadd.f32 0.0, %v208
  %v210 = vpop.f32.mrb[0].mxu0
  %v211 = vpop.f32.mrb[0].mxu0
  %v212 = vadd.f32 0.0, %v211
  %v213 = vpop.f32.mrb[0].mxu0
  %214 = vdwg.mxu0
  %215 = vst [vmem:[%s2] sm:$0xff] %v201
  %216 = vst [vmem:[%s2 + $0x8] sm:$0xff] %v204
  %217 = vst [vmem:[%s2 + $0x10] sm:$0xff] %v209
  %218 = vst [vmem:[%s2 + $0x18] sm:$0xff] %v212
  %219 = vadd.xlane.f32.xlu0 %v201
  %v220 = vpop.xlane.xlu0 %219
  %221 = vadd.xlane.f32.xlu0 %v204
  %v222 = vpop.xlane.xlu0 %221
  %223 = vadd.xlane.f32.xlu0 %v209
  %v224 = vpop.xlane.xlu0 %223
  %225 = vadd.xlane.f32.xlu0 %v212
  %v226 = vpop.xlane.xlu0 %225
  %v227 = vmul.f32 %v201, %v201
  %v228 = vmul.f32 %v204, %v204
  %v229 = vmul.f32 %v209, %v209
  %v230 = vmul.f32 %v212, %v212
  %231 = vadd.xlane.f32.xlu0 %v227
  %v232 = vpop.xlane.xlu0 %231
  %233 = vadd.xlane.f32.xlu0 %v228
  %v234 = vpop.xlane.xlu0 %233
  %235 = vadd.xlane.f32.xlu0 %v229
  %v236 = vpop.xlane.xlu0 %235
  %237 = vadd.xlane.f32.xlu0 %v230
  %v238 = vpop.xlane.xlu0 %237
  %v239 = vlaneseq
  %v240 = vand.u32 %v239, 127
  %vm241 = vcmp.eq.s32.totalorder %v240, 0
  %v242 = vsel %vm241, %v220, %v232
  %v243 = vsel %vm241, %v222, %v234
  %v244 = vsel %vm241, %v224, %v236
  %v245 = vsel %vm241, %v226, %v238
  %vm246 = vcmask 15360
  %247 = vst.msk [vmem:[%s3] sm:$0xff] %vm246, %v242
  %248 = vst.msk [vmem:[%s3 + $0x8] sm:$0xff] %vm246, %v243
  %249 = vst.msk [vmem:[%s3 + $0x10] sm:$0xff] %vm246, %v244
  %250 = vst.msk [vmem:[%s3 + $0x18] sm:$0xff] %vm246, %v245
  // Predicated region
  $region10: #{discriminator_forward.15} parent=0 // pred_check
    _
  $region11: #{discriminator_forward.15} parent=0 // pred_check_branch
    %252 = sbr.rel (0) target = $region13
  $region12: #{discriminator_forward.15} parent=0 // pred_region
    _
  $region13: #{discriminator_forward.15} parent=0 // pred_fallthru
    _
  // Predicated region
  $region14: #{discriminator_forward.15} parent=0 // pred_check
    _
  $region15: #{discriminator_forward.15} parent=0 // pred_check_branch
    %254 = sbr.rel (0) target = $region17
  $region16: #{discriminator_forward.15} parent=0 // pred_region
    _
  $region17: #{discriminator_forward.15} parent=0 // pred_fallthru
    _
  // Predicated region
  $region18: #{discriminator_forward.15} parent=0 // pred_check
    _
  $region19: #{discriminator_forward.15} parent=0 // pred_check_branch
    %256 = sbr.rel (0) target = $region21
  $region20: #{discriminator_forward.15} parent=0 // pred_region
    _
  $region21: #{discriminator_forward.15} parent=0 // pred_fallthru
    _
  // Predicated region
  $region22: #{discriminator_forward.15} parent=0 // pred_check
    _
  $region23: #{discriminator_forward.15} parent=0 // pred_check_branch
    %258 = sbr.rel (0) target = $region25
  $region24: #{discriminator_forward.15} parent=0 // pred_region
    _
  $region25: #{discriminator_forward.15} parent=0 // pred_fallthru
    _

// kernel: discriminator_forward.16
$region0: #{discriminator_forward.16}
  #allocation0 [shape = 'u32[]', space=smem, size = 0x4, offset = 0x4, fixed_abs, tag = 'smem constant byte address 0x4 - core index']
  #allocation1 [shape = 'u32[144,128]{1,0:T(1,128)}', space=vmem, size = 0x12000, scoped, tag = 'internal scratch']
  %s0 = inlined_call_operand.vmem [shape: f32[32,128], index: 0, kind: input, shape index: {}]
  %s1 = inlined_call_operand.vmem [shape: f32[32,1], index: 1, kind: input, shape index: {}]
  %s2 = inlined_call_operand.vmem [shape: f32[32,1], index: 2, kind: input, shape index: {}]
  %s3 = inlined_call_operand.vmem [shape: bf16[32,128], index: 3, kind: output, shape index: {}]
  %s4 = sld [smem:[#allocation0]]
  $region22: #{discriminator_forward.16} parent=0
    _
  %s6 = ssub.s32 1, %s4
  %s7 = scalar_select 0, %s6, %s4
  // Predicated region
  $region2: #{discriminator_forward.16} parent=0 // pred_check
    _
  $region3: #{discriminator_forward.16} parent=0 // pred_check_branch
    %9 = sbr.rel (0) target = $region5
  $region4: #{discriminator_forward.16} parent=0 // pred_region
    _
  $region5: #{discriminator_forward.16} parent=0 // pred_fallthru
    _
  // Predicated region
  $region6: #{discriminator_forward.16} parent=0 // pred_check
    _
  $region7: #{discriminator_forward.16} parent=0 // pred_check_branch
    %11 = sbr.rel (0) target = $region9
  $region8: #{discriminator_forward.16} parent=0 // pred_region
    _
  $region9: #{discriminator_forward.16} parent=0 // pred_fallthru
    _
  // Predicated region
  $region10: #{discriminator_forward.16} parent=0 // pred_check
    _
  $region11: #{discriminator_forward.16} parent=0 // pred_check_branch
    %13 = sbr.rel (0) target = $region13
  $region12: #{discriminator_forward.16} parent=0 // pred_region
    _
  $region13: #{discriminator_forward.16} parent=0 // pred_fallthru
    _
  %v14 = vld [vmem:[%s0] sm:$0xff]
  %v15 = vld [vmem:[%s0 + $0x8] sm:$0xff]
  %v16 = vld [vmem:[%s0 + $0x10] sm:$0xff]
  %v17 = vld [vmem:[%s0 + $0x18] sm:$0xff]
  %v18 = vld [vmem:[%s1] sm:$0xff]
  %v19 = vld [vmem:[%s1 + $0x8] sm:$0xff]
  %v20 = vld [vmem:[%s1 + $0x10] sm:$0xff]
  %v21 = vld [vmem:[%s1 + $0x18] sm:$0xff]
  %23 = vset.pattern.permute.xlu0 0
  %24 = vperm.xlu0 %23, %v18
  %v25 = vpop.permute.xlu0 %24
  %28 = vset.pattern.permute.xlu0 0
  %29 = vperm.xlu0 %28, %v19
  %v30 = vpop.permute.xlu0 %29
  %33 = vset.pattern.permute.xlu0 0
  %34 = vperm.xlu0 %33, %v20
  %v35 = vpop.permute.xlu0 %34
  %38 = vset.pattern.permute.xlu0 0
  %39 = vperm.xlu0 %38, %v21
  %v40 = vpop.permute.xlu0 %39
  %v42 = vmul.f32 %v14, %v25
  %v43 = vmul.f32 %v15, %v30
  %v44 = vmul.f32 %v16, %v35
  %v45 = vmul.f32 %v17, %v40
  %v46 = vld [vmem:[%s2] sm:$0xff]
  %v47 = vld [vmem:[%s2 + $0x8] sm:$0xff]
  %v48 = vld [vmem:[%s2 + $0x10] sm:$0xff]
  %v49 = vld [vmem:[%s2 + $0x18] sm:$0xff]
  %51 = vset.pattern.permute.xlu0 0
  %52 = vperm.xlu0 %51, %v46
  %v53 = vpop.permute.xlu0 %52
  %56 = vset.pattern.permute.xlu0 0
  %57 = vperm.xlu0 %56, %v47
  %v58 = vpop.permute.xlu0 %57
  %61 = vset.pattern.permute.xlu0 0
  %62 = vperm.xlu0 %61, %v48
  %v63 = vpop.permute.xlu0 %62
  %66 = vset.pattern.permute.xlu0 0
  %67 = vperm.xlu0 %66, %v49
  %v68 = vpop.permute.xlu0 %67
  %v70 = vadd.f32 %v42, %v53
  %v71 = vadd.f32 %v43, %v58
  %v72 = vadd.f32 %v44, %v63
  %v73 = vadd.f32 %v45, %v68
  %vm74 = vcmp.ge.f32.partialorder %v70, 0.0
  %vm75 = vcmp.ge.f32.partialorder %v71, 0.0
  %vm76 = vcmp.ge.f32.partialorder %v72, 0.0
  %vm77 = vcmp.ge.f32.partialorder %v73, 0.0
  %v78 = vmul.f32 %v70, 0.2
  %v79 = vmul.f32 %v71, 0.2
  %v80 = vmul.f32 %v72, 0.2
  %v81 = vmul.f32 %v73, 0.2
  %v82 = vsel %vm74, %v70, %v78
  %v83 = vsel %vm75, %v71, %v79
  %v84 = vsel %vm76, %v72, %v80
  %v85 = vsel %vm77, %v73, %v81
  %v86 = vpack.c.bf16 %v83, %v82
  %v87 = vpack.c.bf16 %v85, %v84
  %v90 = vunpack.c.l.b16 %v86
  %v91 = vunpack.c.h.b16 %v86
  %v92 = vunpack.c.l.b16 %v87
  %v93 = vunpack.c.h.b16 %v87
  %v94 = vpack.c.b16 %v90, %v90
  %v95 = vpack.c.b16 %v91, %v91
  %v96 = vpack.c.b16 %v92, %v92
  %v97 = vpack.c.b16 %v93, %v93
  %102 = vst [vmem:[%s3] sm:$0xf] %v94
  %103 = vst [vmem:[%s3 + $0x4] sm:$0xf] %v95
  %104 = vst [vmem:[%s3 + $0x8] sm:$0xf] %v96
  %105 = vst [vmem:[%s3 + $0xc] sm:$0xf] %v97
  // Predicated region
  $region14: #{discriminator_forward.16} parent=0 // pred_check
    _
  $region15: #{discriminator_forward.16} parent=0 // pred_check_branch
    %107 = sbr.rel (0) target = $region17
  $region16: #{discriminator_forward.16} parent=0 // pred_region
    _
  $region17: #{discriminator_forward.16} parent=0 // pred_fallthru
    _
  // Predicated region
  $region18: #{discriminator_forward.16} parent=0 // pred_check
    _
  $region19: #{discriminator_forward.16} parent=0 // pred_check_branch
    %109 = sbr.rel (0) target = $region21
  $region20: #{discriminator_forward.16} parent=0 // pred_region
    _
  $region21: #{discriminator_forward.16} parent=0 // pred_fallthru
    _

// kernel: discriminator_forward.18
$region0: #{discriminator_forward.18}
  #allocation0 [shape = 'u32[]', space=smem, size = 0x4, offset = 0x4, fixed_abs, tag = 'smem constant byte address 0x4 - core index']
  #allocation1 [shape = 'u32[144,128]{1,0:T(1,128)}', space=vmem, size = 0x12000, scoped, tag = 'internal scratch']
  %s0 = inlined_call_operand.vmem [shape: f32[64,128], index: 0, kind: input, shape index: {}]
  %s1 = inlined_call_operand.vmem [shape: f32[64,1], index: 1, kind: input, shape index: {}]
  %s2 = inlined_call_operand.vmem [shape: f32[64,1], index: 2, kind: input, shape index: {}]
  %s3 = inlined_call_operand.vmem [shape: bf16[64,128], index: 3, kind: output, shape index: {}]
  %s4 = sld [smem:[#allocation0]]
  $region22: #{discriminator_forward.18} parent=0
    _
  %s6 = ssub.s32 1, %s4
  %s7 = scalar_select 0, %s6, %s4
  // Predicated region
  $region2: #{discriminator_forward.18} parent=0 // pred_check
    _
  $region3: #{discriminator_forward.18} parent=0 // pred_check_branch
    %9 = sbr.rel (0) target = $region5
  $region4: #{discriminator_forward.18} parent=0 // pred_region
    _
  $region5: #{discriminator_forward.18} parent=0 // pred_fallthru
    _
  // Predicated region
  $region6: #{discriminator_forward.18} parent=0 // pred_check
    _
  $region7: #{discriminator_forward.18} parent=0 // pred_check_branch
    %11 = sbr.rel (0) target = $region9
  $region8: #{discriminator_forward.18} parent=0 // pred_region
    _
  $region9: #{discriminator_forward.18} parent=0 // pred_fallthru
    _
  // Predicated region
  $region10: #{discriminator_forward.18} parent=0 // pred_check
    _
  $region11: #{discriminator_forward.18} parent=0 // pred_check_branch
    %13 = sbr.rel (0) target = $region13
  $region12: #{discriminator_forward.18} parent=0 // pred_region
    _
  $region13: #{discriminator_forward.18} parent=0 // pred_fallthru
    _
  %v14 = vld [vmem:[%s0] sm:$0xff]
  %v15 = vld [vmem:[%s0 + $0x8] sm:$0xff]
  %v16 = vld [vmem:[%s0 + $0x10] sm:$0xff]
  %v17 = vld [vmem:[%s0 + $0x18] sm:$0xff]
  %v18 = vld [vmem:[%s0 + $0x20] sm:$0xff]
  %v19 = vld [vmem:[%s0 + $0x28] sm:$0xff]
  %v20 = vld [vmem:[%s0 + $0x30] sm:$0xff]
  %v21 = vld [vmem:[%s0 + $0x38] sm:$0xff]
  %v22 = vld [vmem:[%s1] sm:$0xff]
  %v23 = vld [vmem:[%s1 + $0x8] sm:$0xff]
  %v24 = vld [vmem:[%s1 + $0x10] sm:$0xff]
  %v25 = vld [vmem:[%s1 + $0x18] sm:$0xff]
  %v26 = vld [vmem:[%s1 + $0x20] sm:$0xff]
  %v27 = vld [vmem:[%s1 + $0x28] sm:$0xff]
  %v28 = vld [vmem:[%s1 + $0x30] sm:$0xff]
  %v29 = vld [vmem:[%s1 + $0x38] sm:$0xff]
  %31 = vset.pattern.permute.xlu0 0
  %32 = vperm.xlu0 %31, %v22
  %v33 = vpop.permute.xlu0 %32
  %36 = vset.pattern.permute.xlu0 0
  %37 = vperm.xlu0 %36, %v23
  %v38 = vpop.permute.xlu0 %37
  %41 = vset.pattern.permute.xlu0 0
  %42 = vperm.xlu0 %41, %v24
  %v43 = vpop.permute.xlu0 %42
  %46 = vset.pattern.permute.xlu0 0
  %47 = vperm.xlu0 %46, %v25
  %v48 = vpop.permute.xlu0 %47
  %51 = vset.pattern.permute.xlu0 0
  %52 = vperm.xlu0 %51, %v26
  %v53 = vpop.permute.xlu0 %52
  %56 = vset.pattern.permute.xlu0 0
  %57 = vperm.xlu0 %56, %v27
  %v58 = vpop.permute.xlu0 %57
  %61 = vset.pattern.permute.xlu0 0
  %62 = vperm.xlu0 %61, %v28
  %v63 = vpop.permute.xlu0 %62
  %66 = vset.pattern.permute.xlu0 0
  %67 = vperm.xlu0 %66, %v29
  %v68 = vpop.permute.xlu0 %67
  %v70 = vmul.f32 %v14, %v33
  %v71 = vmul.f32 %v15, %v38
  %v72 = vmul.f32 %v16, %v43
  %v73 = vmul.f32 %v17, %v48
  %v74 = vmul.f32 %v18, %v53
  %v75 = vmul.f32 %v19, %v58
  %v76 = vmul.f32 %v20, %v63
  %v77 = vmul.f32 %v21, %v68
  %v78 = vld [vmem:[%s2] sm:$0xff]
  %v79 = vld [vmem:[%s2 + $0x8] sm:$0xff]
  %v80 = vld [vmem:[%s2 + $0x10] sm:$0xff]
  %v81 = vld [vmem:[%s2 + $0x18] sm:$0xff]
  %v82 = vld [vmem:[%s2 + $0x20] sm:$0xff]
  %v83 = vld [vmem:[%s2 + $0x28] sm:$0xff]
  %v84 = vld [vmem:[%s2 + $0x30] sm:$0xff]
  %v85 = vld [vmem:[%s2 + $0x38] sm:$0xff]
  %87 = vset.pattern.permute.xlu0 0
  %88 = vperm.xlu0 %87, %v78
  %v89 = vpop.permute.xlu0 %88
  %92 = vset.pattern.permute.xlu0 0
  %93 = vperm.xlu0 %92, %v79
  %v94 = vpop.permute.xlu0 %93
  %97 = vset.pattern.permute.xlu0 0
  %98 = vperm.xlu0 %97, %v80
  %v99 = vpop.permute.xlu0 %98
  %102 = vset.pattern.permute.xlu0 0
  %103 = vperm.xlu0 %102, %v81
  %v104 = vpop.permute.xlu0 %103
  %107 = vset.pattern.permute.xlu0 0
  %108 = vperm.xlu0 %107, %v82
  %v109 = vpop.permute.xlu0 %108
  %112 = vset.pattern.permute.xlu0 0
  %113 = vperm.xlu0 %112, %v83
  %v114 = vpop.permute.xlu0 %113
  %117 = vset.pattern.permute.xlu0 0
  %118 = vperm.xlu0 %117, %v84
  %v119 = vpop.permute.xlu0 %118
  %122 = vset.pattern.permute.xlu0 0
  %123 = vperm.xlu0 %122, %v85
  %v124 = vpop.permute.xlu0 %123
  %v126 = vadd.f32 %v70, %v89
  %v127 = vadd.f32 %v71, %v94
  %v128 = vadd.f32 %v72, %v99
  %v129 = vadd.f32 %v73, %v104
  %v130 = vadd.f32 %v74, %v109
  %v131 = vadd.f32 %v75, %v114
  %v132 = vadd.f32 %v76, %v119
  %v133 = vadd.f32 %v77, %v124
  %vm134 = vcmp.ge.f32.partialorder %v126, 0.0
  %vm135 = vcmp.ge.f32.partialorder %v127, 0.0
  %vm136 = vcmp.ge.f32.partialorder %v128, 0.0
  %vm137 = vcmp.ge.f32.partialorder %v129, 0.0
  %vm138 = vcmp.ge.f32.partialorder %v130, 0.0
  %vm139 = vcmp.ge.f32.partialorder %v131, 0.0
  %vm140 = vcmp.ge.f32.partialorder %v132, 0.0
  %vm141 = vcmp.ge.f32.partialorder %v133, 0.0
  %v142 = vmul.f32 %v126, 0.2
  %v143 = vmul.f32 %v127, 0.2
  %v144 = vmul.f32 %v128, 0.2
  %v145 = vmul.f32 %v129, 0.2
  %v146 = vmul.f32 %v130, 0.2
  %v147 = vmul.f32 %v131, 0.2
  %v148 = vmul.f32 %v132, 0.2
  %v149 = vmul.f32 %v133, 0.2
  %v150 = vsel %vm134, %v126, %v142
  %v151 = vsel %vm135, %v127, %v143
  %v152 = vsel %vm136, %v128, %v144
  %v153 = vsel %vm137, %v129, %v145
  %v154 = vsel %vm138, %v130, %v146
  %v155 = vsel %vm139, %v131, %v147
  %v156 = vsel %vm140, %v132, %v148
  %v157 = vsel %vm141, %v133, %v149
  %v158 = vpack.c.bf16 %v151, %v150
  %v159 = vpack.c.bf16 %v153, %v152
  %v160 = vpack.c.bf16 %v155, %v154
  %v161 = vpack.c.bf16 %v157, %v156
  %v166 = vunpack.c.l.b16 %v158
  %v167 = vunpack.c.h.b16 %v158
  %v168 = vunpack.c.l.b16 %v159
  %v169 = vunpack.c.h.b16 %v159
  %v170 = vunpack.c.l.b16 %v160
  %v171 = vunpack.c.h.b16 %v160
  %v172 = vunpack.c.l.b16 %v161
  %v173 = vunpack.c.h.b16 %v161
  %v174 = vpack.c.b16 %v166, %v166
  %v175 = vpack.c.b16 %v167, %v167
  %v176 = vpack.c.b16 %v168, %v168
  %v177 = vpack.c.b16 %v169, %v169
  %v178 = vpack.c.b16 %v170, %v170
  %v179 = vpack.c.b16 %v171, %v171
  %v180 = vpack.c.b16 %v172, %v172
  %v181 = vpack.c.b16 %v173, %v173
  %190 = vst [vmem:[%s3] sm:$0xf] %v174
  %191 = vst [vmem:[%s3 + $0x4] sm:$0xf] %v175
  %192 = vst [vmem:[%s3 + $0x8] sm:$0xf] %v176
  %193 = vst [vmem:[%s3 + $0xc] sm:$0xf] %v177
  %194 = vst [vmem:[%s3 + $0x10] sm:$0xf] %v178
  %195 = vst [vmem:[%s3 + $0x14] sm:$0xf] %v179
  %196 = vst [vmem:[%s3 + $0x18] sm:$0xf] %v180
  %197 = vst [vmem:[%s3 + $0x1c] sm:$0xf] %v181
  // Predicated region
  $region14: #{discriminator_forward.18} parent=0 // pred_check
    _
  $region15: #{discriminator_forward.18} parent=0 // pred_check_branch
    %199 = sbr.rel (0) target = $region17
  $region16: #{discriminator_forward.18} parent=0 // pred_region
    _
  $region17: #{discriminator_forward.18} parent=0 // pred_fallthru
    _
  // Predicated region
  $region18: #{discriminator_forward.18} parent=0 // pred_check
    _
  $region19: #{discriminator_forward.18} parent=0 // pred_check_branch
    %201 = sbr.rel (0) target = $region21
  $region20: #{discriminator_forward.18} parent=0 // pred_region
    _
  $region21: #{discriminator_forward.18} parent=0 // pred_fallthru
    _

// kernel: discriminator_forward.17
$region0: #{discriminator_forward.17}
  #allocation0 [shape = 'u32[]', space=smem, size = 0x4, offset = 0x4, fixed_abs, tag = 'smem constant byte address 0x4 - core index']
  #allocation1 [shape = 'u32[144,128]{1,0:T(1,128)}', space=vmem, size = 0x12000, scoped, tag = 'internal scratch']
  %s0 = inlined_call_operand.vmem [shape: bf16[64,512], index: 0, kind: input, shape index: {}]
  %s1 = inlined_call_operand.vmem [shape: bf16[512,128], index: 1, kind: input, shape index: {}]
  %s2 = inlined_call_operand.vmem [shape: f32[64,128], index: 2, kind: output, shape index: {0}]
  %s3 = inlined_call_operand.vmem [shape: f32[1,64,2], index: 3, kind: output, shape index: {1}]
  %4 = xla_tuple %s2, %s3
  %s5 = sld [smem:[#allocation0]]
  $region26: #{discriminator_forward.17} parent=0
    _
  %s7 = ssub.s32 1, %s5
  %s8 = scalar_select 0, %s7, %s5
  // Predicated region
  $region2: #{discriminator_forward.17} parent=0 // pred_check
    _
  $region3: #{discriminator_forward.17} parent=0 // pred_check_branch
    %10 = sbr.rel (0) target = $region5
  $region4: #{discriminator_forward.17} parent=0 // pred_region
    _
  $region5: #{discriminator_forward.17} parent=0 // pred_fallthru
    _
  // Predicated region
  $region6: #{discriminator_forward.17} parent=0 // pred_check
    _
  $region7: #{discriminator_forward.17} parent=0 // pred_check_branch
    %12 = sbr.rel (0) target = $region9
  $region8: #{discriminator_forward.17} parent=0 // pred_region
    _
  $region9: #{discriminator_forward.17} parent=0 // pred_fallthru
    _
  %v14 = vld [vmem:[%s0] sm:$0xff]
  %v15 = vld [vmem:[%s0 + $0x8] sm:$0xff]
  %v16 = vld [vmem:[%s0 + $0x10] sm:$0xff]
  %v17 = vld [vmem:[%s0 + $0x18] sm:$0xff]
  %v18 = vld [vmem:[%s0 + $0x20] sm:$0xff]
  %v19 = vld [vmem:[%s0 + $0x28] sm:$0xff]
  %v20 = vld [vmem:[%s0 + $0x30] sm:$0xff]
  %v21 = vld [vmem:[%s0 + $0x38] sm:$0xff]
  %v22 = vld [vmem:[%s0 + $0x40] sm:$0xff]
  %v23 = vld [vmem:[%s0 + $0x48] sm:$0xff]
  %v24 = vld [vmem:[%s0 + $0x50] sm:$0xff]
  %v25 = vld [vmem:[%s0 + $0x58] sm:$0xff]
  %v26 = vld [vmem:[%s0 + $0x60] sm:$0xff]
  %v27 = vld [vmem:[%s0 + $0x68] sm:$0xff]
  %v28 = vld [vmem:[%s0 + $0x70] sm:$0xff]
  %v29 = vld [vmem:[%s0 + $0x78] sm:$0xff]
  %v30 = vld [vmem:[%s1] sm:$0xf]
  %v31 = vld [vmem:[%s1 + $0x4] sm:$0xf]
  %v32 = vld [vmem:[%s1 + $0x8] sm:$0xf]
  %v33 = vld [vmem:[%s1 + $0xc] sm:$0xf]
  %v34 = vld [vmem:[%s1 + $0x10] sm:$0xf]
  %v35 = vld [vmem:[%s1 + $0x14] sm:$0xf]
  %v36 = vld [vmem:[%s1 + $0x18] sm:$0xf]
  %v37 = vld [vmem:[%s1 + $0x1c] sm:$0xf]
  %v38 = vld [vmem:[%s1 + $0x20] sm:$0xf]
  %v39 = vld [vmem:[%s1 + $0x24] sm:$0xf]
  %v40 = vld [vmem:[%s1 + $0x28] sm:$0xf]
  %v41 = vld [vmem:[%s1 + $0x2c] sm:$0xf]
  %v42 = vld [vmem:[%s1 + $0x30] sm:$0xf]
  %v43 = vld [vmem:[%s1 + $0x34] sm:$0xf]
  %v44 = vld [vmem:[%s1 + $0x38] sm:$0xf]
  %v45 = vld [vmem:[%s1 + $0x3c] sm:$0xf]
  %v46 = vld [vmem:[%s1 + $0x40] sm:$0xf]
  %v47 = vld [vmem:[%s1 + $0x44] sm:$0xf]
  %v48 = vld [vmem:[%s1 + $0x48] sm:$0xf]
  %v49 = vld [vmem:[%s1 + $0x4c] sm:$0xf]
  %v50 = vld [vmem:[%s1 + $0x50] sm:$0xf]
  %v51 = vld [vmem:[%s1 + $0x54] sm:$0xf]
  %v52 = vld [vmem:[%s1 + $0x58] sm:$0xf]
  %v53 = vld [vmem:[%s1 + $0x5c] sm:$0xf]
  %v54 = vld [vmem:[%s1 + $0x60] sm:$0xf]
  %v55 = vld [vmem:[%s1 + $0x64] sm:$0xf]
  %v56 = vld [vmem:[%s1 + $0x68] sm:$0xf]
  %v57 = vld [vmem:[%s1 + $0x6c] sm:$0xf]
  %v58 = vld [vmem:[%s1 + $0x70] sm:$0xf]
  %v59 = vld [vmem:[%s1 + $0x74] sm:$0xf]
  %v60 = vld [vmem:[%s1 + $0x78] sm:$0xf]
  %v61 = vld [vmem:[%s1 + $0x7c] sm:$0xf]
  %v62 = vld [vmem:[%s1 + $0x80] sm:$0xf]
  %v63 = vld [vmem:[%s1 + $0x84] sm:$0xf]
  %v64 = vld [vmem:[%s1 + $0x88] sm:$0xf]
  %v65 = vld [vmem:[%s1 + $0x8c] sm:$0xf]
  %v66 = vld [vmem:[%s1 + $0x90] sm:$0xf]
  %v67 = vld [vmem:[%s1 + $0x94] sm:$0xf]
  %v68 = vld [vmem:[%s1 + $0x98] sm:$0xf]
  %v69 = vld [vmem:[%s1 + $0x9c] sm:$0xf]
  %v70 = vld [vmem:[%s1 + $0xa0] sm:$0xf]
  %v71 = vld [vmem:[%s1 + $0xa4] sm:$0xf]
  %v72 = vld [vmem:[%s1 + $0xa8] sm:$0xf]
  %v73 = vld [vmem:[%s1 + $0xac] sm:$0xf]
  %v74 = vld [vmem:[%s1 + $0xb0] sm:$0xf]
  %v75 = vld [vmem:[%s1 + $0xb4] sm:$0xf]
  %v76 = vld [vmem:[%s1 + $0xb8] sm:$0xf]
  %v77 = vld [vmem:[%s1 + $0xbc] sm:$0xf]
  %v78 = vld [vmem:[%s1 + $0xc0] sm:$0xf]
  %v79 = vld [vmem:[%s1 + $0xc4] sm:$0xf]
  %v80 = vld [vmem:[%s1 + $0xc8] sm:$0xf]
  %v81 = vld [vmem:[%s1 + $0xcc] sm:$0xf]
  %v82 = vld [vmem:[%s1 + $0xd0] sm:$0xf]
  %v83 = vld [vmem:[%s1 + $0xd4] sm:$0xf]
  %v84 = vld [vmem:[%s1 + $0xd8] sm:$0xf]
  %v85 = vld [vmem:[%s1 + $0xdc] sm:$0xf]
  %v86 = vld [vmem:[%s1 + $0xe0] sm:$0xf]
  %v87 = vld [vmem:[%s1 + $0xe4] sm:$0xf]
  %v88 = vld [vmem:[%s1 + $0xe8] sm:$0xf]
  %v89 = vld [vmem:[%s1 + $0xec] sm:$0xf]
  %v90 = vld [vmem:[%s1 + $0xf0] sm:$0xf]
  %v91 = vld [vmem:[%s1 + $0xf4] sm:$0xf]
  %v92 = vld [vmem:[%s1 + $0xf8] sm:$0xf]
  %v93 = vld [vmem:[%s1 + $0xfc] sm:$0xf]
  %v110 = vunpack.c.l.b16 %v14
  %v111 = vunpack.c.h.b16 %v14
  %v112 = vunpack.c.l.b16 %v15
  %v113 = vunpack.c.h.b16 %v15
  %v114 = vunpack.c.l.b16 %v16
  %v115 = vunpack.c.h.b16 %v16
  %v116 = vunpack.c.l.b16 %v17
  %v117 = vunpack.c.h.b16 %v17
  %v118 = vunpack.c.l.b16 %v18
  %v119 = vunpack.c.h.b16 %v18
  %v120 = vunpack.c.l.b16 %v19
  %v121 = vunpack.c.h.b16 %v19
  %v122 = vunpack.c.l.b16 %v20
  %v123 = vunpack.c.h.b16 %v20
  %v124 = vunpack.c.l.b16 %v21
  %v125 = vunpack.c.h.b16 %v21
  %v126 = vunpack.c.l.b16 %v22
  %v127 = vunpack.c.h.b16 %v22
  %v128 = vunpack.c.l.b16 %v23
  %v129 = vunpack.c.h.b16 %v23
  %v130 = vunpack.c.l.b16 %v24
  %v131 = vunpack.c.h.b16 %v24
  %v132 = vunpack.c.l.b16 %v25
  %v133 = vunpack.c.h.b16 %v25
  %v134 = vunpack.c.l.b16 %v26
  %v135 = vunpack.c.h.b16 %v26
  %v136 = vunpack.c.l.b16 %v27
  %v137 = vunpack.c.h.b16 %v27
  %v138 = vunpack.c.l.b16 %v28
  %v139 = vunpack.c.h.b16 %v28
  %v140 = vunpack.c.l.b16 %v29
  %v141 = vunpack.c.h.b16 %v29
  %v142 = vpack.c.b16 %v114, %v110
  %v143 = vpack.c.b16 %v115, %v111
  %v144 = vpack.c.b16 %v116, %v112
  %v145 = vpack.c.b16 %v117, %v113
  %v146 = vpack.c.b16 %v122, %v118
  %v147 = vpack.c.b16 %v123, %v119
  %v148 = vpack.c.b16 %v124, %v120
  %v149 = vpack.c.b16 %v125, %v121
  %v150 = vpack.c.b16 %v130, %v126
  %v151 = vpack.c.b16 %v131, %v127
  %v152 = vpack.c.b16 %v132, %v128
  %v153 = vpack.c.b16 %v133, %v129
  %v154 = vpack.c.b16 %v138, %v134
  %v155 = vpack.c.b16 %v139, %v135
  %v156 = vpack.c.b16 %v140, %v136
  %v157 = vpack.c.b16 %v141, %v137
  %v238 = vunpack.c.l.b16 %v30
  %v239 = vunpack.c.l.b16 %v31
  %v240 = vunpack.c.l.b16 %v32
  %v241 = vunpack.c.l.b16 %v33
  %v242 = vunpack.c.l.b16 %v34
  %v243 = vunpack.c.l.b16 %v35
  %v244 = vunpack.c.l.b16 %v36
  %v245 = vunpack.c.l.b16 %v37
  %v246 = vunpack.c.l.b16 %v38
  %v247 = vunpack.c.l.b16 %v39
  %v248 = vunpack.c.l.b16 %v40
  %v249 = vunpack.c.l.b16 %v41
  %v250 = vunpack.c.l.b16 %v42
  %v251 = vunpack.c.l.b16 %v43
  %v252 = vunpack.c.l.b16 %v44
  %v253 = vunpack.c.l.b16 %v45
  %v254 = vunpack.c.l.b16 %v46
  %v255 = vunpack.c.l.b16 %v47
  %v256 = vunpack.c.l.b16 %v48
  %v257 = vunpack.c.l.b16 %v49
  %v258 = vunpack.c.l.b16 %v50
  %v259 = vunpack.c.l.b16 %v51
  %v260 = vunpack.c.l.b16 %v52
  %v261 = vunpack.c.l.b16 %v53
  %v262 = vunpack.c.l.b16 %v54
  %v263 = vunpack.c.l.b16 %v55
  %v264 = vunpack.c.l.b16 %v56
  %v265 = vunpack.c.l.b16 %v57
  %v266 = vunpack.c.l.b16 %v58
  %v267 = vunpack.c.l.b16 %v59
  %v268 = vunpack.c.l.b16 %v60
  %v269 = vunpack.c.l.b16 %v61
  %v270 = vunpack.c.l.b16 %v62
  %v271 = vunpack.c.l.b16 %v63
  %v272 = vunpack.c.l.b16 %v64
  %v273 = vunpack.c.l.b16 %v65
  %v274 = vunpack.c.l.b16 %v66
  %v275 = vunpack.c.l.b16 %v67
  %v276 = vunpack.c.l.b16 %v68
  %v277 = vunpack.c.l.b16 %v69
  %v278 = vunpack.c.l.b16 %v70
  %v279 = vunpack.c.l.b16 %v71
  %v280 = vunpack.c.l.b16 %v72
  %v281 = vunpack.c.l.b16 %v73
  %v282 = vunpack.c.l.b16 %v74
  %v283 = vunpack.c.l.b16 %v75
  %v284 = vunpack.c.l.b16 %v76
  %v285 = vunpack.c.l.b16 %v77
  %v286 = vunpack.c.l.b16 %v78
  %v287 = vunpack.c.l.b16 %v79
  %v288 = vunpack.c.l.b16 %v80
  %v289 = vunpack.c.l.b16 %v81
  %v290 = vunpack.c.l.b16 %v82
  %v291 = vunpack.c.l.b16 %v83
  %v292 = vunpack.c.l.b16 %v84
  %v293 = vunpack.c.l.b16 %v85
  %v294 = vunpack.c.l.b16 %v86
  %v295 = vunpack.c.l.b16 %v87
  %v296 = vunpack.c.l.b16 %v88
  %v297 = vunpack.c.l.b16 %v89
  %v298 = vunpack.c.l.b16 %v90
  %v299 = vunpack.c.l.b16 %v91
  %v300 = vunpack.c.l.b16 %v92
  %v301 = vunpack.c.l.b16 %v93
  %v302 = vpack.c.b16 %v239, %v238
  %v303 = vpack.c.b16 %v241, %v240
  %v304 = vpack.c.b16 %v243, %v242
  %v305 = vpack.c.b16 %v245, %v244
  %v306 = vpack.c.b16 %v247, %v246
  %v307 = vpack.c.b16 %v249, %v248
  %v308 = vpack.c.b16 %v251, %v250
  %v309 = vpack.c.b16 %v253, %v252
  %v310 = vpack.c.b16 %v255, %v254
  %v311 = vpack.c.b16 %v257, %v256
  %v312 = vpack.c.b16 %v259, %v258
  %v313 = vpack.c.b16 %v261, %v260
  %v314 = vpack.c.b16 %v263, %v262
  %v315 = vpack.c.b16 %v265, %v264
  %v316 = vpack.c.b16 %v267, %v266
  %v317 = vpack.c.b16 %v269, %v268
  %v318 = vpack.c.b16 %v271, %v270
  %v319 = vpack.c.b16 %v273, %v272
  %v320 = vpack.c.b16 %v275, %v274
  %v321 = vpack.c.b16 %v277, %v276
  %v322 = vpack.c.b16 %v279, %v278
  %v323 = vpack.c.b16 %v281, %v280
  %v324 = vpack.c.b16 %v283, %v282
  %v325 = vpack.c.b16 %v285, %v284
  %v326 = vpack.c.b16 %v287, %v286
  %v327 = vpack.c.b16 %v289, %v288
  %v328 = vpack.c.b16 %v291, %v290
  %v329 = vpack.c.b16 %v293, %v292
  %v330 = vpack.c.b16 %v295, %v294
  %v331 = vpack.c.b16 %v297, %v296
  %v332 = vpack.c.b16 %v299, %v298
  %v333 = vpack.c.b16 %v301, %v300
  %366 = vmatprep.subr.bf16.mxu0 0
  %367 = vmatpush1.bf16.msra.mxu0 %v302
  %368 = vmatprep.subr.bf16.mxu0 0
  %369 = vmatpush1.bf16.msra.mxu0 %v303
  %370 = vmatprep.subr.bf16.mxu0 0
  %371 = vmatpush1.bf16.msra.mxu0 %v304
  %372 = vmatprep.subr.bf16.mxu0 0
  %373 = vmatpush1.bf16.msra.mxu0 %v305
  %374 = vmatprep.subr.bf16.mxu0 0
  %375 = vmatpush1.bf16.msra.mxu0 %v306
  %376 = vmatprep.subr.bf16.mxu0 0
  %377 = vmatpush1.bf16.msra.mxu0 %v307
  %378 = vmatprep.subr.bf16.mxu0 0
  %379 = vmatpush1.bf16.msra.mxu0 %v308
  %380 = vmatprep.subr.bf16.mxu0 0
  %381 = vmatpush1.bf16.msra.mxu0 %v309
  %382 = vmatprep.subr.bf16.mxu0 0
  %383 = vmatpush1.bf16.msra.mxu0 %v310
  %384 = vmatprep.subr.bf16.mxu0 0
  %385 = vmatpush1.bf16.msra.mxu0 %v311
  %386 = vmatprep.subr.bf16.mxu0 0
  %387 = vmatpush1.bf16.msra.mxu0 %v312
  %388 = vmatprep.subr.bf16.mxu0 0
  %389 = vmatpush1.bf16.msra.mxu0 %v313
  %390 = vmatprep.subr.bf16.mxu0 0
  %391 = vmatpush1.bf16.msra.mxu0 %v314
  %392 = vmatprep.subr.bf16.mxu0 0
  %393 = vmatpush1.bf16.msra.mxu0 %v315
  %394 = vmatprep.subr.bf16.mxu0 0
  %395 = vmatpush1.bf16.msra.mxu0 %v316
  %396 = vmatprep.subr.bf16.mxu0 0
  %397 = vmatpush1.bf16.msra.mxu0 %v317
  %398 = vmatprep.mubr.bf16.mxu0 %v143
  %399 = vmatmul.mubr.bf16.gmra.mrb[0].mxu0 %v142
  %v400 = vpop.f32.mrb[0].mxu0
  %v401 = vadd.f32 0.0, %v400
  %v402 = vpop.f32.mrb[0].mxu0
  %v403 = vpop.f32.mrb[0].mxu0
  %v404 = vadd.f32 0.0, %v403
  %v405 = vpop.f32.mrb[0].mxu0
  %406 = vmatprep.mubr.bf16.mxu0 %v147
  %407 = vmatmul.mubr.bf16.gmra.mrb[0].mxu0 %v146
  %v408 = vpop.f32.mrb[0].mxu0
  %v409 = vadd.f32 0.0, %v408
  %v410 = vpop.f32.mrb[0].mxu0
  %v411 = vpop.f32.mrb[0].mxu0
  %v412 = vadd.f32 0.0, %v411
  %v413 = vpop.f32.mrb[0].mxu0
  %414 = vmatprep.mubr.bf16.mxu0 %v151
  %415 = vmatmul.mubr.bf16.gmra.mrb[0].mxu0 %v150
  %v416 = vpop.f32.mrb[0].mxu0
  %v417 = vadd.f32 0.0, %v416
  %v418 = vpop.f32.mrb[0].mxu0
  %v419 = vpop.f32.mrb[0].mxu0
  %v420 = vadd.f32 0.0, %v419
  %v421 = vpop.f32.mrb[0].mxu0
  %422 = vmatprep.mubr.bf16.mxu0 %v155
  %423 = vmatmul.mubr.bf16.gmra.mrb[0].mxu0 %v154
  %v424 = vpop.f32.mrb[0].mxu0
  %v425 = vadd.f32 0.0, %v424
  %v426 = vpop.f32.mrb[0].mxu0
  %v427 = vpop.f32.mrb[0].mxu0
  %v428 = vadd.f32 0.0, %v427
  %v429 = vpop.f32.mrb[0].mxu0
  %430 = vdwg.mxu0
  %431 = vmatprep.subr.bf16.mxu0 0
  %432 = vmatpush1.bf16.msra.mxu0 %v318
  %433 = vmatprep.subr.bf16.mxu0 0
  %434 = vmatpush1.bf16.msra.mxu0 %v319
  %435 = vmatprep.subr.bf16.mxu0 0
  %436 = vmatpush1.bf16.msra.mxu0 %v320
  %437 = vmatprep.subr.bf16.mxu0 0
  %438 = vmatpush1.bf16.msra.mxu0 %v321
  %439 = vmatprep.subr.bf16.mxu0 0
  %440 = vmatpush1.bf16.msra.mxu0 %v322
  %441 = vmatprep.subr.bf16.mxu0 0
  %442 = vmatpush1.bf16.msra.mxu0 %v323
  %443 = vmatprep.subr.bf16.mxu0 0
  %444 = vmatpush1.bf16.msra.mxu0 %v324
  %445 = vmatprep.subr.bf16.mxu0 0
  %446 = vmatpush1.bf16.msra.mxu0 %v325
  %447 = vmatprep.subr.bf16.mxu0 0
  %448 = vmatpush1.bf16.msra.mxu0 %v326
  %449 = vmatprep.subr.bf16.mxu0 0
  %450 = vmatpush1.bf16.msra.mxu0 %v327
  %451 = vmatprep.subr.bf16.mxu0 0
  %452 = vmatpush1.bf16.msra.mxu0 %v328
  %453 = vmatprep.subr.bf16.mxu0 0
  %454 = vmatpush1.bf16.msra.mxu0 %v329
  %455 = vmatprep.subr.bf16.mxu0 0
  %456 = vmatpush1.bf16.msra.mxu0 %v330
  %457 = vmatprep.subr.bf16.mxu0 0
  %458 = vmatpush1.bf16.msra.mxu0 %v331
  %459 = vmatprep.subr.bf16.mxu0 0
  %460 = vmatpush1.bf16.msra.mxu0 %v332
  %461 = vmatprep.subr.bf16.mxu0 0
  %462 = vmatpush1.bf16.msra.mxu0 %v333
  %463 = vmatprep.mubr.bf16.mxu0 %v145
  %464 = vmatmul.mubr.bf16.gmra.mrb[0].mxu0 %v144
  %v465 = vpop.f32.mrb[0].mxu0
  %v466 = vadd.f32 %v401, %v465
  %v467 = vpop.f32.mrb[0].mxu0
  %v468 = vpop.f32.mrb[0].mxu0
  %v469 = vadd.f32 %v404, %v468
  %v470 = vpop.f32.mrb[0].mxu0
  %471 = vmatprep.mubr.bf16.mxu0 %v149
  %472 = vmatmul.mubr.bf16.gmra.mrb[0].mxu0 %v148
  %v473 = vpop.f32.mrb[0].mxu0
  %v474 = vadd.f32 %v409, %v473
  %v475 = vpop.f32.mrb[0].mxu0
  %v476 = vpop.f32.mrb[0].mxu0
  %v477 = vadd.f32 %v412, %v476
  %v478 = vpop.f32.mrb[0].mxu0
  %479 = vmatprep.mubr.bf16.mxu0 %v153
  %480 = vmatmul.mubr.bf16.gmra.mrb[0].mxu0 %v152
  %v481 = vpop.f32.mrb[0].mxu0
  %v482 = vadd.f32 %v417, %v481
  %v483 = vpop.f32.mrb[0].mxu0
  %v484 = vpop.f32.mrb[0].mxu0
  %v485 = vadd.f32 %v420, %v484
  %v486 = vpop.f32.mrb[0].mxu0
  %487 = vmatprep.mubr.bf16.mxu0 %v157
  %488 = vmatmul.mubr.bf16.gmra.mrb[0].mxu0 %v156
  %v489 = vpop.f32.mrb[0].mxu0
  %v490 = vadd.f32 %v425, %v489
  %v491 = vpop.f32.mrb[0].mxu0
  %v492 = vpop.f32.mrb[0].mxu0
  %v493 = vadd.f32 %v428, %v492
  %v494 = vpop.f32.mrb[0].mxu0
  %495 = vdwg.mxu0
  %496 = vst [vmem:[%s2] sm:$0xff] %v466
  %497 = vst [vmem:[%s2 + $0x8] sm:$0xff] %v469
  %498 = vst [vmem:[%s2 + $0x10] sm:$0xff] %v474
  %499 = vst [vmem:[%s2 + $0x18] sm:$0xff] %v477
  %500 = vst [vmem:[%s2 + $0x20] sm:$0xff] %v482
  %501 = vst [vmem:[%s2 + $0x28] sm:$0xff] %v485
  %502 = vst [vmem:[%s2 + $0x30] sm:$0xff] %v490
  %503 = vst [vmem:[%s2 + $0x38] sm:$0xff] %v493
  %504 = vadd.xlane.f32.xlu0 %v466
  %v505 = vpop.xlane.xlu0 %504
  %506 = vadd.xlane.f32.xlu0 %v469
  %v507 = vpop.xlane.xlu0 %506
  %508 = vadd.xlane.f32.xlu0 %v474
  %v509 = vpop.xlane.xlu0 %508
  %510 = vadd.xlane.f32.xlu0 %v477
  %v511 = vpop.xlane.xlu0 %510
  %512 = vadd.xlane.f32.xlu0 %v482
  %v513 = vpop.xlane.xlu0 %512
  %514 = vadd.xlane.f32.xlu0 %v485
  %v515 = vpop.xlane.xlu0 %514
  %516 = vadd.xlane.f32.xlu0 %v490
  %v517 = vpop.xlane.xlu0 %516
  %518 = vadd.xlane.f32.xlu0 %v493
  %v519 = vpop.xlane.xlu0 %518
  %v520 = vmul.f32 %v466, %v466
  %v521 = vmul.f32 %v469, %v469
  %v522 = vmul.f32 %v474, %v474
  %v523 = vmul.f32 %v477, %v477
  %v524 = vmul.f32 %v482, %v482
  %v525 = vmul.f32 %v485, %v485
  %v526 = vmul.f32 %v490, %v490
  %v527 = vmul.f32 %v493, %v493
  %528 = vadd.xlane.f32.xlu0 %v520
  %v529 = vpop.xlane.xlu0 %528
  %530 = vadd.xlane.f32.xlu0 %v521
  %v531 = vpop.xlane.xlu0 %530
  %532 = vadd.xlane.f32.xlu0 %v522
  %v533 = vpop.xlane.xlu0 %532
  %534 = vadd.xlane.f32.xlu0 %v523
  %v535 = vpop.xlane.xlu0 %534
  %536 = vadd.xlane.f32.xlu0 %v524
  %v537 = vpop.xlane.xlu0 %536
  %538 = vadd.xlane.f32.xlu0 %v525
  %v539 = vpop.xlane.xlu0 %538
  %540 = vadd.xlane.f32.xlu0 %v526
  %v541 = vpop.xlane.xlu0 %540
  %542 = vadd.xlane.f32.xlu0 %v527
  %v543 = vpop.xlane.xlu0 %542
  %v544 = vlaneseq
  %v545 = vand.u32 %v544, 127
  %vm546 = vcmp.eq.s32.totalorder %v545, 0
  %v547 = vsel %vm546, %v505, %v529
  %v548 = vsel %vm546, %v507, %v531
  %v549 = vsel %vm546, %v509, %v533
  %v550 = vsel %vm546, %v511, %v535
  %v551 = vsel %vm546, %v513, %v537
  %v552 = vsel %vm546, %v515, %v539
  %v553 = vsel %vm546, %v517, %v541
  %v554 = vsel %vm546, %v519, %v543
  %vm555 = vcmask 15360
  %556 = vst.msk [vmem:[%s3] sm:$0xff] %vm555, %v547
  %557 = vst.msk [vmem:[%s3 + $0x8] sm:$0xff] %vm555, %v548
  %558 = vst.msk [vmem:[%s3 + $0x10] sm:$0xff] %vm555, %v549
  %559 = vst.msk [vmem:[%s3 + $0x18] sm:$0xff] %vm555, %v550
  %560 = vst.msk [vmem:[%s3 + $0x20] sm:$0xff] %vm555, %v551
  %561 = vst.msk [vmem:[%s3 + $0x28] sm:$0xff] %vm555, %v552
  %562 = vst.msk [vmem:[%s3 + $0x30] sm:$0xff] %vm555, %v553
  %563 = vst.msk [vmem:[%s3 + $0x38] sm:$0xff] %vm555, %v554
  // Predicated region
  $region10: #{discriminator_forward.17} parent=0 // pred_check
    _
  $region11: #{discriminator_forward.17} parent=0 // pred_check_branch
    %565 = sbr.rel (0) target = $region13
  $region12: #{discriminator_forward.17} parent=0 // pred_region
    _
  $region13: #{discriminator_forward.17} parent=0 // pred_fallthru
    _
  // Predicated region
  $region14: #{discriminator_forward.17} parent=0 // pred_check
    _
  $region15: #{discriminator_forward.17} parent=0 // pred_check_branch
    %567 = sbr.rel (0) target = $region17
  $region16: #{discriminator_forward.17} parent=0 // pred_region
    _
  $region17: #{discriminator_forward.17} parent=0 // pred_fallthru
    _
  // Predicated region
  $region18: #{discriminator_forward.17} parent=0 // pred_check
    _
  $region19: #{discriminator_forward.17} parent=0 // pred_check_branch
    %569 = sbr.rel (0) target = $region21
  $region20: #{discriminator_forward.17} parent=0 // pred_region
    _
  $region21: #{discriminator_forward.17} parent=0 // pred_fallthru
    _
  // Predicated region
  $region22: #{discriminator_forward.17} parent=0 // pred_check
    _
  $region23: #{discriminator_forward.17} parent=0 // pred_check_branch
    %571 = sbr.rel (0) target = $region25
  $region24: #{discriminator_forward.17} parent=0 // pred_region
    _
  $region25: #{discriminator_forward.17} parent=0 // pred_fallthru
    _

// kernel: discriminator_forward.19
$region0: #{discriminator_forward.19}
  #allocation0 [shape = 'u32[]', space=smem, size = 0x4, offset = 0x4, fixed_abs, tag = 'smem constant byte address 0x4 - core index']
  #allocation1 [shape = 'u32[144,128]{1,0:T(1,128)}', space=vmem, size = 0x12000, scoped, tag = 'internal scratch']
  %s0 = inlined_call_operand.vmem [shape: bf16[8,1024], index: 0, kind: input, shape index: {}]
  %s1 = inlined_call_operand.vmem [shape: bf16[1024,128], index: 1, kind: input, shape index: {}]
  %s2 = inlined_call_operand.vmem [shape: f32[8,128], index: 2, kind: output, shape index: {}]
  %s3 = sld [smem:[#allocation0]]
  $region18: #{discriminator_forward.19} parent=0
    _
  %s5 = ssub.s32 1, %s3
  %s6 = scalar_select 0, %s5, %s3
  // Predicated region
  $region2: #{discriminator_forward.19} parent=0 // pred_check
    _
  $region3: #{discriminator_forward.19} parent=0 // pred_check_branch
    %8 = sbr.rel (0) target = $region5
  $region4: #{discriminator_forward.19} parent=0 // pred_region
    _
  $region5: #{discriminator_forward.19} parent=0 // pred_fallthru
    _
  // Predicated region
  $region6: #{discriminator_forward.19} parent=0 // pred_check
    _
  $region7: #{discriminator_forward.19} parent=0 // pred_check_branch
    %10 = sbr.rel (0) target = $region9
  $region8: #{discriminator_forward.19} parent=0 // pred_region
    _
  $region9: #{discriminator_forward.19} parent=0 // pred_fallthru
    _
  %v12 = vld [vmem:[%s0] sm:$0xff]
  %v13 = vld [vmem:[%s0 + $0x8] sm:$0xff]
  %v14 = vld [vmem:[%s0 + $0x10] sm:$0xff]
  %v15 = vld [vmem:[%s0 + $0x18] sm:$0xff]
  %v16 = vld [vmem:[%s1] sm:$0xf]
  %v17 = vld [vmem:[%s1 + $0x4] sm:$0xf]
  %v18 = vld [vmem:[%s1 + $0x8] sm:$0xf]
  %v19 = vld [vmem:[%s1 + $0xc] sm:$0xf]
  %v20 = vld [vmem:[%s1 + $0x10] sm:$0xf]
  %v21 = vld [vmem:[%s1 + $0x14] sm:$0xf]
  %v22 = vld [vmem:[%s1 + $0x18] sm:$0xf]
  %v23 = vld [vmem:[%s1 + $0x1c] sm:$0xf]
  %v24 = vld [vmem:[%s1 + $0x20] sm:$0xf]
  %v25 = vld [vmem:[%s1 + $0x24] sm:$0xf]
  %v26 = vld [vmem:[%s1 + $0x28] sm:$0xf]
  %v27 = vld [vmem:[%s1 + $0x2c] sm:$0xf]
  %v28 = vld [vmem:[%s1 + $0x30] sm:$0xf]
  %v29 = vld [vmem:[%s1 + $0x34] sm:$0xf]
  %v30 = vld [vmem:[%s1 + $0x38] sm:$0xf]
  %v31 = vld [vmem:[%s1 + $0x3c] sm:$0xf]
  %v32 = vld [vmem:[%s1 + $0x40] sm:$0xf]
  %v33 = vld [vmem:[%s1 + $0x44] sm:$0xf]
  %v34 = vld [vmem:[%s1 + $0x48] sm:$0xf]
  %v35 = vld [vmem:[%s1 + $0x4c] sm:$0xf]
  %v36 = vld [vmem:[%s1 + $0x50] sm:$0xf]
  %v37 = vld [vmem:[%s1 + $0x54] sm:$0xf]
  %v38 = vld [vmem:[%s1 + $0x58] sm:$0xf]
  %v39 = vld [vmem:[%s1 + $0x5c] sm:$0xf]
  %v40 = vld [vmem:[%s1 + $0x60] sm:$0xf]
  %v41 = vld [vmem:[%s1 + $0x64] sm:$0xf]
  %v42 = vld [vmem:[%s1 + $0x68] sm:$0xf]
  %v43 = vld [vmem:[%s1 + $0x6c] sm:$0xf]
  %v44 = vld [vmem:[%s1 + $0x70] sm:$0xf]
  %v45 = vld [vmem:[%s1 + $0x74] sm:$0xf]
  %v46 = vld [vmem:[%s1 + $0x78] sm:$0xf]
  %v47 = vld [vmem:[%s1 + $0x7c] sm:$0xf]
  %v48 = vld [vmem:[%s1 + $0x80] sm:$0xf]
  %v49 = vld [vmem:[%s1 + $0x84] sm:$0xf]
  %v50 = vld [vmem:[%s1 + $0x88] sm:$0xf]
  %v51 = vld [vmem:[%s1 + $0x8c] sm:$0xf]
  %v52 = vld [vmem:[%s1 + $0x90] sm:$0xf]
  %v53 = vld [vmem:[%s1 + $0x94] sm:$0xf]
  %v54 = vld [vmem:[%s1 + $0x98] sm:$0xf]
  %v55 = vld [vmem:[%s1 + $0x9c] sm:$0xf]
  %v56 = vld [vmem:[%s1 + $0xa0] sm:$0xf]
  %v57 = vld [vmem:[%s1 + $0xa4] sm:$0xf]
  %v58 = vld [vmem:[%s1 + $0xa8] sm:$0xf]
  %v59 = vld [vmem:[%s1 + $0xac] sm:$0xf]
  %v60 = vld [vmem:[%s1 + $0xb0] sm:$0xf]
  %v61 = vld [vmem:[%s1 + $0xb4] sm:$0xf]
  %v62 = vld [vmem:[%s1 + $0xb8] sm:$0xf]
  %v63 = vld [vmem:[%s1 + $0xbc] sm:$0xf]
  %v64 = vld [vmem:[%s1 + $0xc0] sm:$0xf]
  %v65 = vld [vmem:[%s1 + $0xc4] sm:$0xf]
  %v66 = vld [vmem:[%s1 + $0xc8] sm:$0xf]
  %v67 = vld [vmem:[%s1 + $0xcc] sm:$0xf]
  %v68 = vld [vmem:[%s1 + $0xd0] sm:$0xf]
  %v69 = vld [vmem:[%s1 + $0xd4] sm:$0xf]
  %v70 = vld [vmem:[%s1 + $0xd8] sm:$0xf]
  %v71 = vld [vmem:[%s1 + $0xdc] sm:$0xf]
  %v72 = vld [vmem:[%s1 + $0xe0] sm:$0xf]
  %v73 = vld [vmem:[%s1 + $0xe4] sm:$0xf]
  %v74 = vld [vmem:[%s1 + $0xe8] sm:$0xf]
  %v75 = vld [vmem:[%s1 + $0xec] sm:$0xf]
  %v76 = vld [vmem:[%s1 + $0xf0] sm:$0xf]
  %v77 = vld [vmem:[%s1 + $0xf4] sm:$0xf]
  %v78 = vld [vmem:[%s1 + $0xf8] sm:$0xf]
  %v79 = vld [vmem:[%s1 + $0xfc] sm:$0xf]
  %v80 = vld [vmem:[%s1 + $0x100] sm:$0xf]
  %v81 = vld [vmem:[%s1 + $0x104] sm:$0xf]
  %v82 = vld [vmem:[%s1 + $0x108] sm:$0xf]
  %v83 = vld [vmem:[%s1 + $0x10c] sm:$0xf]
  %v84 = vld [vmem:[%s1 + $0x110] sm:$0xf]
  %v85 = vld [vmem:[%s1 + $0x114] sm:$0xf]
  %v86 = vld [vmem:[%s1 + $0x118] sm:$0xf]
  %v87 = vld [vmem:[%s1 + $0x11c] sm:$0xf]
  %v88 = vld [vmem:[%s1 + $0x120] sm:$0xf]
  %v89 = vld [vmem:[%s1 + $0x124] sm:$0xf]
  %v90 = vld [vmem:[%s1 + $0x128] sm:$0xf]
  %v91 = vld [vmem:[%s1 + $0x12c] sm:$0xf]
  %v92 = vld [vmem:[%s1 + $0x130] sm:$0xf]
  %v93 = vld [vmem:[%s1 + $0x134] sm:$0xf]
  %v94 = vld [vmem:[%s1 + $0x138] sm:$0xf]
  %v95 = vld [vmem:[%s1 + $0x13c] sm:$0xf]
  %v96 = vld [vmem:[%s1 + $0x140] sm:$0xf]
  %v97 = vld [vmem:[%s1 + $0x144] sm:$0xf]
  %v98 = vld [vmem:[%s1 + $0x148] sm:$0xf]
  %v99 = vld [vmem:[%s1 + $0x14c] sm:$0xf]
  %v100 = vld [vmem:[%s1 + $0x150] sm:$0xf]
  %v101 = vld [vmem:[%s1 + $0x154] sm:$0xf]
  %v102 = vld [vmem:[%s1 + $0x158] sm:$0xf]
  %v103 = vld [vmem:[%s1 + $0x15c] sm:$0xf]
  %v104 = vld [vmem:[%s1 + $0x160] sm:$0xf]
  %v105 = vld [vmem:[%s1 + $0x164] sm:$0xf]
  %v106 = vld [vmem:[%s1 + $0x168] sm:$0xf]
  %v107 = vld [vmem:[%s1 + $0x16c] sm:$0xf]
  %v108 = vld [vmem:[%s1 + $0x170] sm:$0xf]
  %v109 = vld [vmem:[%s1 + $0x174] sm:$0xf]
  %v110 = vld [vmem:[%s1 + $0x178] sm:$0xf]
  %v111 = vld [vmem:[%s1 + $0x17c] sm:$0xf]
  %v112 = vld [vmem:[%s1 + $0x180] sm:$0xf]
  %v113 = vld [vmem:[%s1 + $0x184] sm:$0xf]
  %v114 = vld [vmem:[%s1 + $0x188] sm:$0xf]
  %v115 = vld [vmem:[%s1 + $0x18c] sm:$0xf]
  %v116 = vld [vmem:[%s1 + $0x190] sm:$0xf]
  %v117 = vld [vmem:[%s1 + $0x194] sm:$0xf]
  %v118 = vld [vmem:[%s1 + $0x198] sm:$0xf]
  %v119 = vld [vmem:[%s1 + $0x19c] sm:$0xf]
  %v120 = vld [vmem:[%s1 + $0x1a0] sm:$0xf]
  %v121 = vld [vmem:[%s1 + $0x1a4] sm:$0xf]
  %v122 = vld [vmem:[%s1 + $0x1a8] sm:$0xf]
  %v123 = vld [vmem:[%s1 + $0x1ac] sm:$0xf]
  %v124 = vld [vmem:[%s1 + $0x1b0] sm:$0xf]
  %v125 = vld [vmem:[%s1 + $0x1b4] sm:$0xf]
  %v126 = vld [vmem:[%s1 + $0x1b8] sm:$0xf]
  %v127 = vld [vmem:[%s1 + $0x1bc] sm:$0xf]
  %v128 = vld [vmem:[%s1 + $0x1c0] sm:$0xf]
  %v129 = vld [vmem:[%s1 + $0x1c4] sm:$0xf]
  %v130 = vld [vmem:[%s1 + $0x1c8] sm:$0xf]
  %v131 = vld [vmem:[%s1 + $0x1cc] sm:$0xf]
  %v132 = vld [vmem:[%s1 + $0x1d0] sm:$0xf]
  %v133 = vld [vmem:[%s1 + $0x1d4] sm:$0xf]
  %v134 = vld [vmem:[%s1 + $0x1d8] sm:$0xf]
  %v135 = vld [vmem:[%s1 + $0x1dc] sm:$0xf]
  %v136 = vld [vmem:[%s1 + $0x1e0] sm:$0xf]
  %v137 = vld [vmem:[%s1 + $0x1e4] sm:$0xf]
  %v138 = vld [vmem:[%s1 + $0x1e8] sm:$0xf]
  %v139 = vld [vmem:[%s1 + $0x1ec] sm:$0xf]
  %v140 = vld [vmem:[%s1 + $0x1f0] sm:$0xf]
  %v141 = vld [vmem:[%s1 + $0x1f4] sm:$0xf]
  %v142 = vld [vmem:[%s1 + $0x1f8] sm:$0xf]
  %v143 = vld [vmem:[%s1 + $0x1fc] sm:$0xf]
  %v148 = vunpack.c.l.b16 %v12
  %v149 = vunpack.c.h.b16 %v12
  %v150 = vunpack.c.l.b16 %v13
  %v151 = vunpack.c.h.b16 %v13
  %v152 = vunpack.c.l.b16 %v14
  %v153 = vunpack.c.h.b16 %v14
  %v154 = vunpack.c.l.b16 %v15
  %v155 = vunpack.c.h.b16 %v15
  %v156 = vpack.c.b16 %v148, %v148
  %v157 = vpack.c.b16 %v149, %v149
  %v158 = vpack.c.b16 %v150, %v150
  %v159 = vpack.c.b16 %v151, %v151
  %v160 = vpack.c.b16 %v152, %v152
  %v161 = vpack.c.b16 %v153, %v153
  %v162 = vpack.c.b16 %v154, %v154
  %v163 = vpack.c.b16 %v155, %v155
  %v300 = vunpack.c.l.b16 %v16
  %v301 = vunpack.c.l.b16 %v17
  %v302 = vunpack.c.l.b16 %v18
  %v303 = vunpack.c.l.b16 %v19
  %v304 = vunpack.c.l.b16 %v20
  %v305 = vunpack.c.l.b16 %v21
  %v306 = vunpack.c.l.b16 %v22
  %v307 = vunpack.c.l.b16 %v23
  %v308 = vunpack.c.l.b16 %v24
  %v309 = vunpack.c.l.b16 %v25
  %v310 = vunpack.c.l.b16 %v26
  %v311 = vunpack.c.l.b16 %v27
  %v312 = vunpack.c.l.b16 %v28
  %v313 = vunpack.c.l.b16 %v29
  %v314 = vunpack.c.l.b16 %v30
  %v315 = vunpack.c.l.b16 %v31
  %v316 = vunpack.c.l.b16 %v32
  %v317 = vunpack.c.l.b16 %v33
  %v318 = vunpack.c.l.b16 %v34
  %v319 = vunpack.c.l.b16 %v35
  %v320 = vunpack.c.l.b16 %v36
  %v321 = vunpack.c.l.b16 %v37
  %v322 = vunpack.c.l.b16 %v38
  %v323 = vunpack.c.l.b16 %v39
  %v324 = vunpack.c.l.b16 %v40
  %v325 = vunpack.c.l.b16 %v41
  %v326 = vunpack.c.l.b16 %v42
  %v327 = vunpack.c.l.b16 %v43
  %v328 = vunpack.c.l.b16 %v44
  %v329 = vunpack.c.l.b16 %v45
  %v330 = vunpack.c.l.b16 %v46
  %v331 = vunpack.c.l.b16 %v47
  %v332 = vunpack.c.l.b16 %v48
  %v333 = vunpack.c.l.b16 %v49
  %v334 = vunpack.c.l.b16 %v50
  %v335 = vunpack.c.l.b16 %v51
  %v336 = vunpack.c.l.b16 %v52
  %v337 = vunpack.c.l.b16 %v53
  %v338 = vunpack.c.l.b16 %v54
  %v339 = vunpack.c.l.b16 %v55
  %v340 = vunpack.c.l.b16 %v56
  %v341 = vunpack.c.l.b16 %v57
  %v342 = vunpack.c.l.b16 %v58
  %v343 = vunpack.c.l.b16 %v59
  %v344 = vunpack.c.l.b16 %v60
  %v345 = vunpack.c.l.b16 %v61
  %v346 = vunpack.c.l.b16 %v62
  %v347 = vunpack.c.l.b16 %v63
  %v348 = vunpack.c.l.b16 %v64
  %v349 = vunpack.c.l.b16 %v65
  %v350 = vunpack.c.l.b16 %v66
  %v351 = vunpack.c.l.b16 %v67
  %v352 = vunpack.c.l.b16 %v68
  %v353 = vunpack.c.l.b16 %v69
  %v354 = vunpack.c.l.b16 %v70
  %v355 = vunpack.c.l.b16 %v71
  %v356 = vunpack.c.l.b16 %v72
  %v357 = vunpack.c.l.b16 %v73
  %v358 = vunpack.c.l.b16 %v74
  %v359 = vunpack.c.l.b16 %v75
  %v360 = vunpack.c.l.b16 %v76
  %v361 = vunpack.c.l.b16 %v77
  %v362 = vunpack.c.l.b16 %v78
  %v363 = vunpack.c.l.b16 %v79
  %v364 = vunpack.c.l.b16 %v80
  %v365 = vunpack.c.l.b16 %v81
  %v366 = vunpack.c.l.b16 %v82
  %v367 = vunpack.c.l.b16 %v83
  %v368 = vunpack.c.l.b16 %v84
  %v369 = vunpack.c.l.b16 %v85
  %v370 = vunpack.c.l.b16 %v86
  %v371 = vunpack.c.l.b16 %v87
  %v372 = vunpack.c.l.b16 %v88
  %v373 = vunpack.c.l.b16 %v89
  %v374 = vunpack.c.l.b16 %v90
  %v375 = vunpack.c.l.b16 %v91
  %v376 = vunpack.c.l.b16 %v92
  %v377 = vunpack.c.l.b16 %v93
  %v378 = vunpack.c.l.b16 %v94
  %v379 = vunpack.c.l.b16 %v95
  %v380 = vunpack.c.l.b16 %v96
  %v381 = vunpack.c.l.b16 %v97
  %v382 = vunpack.c.l.b16 %v98
  %v383 = vunpack.c.l.b16 %v99
  %v384 = vunpack.c.l.b16 %v100
  %v385 = vunpack.c.l.b16 %v101
  %v386 = vunpack.c.l.b16 %v102
  %v387 = vunpack.c.l.b16 %v103
  %v388 = vunpack.c.l.b16 %v104
  %v389 = vunpack.c.l.b16 %v105
  %v390 = vunpack.c.l.b16 %v106
  %v391 = vunpack.c.l.b16 %v107
  %v392 = vunpack.c.l.b16 %v108
  %v393 = vunpack.c.l.b16 %v109
  %v394 = vunpack.c.l.b16 %v110
  %v395 = vunpack.c.l.b16 %v111
  %v396 = vunpack.c.l.b16 %v112
  %v397 = vunpack.c.l.b16 %v113
  %v398 = vunpack.c.l.b16 %v114
  %v399 = vunpack.c.l.b16 %v115
  %v400 = vunpack.c.l.b16 %v116
  %v401 = vunpack.c.l.b16 %v117
  %v402 = vunpack.c.l.b16 %v118
  %v403 = vunpack.c.l.b16 %v119
  %v404 = vunpack.c.l.b16 %v120
  %v405 = vunpack.c.l.b16 %v121
  %v406 = vunpack.c.l.b16 %v122
  %v407 = vunpack.c.l.b16 %v123
  %v408 = vunpack.c.l.b16 %v124
  %v409 = vunpack.c.l.b16 %v125
  %v410 = vunpack.c.l.b16 %v126
  %v411 = vunpack.c.l.b16 %v127
  %v412 = vunpack.c.l.b16 %v128
  %v413 = vunpack.c.l.b16 %v129
  %v414 = vunpack.c.l.b16 %v130
  %v415 = vunpack.c.l.b16 %v131
  %v416 = vunpack.c.l.b16 %v132
  %v417 = vunpack.c.l.b16 %v133
  %v418 = vunpack.c.l.b16 %v134
  %v419 = vunpack.c.l.b16 %v135
  %v420 = vunpack.c.l.b16 %v136
  %v421 = vunpack.c.l.b16 %v137
  %v422 = vunpack.c.l.b16 %v138
  %v423 = vunpack.c.l.b16 %v139
  %v424 = vunpack.c.l.b16 %v140
  %v425 = vunpack.c.l.b16 %v141
  %v426 = vunpack.c.l.b16 %v142
  %v427 = vunpack.c.l.b16 %v143
  %v428 = vpack.c.b16 %v301, %v300
  %v429 = vpack.c.b16 %v303, %v302
  %v430 = vpack.c.b16 %v305, %v304
  %v431 = vpack.c.b16 %v307, %v306
  %v432 = vpack.c.b16 %v309, %v308
  %v433 = vpack.c.b16 %v311, %v310
  %v434 = vpack.c.b16 %v313, %v312
  %v435 = vpack.c.b16 %v315, %v314
  %v436 = vpack.c.b16 %v317, %v316
  %v437 = vpack.c.b16 %v319, %v318
  %v438 = vpack.c.b16 %v321, %v320
  %v439 = vpack.c.b16 %v323, %v322
  %v440 = vpack.c.b16 %v325, %v324
  %v441 = vpack.c.b16 %v327, %v326
  %v442 = vpack.c.b16 %v329, %v328
  %v443 = vpack.c.b16 %v331, %v330
  %v444 = vpack.c.b16 %v333, %v332
  %v445 = vpack.c.b16 %v335, %v334
  %v446 = vpack.c.b16 %v337, %v336
  %v447 = vpack.c.b16 %v339, %v338
  %v448 = vpack.c.b16 %v341, %v340
  %v449 = vpack.c.b16 %v343, %v342
  %v450 = vpack.c.b16 %v345, %v344
  %v451 = vpack.c.b16 %v347, %v346
  %v452 = vpack.c.b16 %v349, %v348
  %v453 = vpack.c.b16 %v351, %v350
  %v454 = vpack.c.b16 %v353, %v352
  %v455 = vpack.c.b16 %v355, %v354
  %v456 = vpack.c.b16 %v357, %v356
  %v457 = vpack.c.b16 %v359, %v358
  %v458 = vpack.c.b16 %v361, %v360
  %v459 = vpack.c.b16 %v363, %v362
  %v460 = vpack.c.b16 %v365, %v364
  %v461 = vpack.c.b16 %v367, %v366
  %v462 = vpack.c.b16 %v369, %v368
  %v463 = vpack.c.b16 %v371, %v370
  %v464 = vpack.c.b16 %v373, %v372
  %v465 = vpack.c.b16 %v375, %v374
  %v466 = vpack.c.b16 %v377, %v376
  %v467 = vpack.c.b16 %v379, %v378
  %v468 = vpack.c.b16 %v381, %v380
  %v469 = vpack.c.b16 %v383, %v382
  %v470 = vpack.c.b16 %v385, %v384
  %v471 = vpack.c.b16 %v387, %v386
  %v472 = vpack.c.b16 %v389, %v388
  %v473 = vpack.c.b16 %v391, %v390
  %v474 = vpack.c.b16 %v393, %v392
  %v475 = vpack.c.b16 %v395, %v394
  %v476 = vpack.c.b16 %v397, %v396
  %v477 = vpack.c.b16 %v399, %v398
  %v478 = vpack.c.b16 %v401, %v400
  %v479 = vpack.c.b16 %v403, %v402
  %v480 = vpack.c.b16 %v405, %v404
  %v481 = vpack.c.b16 %v407, %v406
  %v482 = vpack.c.b16 %v409, %v408
  %v483 = vpack.c.b16 %v411, %v410
  %v484 = vpack.c.b16 %v413, %v412
  %v485 = vpack.c.b16 %v415, %v414
  %v486 = vpack.c.b16 %v417, %v416
  %v487 = vpack.c.b16 %v419, %v418
  %v488 = vpack.c.b16 %v421, %v420
  %v489 = vpack.c.b16 %v423, %v422
  %v490 = vpack.c.b16 %v425, %v424
  %v491 = vpack.c.b16 %v427, %v426
  %556 = vmatprep.subr.bf16.mxu0 0
  %557 = vmatpush1.bf16.msra.mxu0 %v428
  %558 = vmatprep.subr.bf16.mxu0 0
  %559 = vmatpush1.bf16.msra.mxu0 %v429
  %560 = vmatprep.subr.bf16.mxu0 0
  %561 = vmatpush1.bf16.msra.mxu0 %v430
  %562 = vmatprep.subr.bf16.mxu0 0
  %563 = vmatpush1.bf16.msra.mxu0 %v431
  %564 = vmatprep.subr.bf16.mxu0 0
  %565 = vmatpush1.bf16.msra.mxu0 %v432
  %566 = vmatprep.subr.bf16.mxu0 0
  %567 = vmatpush1.bf16.msra.mxu0 %v433
  %568 = vmatprep.subr.bf16.mxu0 0
  %569 = vmatpush1.bf16.msra.mxu0 %v434
  %570 = vmatprep.subr.bf16.mxu0 0
  %571 = vmatpush1.bf16.msra.mxu0 %v435
  %572 = vmatprep.subr.bf16.mxu0 0
  %573 = vmatpush1.bf16.msra.mxu0 %v436
  %574 = vmatprep.subr.bf16.mxu0 0
  %575 = vmatpush1.bf16.msra.mxu0 %v437
  %576 = vmatprep.subr.bf16.mxu0 0
  %577 = vmatpush1.bf16.msra.mxu0 %v438
  %578 = vmatprep.subr.bf16.mxu0 0
  %579 = vmatpush1.bf16.msra.mxu0 %v439
  %580 = vmatprep.subr.bf16.mxu0 0
  %581 = vmatpush1.bf16.msra.mxu0 %v440
  %582 = vmatprep.subr.bf16.mxu0 0
  %583 = vmatpush1.bf16.msra.mxu0 %v441
  %584 = vmatprep.subr.bf16.mxu0 0
  %585 = vmatpush1.bf16.msra.mxu0 %v442
  %586 = vmatprep.subr.bf16.mxu0 0
  %587 = vmatpush1.bf16.msra.mxu0 %v443
  %588 = vmatprep.mubr.bf16.mxu0 %v157
  %589 = vmatmul.mubr.bf16.gmra.mrb[0].mxu0 %v156
  %v590 = vpop.f32.mrb[0].mxu0
  %v591 = vadd.f32 0.0, %v590
  %v592 = vpop.f32.mrb[0].mxu0
  %v593 = vpop.f32.mrb[0].mxu0
  %v594 = vpop.f32.mrb[0].mxu0
  %595 = vdwg.mxu0
  %596 = vmatprep.subr.bf16.mxu0 0
  %597 = vmatpush1.bf16.msra.mxu0 %v444
  %598 = vmatprep.subr.bf16.mxu0 0
  %599 = vmatpush1.bf16.msra.mxu0 %v445
  %600 = vmatprep.subr.bf16.mxu0 0
  %601 = vmatpush1.bf16.msra.mxu0 %v446
  %602 = vmatprep.subr.bf16.mxu0 0
  %603 = vmatpush1.bf16.msra.mxu0 %v447
  %604 = vmatprep.subr.bf16.mxu0 0
  %605 = vmatpush1.bf16.msra.mxu0 %v448
  %606 = vmatprep.subr.bf16.mxu0 0
  %607 = vmatpush1.bf16.msra.mxu0 %v449
  %608 = vmatprep.subr.bf16.mxu0 0
  %609 = vmatpush1.bf16.msra.mxu0 %v450
  %610 = vmatprep.subr.bf16.mxu0 0
  %611 = vmatpush1.bf16.msra.mxu0 %v451
  %612 = vmatprep.subr.bf16.mxu0 0
  %613 = vmatpush1.bf16.msra.mxu0 %v452
  %614 = vmatprep.subr.bf16.mxu0 0
  %615 = vmatpush1.bf16.msra.mxu0 %v453
  %616 = vmatprep.subr.bf16.mxu0 0
  %617 = vmatpush1.bf16.msra.mxu0 %v454
  %618 = vmatprep.subr.bf16.mxu0 0
  %619 = vmatpush1.bf16.msra.mxu0 %v455
  %620 = vmatprep.subr.bf16.mxu0 0
  %621 = vmatpush1.bf16.msra.mxu0 %v456
  %622 = vmatprep.subr.bf16.mxu0 0
  %623 = vmatpush1.bf16.msra.mxu0 %v457
  %624 = vmatprep.subr.bf16.mxu0 0
  %625 = vmatpush1.bf16.msra.mxu0 %v458
  %626 = vmatprep.subr.bf16.mxu0 0
  %627 = vmatpush1.bf16.msra.mxu0 %v459
  %628 = vmatprep.mubr.bf16.mxu0 %v159
  %629 = vmatmul.mubr.bf16.gmra.mrb[0].mxu0 %v158
  %v630 = vpop.f32.mrb[0].mxu0
  %v631 = vadd.f32 %v591, %v630
  %v632 = vpop.f32.mrb[0].mxu0
  %v633 = vpop.f32.mrb[0].mxu0
  %v634 = vpop.f32.mrb[0].mxu0
  %635 = vdwg.mxu0
  %636 = vmatprep.subr.bf16.mxu0 0
  %637 = vmatpush1.bf16.msra.mxu0 %v460
  %638 = vmatprep.subr.bf16.mxu0 0
  %639 = vmatpush1.bf16.msra.mxu0 %v461
  %640 = vmatprep.subr.bf16.mxu0 0
  %641 = vmatpush1.bf16.msra.mxu0 %v462
  %642 = vmatprep.subr.bf16.mxu0 0
  %643 = vmatpush1.bf16.msra.mxu0 %v463
  %644 = vmatprep.subr.bf16.mxu0 0
  %645 = vmatpush1.bf16.msra.mxu0 %v464
  %646 = vmatprep.subr.bf16.mxu0 0
  %647 = vmatpush1.bf16.msra.mxu0 %v465
  %648 = vmatprep.subr.bf16.mxu0 0
  %649 = vmatpush1.bf16.msra.mxu0 %v466
  %650 = vmatprep.subr.bf16.mxu0 0
  %651 = vmatpush1.bf16.msra.mxu0 %v467
  %652 = vmatprep.subr.bf16.mxu0 0
  %653 = vmatpush1.bf16.msra.mxu0 %v468
  %654 = vmatprep.subr.bf16.mxu0 0
  %655 = vmatpush1.bf16.msra.mxu0 %v469
  %656 = vmatprep.subr.bf16.mxu0 0
  %657 = vmatpush1.bf16.msra.mxu0 %v470
  %658 = vmatprep.subr.bf16.mxu0 0
  %659 = vmatpush1.bf16.msra.mxu0 %v471
  %660 = vmatprep.subr.bf16.mxu0 0
  %661 = vmatpush1.bf16.msra.mxu0 %v472
  %662 = vmatprep.subr.bf16.mxu0 0
  %663 = vmatpush1.bf16.msra.mxu0 %v473
  %664 = vmatprep.subr.bf16.mxu0 0
  %665 = vmatpush1.bf16.msra.mxu0 %v474
  %666 = vmatprep.subr.bf16.mxu0 0
  %667 = vmatpush1.bf16.msra.mxu0 %v475
  %668 = vmatprep.mubr.bf16.mxu0 %v161
  %669 = vmatmul.mubr.bf16.gmra.mrb[0].mxu0 %v160
  %v670 = vpop.f32.mrb[0].mxu0
  %v671 = vadd.f32 %v631, %v670
  %v672 = vpop.f32.mrb[0].mxu0
  %v673 = vpop.f32.mrb[0].mxu0
  %v674 = vpop.f32.mrb[0].mxu0
  %675 = vdwg.mxu0
  %676 = vmatprep.subr.bf16.mxu0 0
  %677 = vmatpush1.bf16.msra.mxu0 %v476
  %678 = vmatprep.subr.bf16.mxu0 0
  %679 = vmatpush1.bf16.msra.mxu0 %v477
  %680 = vmatprep.subr.bf16.mxu0 0
  %681 = vmatpush1.bf16.msra.mxu0 %v478
  %682 = vmatprep.subr.bf16.mxu0 0
  %683 = vmatpush1.bf16.msra.mxu0 %v479
  %684 = vmatprep.subr.bf16.mxu0 0
  %685 = vmatpush1.bf16.msra.mxu0 %v480
  %686 = vmatprep.subr.bf16.mxu0 0
  %687 = vmatpush1.bf16.msra.mxu0 %v481
  %688 = vmatprep.subr.bf16.mxu0 0
  %689 = vmatpush1.bf16.msra.mxu0 %v482
  %690 = vmatprep.subr.bf16.mxu0 0
  %691 = vmatpush1.bf16.msra.mxu0 %v483
  %692 = vmatprep.subr.bf16.mxu0 0
  %693 = vmatpush1.bf16.msra.mxu0 %v484
  %694 = vmatprep.subr.bf16.mxu0 0
  %695 = vmatpush1.bf16.msra.mxu0 %v485
  %696 = vmatprep.subr.bf16.mxu0 0
  %697 = vmatpush1.bf16.msra.mxu0 %v486
  %698 = vmatprep.subr.bf16.mxu0 0
  %699 = vmatpush1.bf16.msra.mxu0 %v487
  %700 = vmatprep.subr.bf16.mxu0 0
  %701 = vmatpush1.bf16.msra.mxu0 %v488
  %702 = vmatprep.subr.bf16.mxu0 0
  %703 = vmatpush1.bf16.msra.mxu0 %v489
  %704 = vmatprep.subr.bf16.mxu0 0
  %705 = vmatpush1.bf16.msra.mxu0 %v490
  %706 = vmatprep.subr.bf16.mxu0 0
  %707 = vmatpush1.bf16.msra.mxu0 %v491
  %708 = vmatprep.mubr.bf16.mxu0 %v163
  %709 = vmatmul.mubr.bf16.gmra.mrb[0].mxu0 %v162
  %v710 = vpop.f32.mrb[0].mxu0
  %v711 = vadd.f32 %v671, %v710
  %v712 = vpop.f32.mrb[0].mxu0
  %v713 = vpop.f32.mrb[0].mxu0
  %v714 = vpop.f32.mrb[0].mxu0
  %715 = vdwg.mxu0
  %v716 = vsub.f32 0.0, %v711
  %v717 = vmul.f32 %v716, 1.442695
  %v718 = vpow.pop %v717
  %v719 = vadd.f32 %v718, 1.0
  %v720 = vrcp.pop %v719
  %v721 = vmul.f32 1.0, %v720
  %722 = vst [vmem:[%s2] sm:$0xff] %v721
  // Predicated region
  $region10: #{discriminator_forward.19} parent=0 // pred_check
    _
  $region11: #{discriminator_forward.19} parent=0 // pred_check_branch
    %724 = sbr.rel (0) target = $region13
  $region12: #{discriminator_forward.19} parent=0 // pred_region
    _
  $region13: #{discriminator_forward.19} parent=0 // pred_fallthru
    _
  // Predicated region
  $region14: #{discriminator_forward.19} parent=0 // pred_check
    _
  $region15: #{discriminator_forward.19} parent=0 // pred_check_branch
    %726 = sbr.rel (0) target = $region17
  $region16: #{discriminator_forward.19} parent=0 // pred_region
    _
  $region17: #{discriminator_forward.19} parent=0 // pred_fallthru
    _

</llo_original>
